<compile_context>
chip_gen: v7x
topology: tpu7x:2x2x1
jax: 0.10.0
libtpu: 0.0.40
codegen_flags: <defaults>
</compile_context>

<pallas_src>
import math

import jax
import jax.numpy as jnp
from jax.experimental import pallas as pl
from jax.experimental.pallas import tpu as pltpu


def _round_up(x, m):
    return (x + m - 1) // m * m


def linear_gelu_kernel(x_ref, w_ref, b_ref, o_ref):
    # x is tiny (~95 KB); the bf16 cast is free filler under the dominant
    # weight DMA.  v1 = x @ W^T + b (weight pre-transposed/packed), f32 acc.
    x_bf = x_ref[...].astype(jnp.bfloat16)
    v1 = jnp.dot(x_bf, w_ref[...],
                 preferred_element_type=jnp.float32) + b_ref[...]
    v2 = v1 * 0.5
    v3 = v1 + v1 * v1 * v1 * 0.044715
    v4 = v3 * 0.7978845608028654
    v5 = jnp.tanh(v4)
    v6 = v5 + 1.0
    o_ref[...] = (v2 * v6).astype(o_ref.dtype)


class FusedLinearGelu:
    """Fused Linear(K->N) + tanh-GELU with all weight prep done at init."""

    def __init__(self, weight, bias, *, n_split=None):
        # weight: (N, K) torch Linear layout; bias: (N,)
        N, K = weight.shape
        self.N, self.K = int(N), int(K)

        if n_split is None:
            n_split = self._default_n_split()
        N_pad = _round_up(self.N, 128 * n_split)
        tn = N_pad // n_split
        self.N_pad, self.n_split, self.tn = N_pad, n_split, tn

        # --- one-time weight prep (init time, never in the hot path) ---
        w_t = jnp.transpose(jnp.asarray(weight, jnp.float32))       # (K, N)
        w_t = jnp.pad(w_t, ((0, 0), (0, N_pad - self.N)))           # zero-pad
        # Pack (n_split, K, tn): each grid step / core streams one fully
        # contiguous bf16 slab instead of a strided column block.
        w_packed = (w_t.reshape(self.K, n_split, tn)
                    .transpose(1, 0, 2)
                    .astype(jnp.bfloat16))
        self.w_packed = jax.device_put(w_packed)                     # (n_split, K, tn)

        b = jnp.asarray(bias, jnp.float32).reshape(1, self.N)
        self.b_pad = jax.device_put(jnp.pad(b, ((0, 0), (0, N_pad - self.N))))

        # v7x: shard the 2-way N split across its two TensorCores.
        # v5e/v6e: single grid step, semantics irrelevant.
        if n_split > 1:
            self._semantics = (pltpu.CORE_PARALLEL,)
        else:
            self._semantics = ("arbitrary",)

        self._fwd = jax.jit(self._forward)

    @staticmethod
    def _default_n_split():
        try:
            kind = jax.devices()[0].device_kind.lower()
        except Exception:
            return 1
        # Only v7x has 2 TensorCores per chip; elsewhere a split is pure
        # overhead (extra grid step + strided half-width weight DMA).
        return 2 if "v7" in kind else 1

    def _forward(self, x):
        M, K = x.shape
        assert K == self.K
        N_pad, tn, n_split = self.N_pad, self.tn, self.n_split

        cost = pl.CostEstimate(
            flops=2 * M * K * N_pad,
            transcendentals=M * N_pad,
            bytes_accessed=(M * K * 4            # x f32
                            + K * N_pad * 2      # weight bf16 (dominant)
                            + N_pad * 4          # bias f32
                            + M * N_pad * 4),    # output f32
        )

        out = pl.pallas_call(
            linear_gelu_kernel,
            out_shape=jax.ShapeDtypeStruct((M, N_pad), jnp.float32),
            grid=(n_split,),
            in_specs=[
                pl.BlockSpec((M, K), lambda j: (0, 0)),             # x (tiny)
                pl.BlockSpec((None, K, tn), lambda j: (j, 0, 0)),   # weight slab
                pl.BlockSpec((1, tn), lambda j: (0, j)),            # bias
            ],
            out_specs=pl.BlockSpec((M, tn), lambda j: (0, j)),
            compiler_params=pltpu.CompilerParams(
                dimension_semantics=self._semantics,
            ),
            cost_estimate=cost,
        )(x, self.w_packed, self.b_pad)

        return out[:, :self.N]

    def __call__(self, x):
        return self._fwd(x)


if __name__ == "__main__":
    IN_FEATURES = 5952
    OUT_FEATURES = 196
    BATCH = 4

    key = jax.random.PRNGKey(0)
    k_x, k_w, k_b = jax.random.split(key, 3)

    # PyTorch Linear default init: U(-1/sqrt(fan_in), 1/sqrt(fan_in)).
    bound = 1.0 / math.sqrt(IN_FEATURES)
    weight = jax.random.uniform(k_w, (OUT_FEATURES, IN_FEATURES),
                                jnp.float32, -bound, bound)   # (out, in) like torch
    bias = jax.random.uniform(k_b, (OUT_FEATURES,), jnp.float32, -bound, bound)

    x = jax.random.normal(k_x, (BATCH, IN_FEATURES), jnp.float32)

    # One-time weight prep happens here (transpose / pad / bf16 / pack).
    model = FusedLinearGelu(weight, bias)

    out = jax.block_until_ready(model(x))

    def gelu_ref(v1):
        return (v1 * 0.5) * (jnp.tanh((v1 + v1 * v1 * v1 * 0.044715)
                                      * 0.7978845608028654) + 1.0)

    w_t = jnp.transpose(weight)
    b2d = bias.reshape(1, OUT_FEATURES)

    # Primary check: same bf16-cast inputs, f32 accumulation (tests the kernel).
    v1_bf = jnp.dot(x.astype(jnp.bfloat16), w_t.astype(jnp.bfloat16),
                    preferred_element_type=jnp.float32) + b2d
    ref_bf = gelu_ref(v1_bf)
    assert out.shape == (BATCH, OUT_FEATURES)
    assert jnp.allclose(out, ref_bf, atol=1e-4, rtol=1e-4)

    # Sanity check vs. exact f32 PyTorch-module semantics (bf16 weights are a
    # deliberate perf trade-off on this DMA-bound layer; error ~1e-3 here).
    ref_f32 = gelu_ref(x @ w_t + b2d)
    assert jnp.allclose(out, ref_f32, atol=2e-2, rtol=2e-2)

    print("KERNEL_OK")
</pallas_src>

<mosaic_0001>
module attributes {stable_mosaic.version = 11 : i64} {
  func.func @linear_gelu_kernel(%arg0: i32, %arg1: memref<4x5952xf32, #tpu.memory_space<vmem>>, %arg2: memref<1x5952x256xbf16, #tpu.memory_space<vmem>>, %arg3: memref<1x256xf32, #tpu.memory_space<vmem>>, %arg4: memref<4x256xf32, #tpu.memory_space<vmem>>) attributes {dimension_semantics = [#tpu.dimension_semantics<arbitrary>], iteration_bounds = array<i64: 1>, scalar_prefetch = 0 : i64, scratch_operands = 0 : i64, tpu.core_type = #tpu.core_type<tc>, window_params = [{pipeline_mode = #tpu.pipeline_mode<synchronous>, transform_indices = @transform_0, window_bounds = array<i64: 4, 5952>}, {transform_indices = @transform_1, window_bounds = array<i64: 1, 5952, 256>}, {transform_indices = @transform_2, window_bounds = array<i64: 1, 256>}, {transform_indices = @transform_3, window_bounds = array<i64: 4, 256>}]} {
    %c0 = arith.constant 0 : index
    %c0_0 = arith.constant 0 : index
    %0 = vector.load %arg1[%c0, %c0_0] : memref<4x5952xf32, #tpu.memory_space<vmem>>, vector<4x5952xf32>
    %1 = arith.truncf %0 : vector<4x5952xf32> to vector<4x5952xbf16>
    %c0_1 = arith.constant 0 : index
    %c0_2 = arith.constant 0 : index
    %c0_3 = arith.constant 0 : index
    %2 = vector.load %arg2[%c0_1, %c0_2, %c0_3] : memref<1x5952x256xbf16, #tpu.memory_space<vmem>>, vector<1x5952x256xbf16>
    %3 = vector.shape_cast %2 : vector<1x5952x256xbf16> to vector<5952x256xbf16>
    %cst = arith.constant dense<0.000000e+00> : vector<4x256xf32>
    %4 = tpu.matmul %1, %3, %cst {dimension_numbers = #tpu.dot_dimension_numbers<[1], [0], [0], [1], [0, 0, 1, 1], [], []>} : vector<4x5952xbf16>, vector<5952x256xbf16>, vector<4x256xf32> -> vector<4x256xf32>
    %c0_4 = arith.constant 0 : index
    %c0_5 = arith.constant 0 : index
    %5 = vector.load %arg3[%c0_4, %c0_5] : memref<1x256xf32, #tpu.memory_space<vmem>>, vector<1x256xf32>
    %6 = vector.broadcast %5 : vector<1x256xf32> to vector<4x256xf32>
    %7 = arith.addf %4, %6 : vector<4x256xf32>
    %cst_6 = arith.constant 5.000000e-01 : f32
    %8 = vector.broadcast %cst_6 : f32 to vector<4x256xf32>
    %9 = arith.mulf %7, %8 : vector<4x256xf32>
    %10 = arith.mulf %7, %7 : vector<4x256xf32>
    %11 = arith.mulf %10, %7 : vector<4x256xf32>
    %cst_7 = arith.constant 4.471500e-02 : f32
    %12 = vector.broadcast %cst_7 : f32 to vector<4x256xf32>
    %13 = arith.mulf %11, %12 : vector<4x256xf32>
    %14 = arith.addf %7, %13 : vector<4x256xf32>
    %cst_8 = arith.constant 0.797884583 : f32
    %15 = vector.broadcast %cst_8 : f32 to vector<4x256xf32>
    %16 = arith.mulf %14, %15 : vector<4x256xf32>
    %17 = math.tanh %16 : vector<4x256xf32>
    %cst_9 = arith.constant 1.000000e+00 : f32
    %18 = vector.broadcast %cst_9 : f32 to vector<4x256xf32>
    %19 = arith.addf %17, %18 : vector<4x256xf32>
    %20 = arith.mulf %9, %19 : vector<4x256xf32>
    %c0_10 = arith.constant 0 : index
    %c0_11 = arith.constant 0 : index
    %21 = vector.load %arg4[%c0_10, %c0_11] : memref<4x256xf32, #tpu.memory_space<vmem>>, vector<4x256xf32>
    tpu.vector_store %arg4[%c0_10, %c0_11], %20 {strides = array<i32>} : memref<4x256xf32, #tpu.memory_space<vmem>>, vector<4x256xf32>,
    return
  }
  func.func @transform_0(%arg0: i32) -> (i32, i32) {
    %c0_i32 = arith.constant 0 : i32
    %c0_i32_0 = arith.constant 0 : i32
    %c0_i32_1 = arith.constant 0 : i32
    return %c0_i32, %c0_i32_0 : i32, i32
  }
  func.func @transform_1(%arg0: i32) -> (i32, i32, i32) {
    %c0_i32 = arith.constant 0 : i32
    %c0_i32_0 = arith.constant 0 : i32
    %c0_i32_1 = arith.constant 0 : i32
    return %arg0, %c0_i32, %c0_i32_0 : i32, i32, i32
  }
  func.func @transform_2(%arg0: i32) -> (i32, i32) {
    %c0_i32 = arith.constant 0 : i32
    %c0_i32_0 = arith.constant 0 : i32
    return %c0_i32, %arg0 : i32, i32
  }
  func.func @transform_3(%arg0: i32) -> (i32, i32) {
    %c0_i32 = arith.constant 0 : i32
    %c0_i32_0 = arith.constant 0 : i32
    return %c0_i32, %arg0 : i32, i32
  }
}

</mosaic_0001>

<llo_original>
// kernel: _forward.1
$region0: #{_forward.1}
  #allocation0 [shape = 'u32[]', space=smem, size = 0x4, offset = 0x4, fixed_abs, tag = 'smem constant byte address 0x4 - core index']
  #allocation1 [shape = 'u32[144,128]{1,0:T(1,128)}', space=vmem, size = 0x12000, scoped, tag = 'internal scratch']
  %s0 = inlined_call_operand.vmem [shape: f32[4,5952], index: 0, kind: input, shape index: {}]
  %s1 = inlined_call_operand.vmem [shape: bf16[1,5952,256], index: 1, kind: input, shape index: {}]
  %s2 = inlined_call_operand.vmem [shape: f32[1,256], index: 2, kind: input, shape index: {}]
  %s3 = inlined_call_operand.hbm [shape: f32[4,256], index: 3, kind: output, shape index: {}]
  %s4 = sld [smem:[#allocation0]]
  $region22: #{_forward.1} parent=0
    _
  %s6 = ssub.s32 1, %s4
  %s7 = scalar_select 0, %s6, %s4
  $region1: #{_forward.1} parent=0
    #allocation2 [shape = 'u8[4096]{0}', space=vmem, size = 0x1000, scoped, tag = 'output window, operand 0, single buffered']
    #allocation3 [shape = 's32[1]{0}', space=sflag, size = 0x4, scoped, tag = 'scoped memory for _forward.1']
    %8 = vsyncpa [#allocation3], 0
    // Predicated region
    $region2: #{_forward.1} parent=1 // pred_check
      _
    $region3: #{_forward.1} parent=1 // pred_check_branch
      %10 = sbr.rel (0) target = $region5
    $region4: #{_forward.1} parent=1 // pred_region
      _
    $region5: #{_forward.1} parent=1 // pred_fallthru
      _
    // Predicated region
    $region6: #{_forward.1} parent=1 // pred_check
      _
    $region7: #{_forward.1} parent=1 // pred_check_branch
      %12 = sbr.rel (0) target = $region9
    $region8: #{_forward.1} parent=1 // pred_region
      _
    $region9: #{_forward.1} parent=1 // pred_fallthru
      _
    // Predicated region
    $region10: #{_forward.1} parent=1 // pred_check
      _
    $region11: #{_forward.1} parent=1 // pred_check_branch
      %14 = sbr.rel (0) target = $region13
    $region12: #{_forward.1} parent=1 // pred_region
      _
    $region13: #{_forward.1} parent=1 // pred_fallthru
      _
    %v16 = vld [vmem:[%s0] sm:$0xff]
    %v17 = vld [vmem:[%s0 + $0x8] sm:$0xff]
    %v18 = vld [vmem:[%s0 + $0x10] sm:$0xff]
    %v19 = vld [vmem:[%s0 + $0x18] sm:$0xff]
    %v20 = vld [vmem:[%s0 + $0x20] sm:$0xff]
    %v21 = vld [vmem:[%s0 + $0x28] sm:$0xff]
    %v22 = vld [vmem:[%s0 + $0x30] sm:$0xff]
    %v23 = vld [vmem:[%s0 + $0x38] sm:$0xff]
    %v24 = vld [vmem:[%s0 + $0x40] sm:$0xff]
    %v25 = vld [vmem:[%s0 + $0x48] sm:$0xff]
    %v26 = vld [vmem:[%s0 + $0x50] sm:$0xff]
    %v27 = vld [vmem:[%s0 + $0x58] sm:$0xff]
    %v28 = vld [vmem:[%s0 + $0x60] sm:$0xff]
    %v29 = vld [vmem:[%s0 + $0x68] sm:$0xff]
    %v30 = vld [vmem:[%s0 + $0x70] sm:$0xff]
    %v31 = vld [vmem:[%s0 + $0x78] sm:$0xff]
    %v32 = vld [vmem:[%s0 + $0x80] sm:$0xff]
    %v33 = vld [vmem:[%s0 + $0x88] sm:$0xff]
    %v34 = vld [vmem:[%s0 + $0x90] sm:$0xff]
    %v35 = vld [vmem:[%s0 + $0x98] sm:$0xff]
    %v36 = vld [vmem:[%s0 + $0xa0] sm:$0xff]
    %v37 = vld [vmem:[%s0 + $0xa8] sm:$0xff]
    %v38 = vld [vmem:[%s0 + $0xb0] sm:$0xff]
    %v39 = vld [vmem:[%s0 + $0xb8] sm:$0xf]
    %v63 = vcombine.high %v16, %v16
    %v64 = vcombine.high %v17, %v17
    %v65 = vcombine.high %v18, %v18
    %v66 = vcombine.high %v19, %v19
    %v67 = vcombine.high %v20, %v20
    %v68 = vcombine.high %v21, %v21
    %v69 = vcombine.high %v22, %v22
    %v70 = vcombine.high %v23, %v23
    %v71 = vcombine.high %v24, %v24
    %v72 = vcombine.high %v25, %v25
    %v73 = vcombine.high %v26, %v26
    %v74 = vcombine.high %v27, %v27
    %v75 = vcombine.high %v28, %v28
    %v76 = vcombine.high %v29, %v29
    %v77 = vcombine.high %v30, %v30
    %v78 = vcombine.high %v31, %v31
    %v79 = vcombine.high %v32, %v32
    %v80 = vcombine.high %v33, %v33
    %v81 = vcombine.high %v34, %v34
    %v82 = vcombine.high %v35, %v35
    %v83 = vcombine.high %v36, %v36
    %v84 = vcombine.high %v37, %v37
    %v85 = vcombine.high %v38, %v38
    %v109 = vpack.c.bf16 %v16, %v16
    %v110 = vpack.c.bf16 %v63, %v63
    %v111 = vpack.c.bf16 %v17, %v17
    %v112 = vpack.c.bf16 %v64, %v64
    %v113 = vpack.c.bf16 %v18, %v18
    %v114 = vpack.c.bf16 %v65, %v65
    %v115 = vpack.c.bf16 %v19, %v19
    %v116 = vpack.c.bf16 %v66, %v66
    %v117 = vpack.c.bf16 %v20, %v20
    %v118 = vpack.c.bf16 %v67, %v67
    %v119 = vpack.c.bf16 %v21, %v21
    %v120 = vpack.c.bf16 %v68, %v68
    %v121 = vpack.c.bf16 %v22, %v22
    %v122 = vpack.c.bf16 %v69, %v69
    %v123 = vpack.c.bf16 %v23, %v23
    %v124 = vpack.c.bf16 %v70, %v70
    %v125 = vpack.c.bf16 %v24, %v24
    %v126 = vpack.c.bf16 %v71, %v71
    %v127 = vpack.c.bf16 %v25, %v25
    %v128 = vpack.c.bf16 %v72, %v72
    %v129 = vpack.c.bf16 %v26, %v26
    %v130 = vpack.c.bf16 %v73, %v73
    %v131 = vpack.c.bf16 %v27, %v27
    %v132 = vpack.c.bf16 %v74, %v74
    %v133 = vpack.c.bf16 %v28, %v28
    %v134 = vpack.c.bf16 %v75, %v75
    %v135 = vpack.c.bf16 %v29, %v29
    %v136 = vpack.c.bf16 %v76, %v76
    %v137 = vpack.c.bf16 %v30, %v30
    %v138 = vpack.c.bf16 %v77, %v77
    %v139 = vpack.c.bf16 %v31, %v31
    %v140 = vpack.c.bf16 %v78, %v78
    %v141 = vpack.c.bf16 %v32, %v32
    %v142 = vpack.c.bf16 %v79, %v79
    %v143 = vpack.c.bf16 %v33, %v33
    %v144 = vpack.c.bf16 %v80, %v80
    %v145 = vpack.c.bf16 %v34, %v34
    %v146 = vpack.c.bf16 %v81, %v81
    %v147 = vpack.c.bf16 %v35, %v35
    %v148 = vpack.c.bf16 %v82, %v82
    %v149 = vpack.c.bf16 %v36, %v36
    %v150 = vpack.c.bf16 %v83, %v83
    %v151 = vpack.c.bf16 %v37, %v37
    %v152 = vpack.c.bf16 %v84, %v84
    %v153 = vpack.c.bf16 %v38, %v38
    %v154 = vpack.c.bf16 %v85, %v85
    %v155 = vpack.c.bf16 %v39, %v39
    %v156 = vld [vmem:[%s1] sm:$0xff]
    %v157 = vld [vmem:[%s1 + $0x8] sm:$0xff]
    %v158 = vld [vmem:[%s1 + $0x10] sm:$0xff]
    %v159 = vld [vmem:[%s1 + $0x18] sm:$0xff]
    %v160 = vld [vmem:[%s1 + $0x20] sm:$0xff]
    %v161 = vld [vmem:[%s1 + $0x28] sm:$0xff]
    %v162 = vld [vmem:[%s1 + $0x30] sm:$0xff]
    %v163 = vld [vmem:[%s1 + $0x38] sm:$0xff]
    %v164 = vld [vmem:[%s1 + $0x40] sm:$0xff]
    %v165 = vld [vmem:[%s1 + $0x48] sm:$0xff]
    %v166 = vld [vmem:[%s1 + $0x50] sm:$0xff]
    %v167 = vld [vmem:[%s1 + $0x58] sm:$0xff]
    %v168 = vld [vmem:[%s1 + $0x60] sm:$0xff]
    %v169 = vld [vmem:[%s1 + $0x68] sm:$0xff]
    %v170 = vld [vmem:[%s1 + $0x70] sm:$0xff]
    %v171 = vld [vmem:[%s1 + $0x78] sm:$0xff]
    %v172 = vld [vmem:[%s1 + $0x80] sm:$0xff]
    %v173 = vld [vmem:[%s1 + $0x88] sm:$0xff]
    %v174 = vld [vmem:[%s1 + $0x90] sm:$0xff]
    %v175 = vld [vmem:[%s1 + $0x98] sm:$0xff]
    %v176 = vld [vmem:[%s1 + $0xa0] sm:$0xff]
    %v177 = vld [vmem:[%s1 + $0xa8] sm:$0xff]
    %v178 = vld [vmem:[%s1 + $0xb0] sm:$0xff]
    %v179 = vld [vmem:[%s1 + $0xb8] sm:$0xff]
    %v180 = vld [vmem:[%s1 + $0xc0] sm:$0xff]
    %v181 = vld [vmem:[%s1 + $0xc8] sm:$0xff]
    %v182 = vld [vmem:[%s1 + $0xd0] sm:$0xff]
    %v183 = vld [vmem:[%s1 + $0xd8] sm:$0xff]
    %v184 = vld [vmem:[%s1 + $0xe0] sm:$0xff]
    %v185 = vld [vmem:[%s1 + $0xe8] sm:$0xff]
    %v186 = vld [vmem:[%s1 + $0xf0] sm:$0xff]
    %v187 = vld [vmem:[%s1 + $0xf8] sm:$0xff]
    %v188 = vld [vmem:[%s1 + $0x100] sm:$0xff]
    %v189 = vld [vmem:[%s1 + $0x108] sm:$0xff]
    %v190 = vld [vmem:[%s1 + $0x110] sm:$0xff]
    %v191 = vld [vmem:[%s1 + $0x118] sm:$0xff]
    %v192 = vld [vmem:[%s1 + $0x120] sm:$0xff]
    %v193 = vld [vmem:[%s1 + $0x128] sm:$0xff]
    %v194 = vld [vmem:[%s1 + $0x130] sm:$0xff]
    %v195 = vld [vmem:[%s1 + $0x138] sm:$0xff]
    %v196 = vld [vmem:[%s1 + $0x140] sm:$0xff]
    %v197 = vld [vmem:[%s1 + $0x148] sm:$0xff]
    %v198 = vld [vmem:[%s1 + $0x150] sm:$0xff]
    %v199 = vld [vmem:[%s1 + $0x158] sm:$0xff]
    %v200 = vld [vmem:[%s1 + $0x160] sm:$0xff]
    %v201 = vld [vmem:[%s1 + $0x168] sm:$0xff]
    %v202 = vld [vmem:[%s1 + $0x170] sm:$0xff]
    %v203 = vld [vmem:[%s1 + $0x178] sm:$0xff]
    %v204 = vld [vmem:[%s1 + $0x180] sm:$0xff]
    %v205 = vld [vmem:[%s1 + $0x188] sm:$0xff]
    %v206 = vld [vmem:[%s1 + $0x190] sm:$0xff]
    %v207 = vld [vmem:[%s1 + $0x198] sm:$0xff]
    %v208 = vld [vmem:[%s1 + $0x1a0] sm:$0xff]
    %v209 = vld [vmem:[%s1 + $0x1a8] sm:$0xff]
    %v210 = vld [vmem:[%s1 + $0x1b0] sm:$0xff]
    %v211 = vld [vmem:[%s1 + $0x1b8] sm:$0xff]
    %v212 = vld [vmem:[%s1 + $0x1c0] sm:$0xff]
    %v213 = vld [vmem:[%s1 + $0x1c8] sm:$0xff]
    %v214 = vld [vmem:[%s1 + $0x1d0] sm:$0xff]
    %v215 = vld [vmem:[%s1 + $0x1d8] sm:$0xff]
    %v216 = vld [vmem:[%s1 + $0x1e0] sm:$0xff]
    %v217 = vld [vmem:[%s1 + $0x1e8] sm:$0xff]
    %v218 = vld [vmem:[%s1 + $0x1f0] sm:$0xff]
    %v219 = vld [vmem:[%s1 + $0x1f8] sm:$0xff]
    %v220 = vld [vmem:[%s1 + $0x200] sm:$0xff]
    %v221 = vld [vmem:[%s1 + $0x208] sm:$0xff]
    %v222 = vld [vmem:[%s1 + $0x210] sm:$0xff]
    %v223 = vld [vmem:[%s1 + $0x218] sm:$0xff]
    %v224 = vld [vmem:[%s1 + $0x220] sm:$0xff]
    %v225 = vld [vmem:[%s1 + $0x228] sm:$0xff]
    %v226 = vld [vmem:[%s1 + $0x230] sm:$0xff]
    %v227 = vld [vmem:[%s1 + $0x238] sm:$0xff]
    %v228 = vld [vmem:[%s1 + $0x240] sm:$0xff]
    %v229 = vld [vmem:[%s1 + $0x248] sm:$0xff]
    %v230 = vld [vmem:[%s1 + $0x250] sm:$0xff]
    %v231 = vld [vmem:[%s1 + $0x258] sm:$0xff]
    %v232 = vld [vmem:[%s1 + $0x260] sm:$0xff]
    %v233 = vld [vmem:[%s1 + $0x268] sm:$0xff]
    %v234 = vld [vmem:[%s1 + $0x270] sm:$0xff]
    %v235 = vld [vmem:[%s1 + $0x278] sm:$0xff]
    %v236 = vld [vmem:[%s1 + $0x280] sm:$0xff]
    %v237 = vld [vmem:[%s1 + $0x288] sm:$0xff]
    %v238 = vld [vmem:[%s1 + $0x290] sm:$0xff]
    %v239 = vld [vmem:[%s1 + $0x298] sm:$0xff]
    %v240 = vld [vmem:[%s1 + $0x2a0] sm:$0xff]
    %v241 = vld [vmem:[%s1 + $0x2a8] sm:$0xff]
    %v242 = vld [vmem:[%s1 + $0x2b0] sm:$0xff]
    %v243 = vld [vmem:[%s1 + $0x2b8] sm:$0xff]
    %v244 = vld [vmem:[%s1 + $0x2c0] sm:$0xff]
    %v245 = vld [vmem:[%s1 + $0x2c8] sm:$0xff]
    %v246 = vld [vmem:[%s1 + $0x2d0] sm:$0xff]
    %v247 = vld [vmem:[%s1 + $0x2d8] sm:$0xff]
    %v248 = vld [vmem:[%s1 + $0x2e0] sm:$0xff]
    %v249 = vld [vmem:[%s1 + $0x2e8] sm:$0xff]
    %v250 = vld [vmem:[%s1 + $0x2f0] sm:$0xff]
    %v251 = vld [vmem:[%s1 + $0x2f8] sm:$0xff]
    %v252 = vld [vmem:[%s1 + $0x300] sm:$0xff]
    %v253 = vld [vmem:[%s1 + $0x308] sm:$0xff]
    %v254 = vld [vmem:[%s1 + $0x310] sm:$0xff]
    %v255 = vld [vmem:[%s1 + $0x318] sm:$0xff]
    %v256 = vld [vmem:[%s1 + $0x320] sm:$0xff]
    %v257 = vld [vmem:[%s1 + $0x328] sm:$0xff]
    %v258 = vld [vmem:[%s1 + $0x330] sm:$0xff]
    %v259 = vld [vmem:[%s1 + $0x338] sm:$0xff]
    %v260 = vld [vmem:[%s1 + $0x340] sm:$0xff]
    %v261 = vld [vmem:[%s1 + $0x348] sm:$0xff]
    %v262 = vld [vmem:[%s1 + $0x350] sm:$0xff]
    %v263 = vld [vmem:[%s1 + $0x358] sm:$0xff]
    %v264 = vld [vmem:[%s1 + $0x360] sm:$0xff]
    %v265 = vld [vmem:[%s1 + $0x368] sm:$0xff]
    %v266 = vld [vmem:[%s1 + $0x370] sm:$0xff]
    %v267 = vld [vmem:[%s1 + $0x378] sm:$0xff]
    %v268 = vld [vmem:[%s1 + $0x380] sm:$0xff]
    %v269 = vld [vmem:[%s1 + $0x388] sm:$0xff]
    %v270 = vld [vmem:[%s1 + $0x390] sm:$0xff]
    %v271 = vld [vmem:[%s1 + $0x398] sm:$0xff]
    %v272 = vld [vmem:[%s1 + $0x3a0] sm:$0xff]
    %v273 = vld [vmem:[%s1 + $0x3a8] sm:$0xff]
    %v274 = vld [vmem:[%s1 + $0x3b0] sm:$0xff]
    %v275 = vld [vmem:[%s1 + $0x3b8] sm:$0xff]
    %v276 = vld [vmem:[%s1 + $0x3c0] sm:$0xff]
    %v277 = vld [vmem:[%s1 + $0x3c8] sm:$0xff]
    %v278 = vld [vmem:[%s1 + $0x3d0] sm:$0xff]
    %v279 = vld [vmem:[%s1 + $0x3d8] sm:$0xff]
    %v280 = vld [vmem:[%s1 + $0x3e0] sm:$0xff]
    %v281 = vld [vmem:[%s1 + $0x3e8] sm:$0xff]
    %v282 = vld [vmem:[%s1 + $0x3f0] sm:$0xff]
    %v283 = vld [vmem:[%s1 + $0x3f8] sm:$0xff]
    %v284 = vld [vmem:[%s1 + $0x400] sm:$0xff]
    %v285 = vld [vmem:[%s1 + $0x408] sm:$0xff]
    %v286 = vld [vmem:[%s1 + $0x410] sm:$0xff]
    %v287 = vld [vmem:[%s1 + $0x418] sm:$0xff]
    %v288 = vld [vmem:[%s1 + $0x420] sm:$0xff]
    %v289 = vld [vmem:[%s1 + $0x428] sm:$0xff]
    %v290 = vld [vmem:[%s1 + $0x430] sm:$0xff]
    %v291 = vld [vmem:[%s1 + $0x438] sm:$0xff]
    %v292 = vld [vmem:[%s1 + $0x440] sm:$0xff]
    %v293 = vld [vmem:[%s1 + $0x448] sm:$0xff]
    %v294 = vld [vmem:[%s1 + $0x450] sm:$0xff]
    %v295 = vld [vmem:[%s1 + $0x458] sm:$0xff]
    %v296 = vld [vmem:[%s1 + $0x460] sm:$0xff]
    %v297 = vld [vmem:[%s1 + $0x468] sm:$0xff]
    %v298 = vld [vmem:[%s1 + $0x470] sm:$0xff]
    %v299 = vld [vmem:[%s1 + $0x478] sm:$0xff]
    %v300 = vld [vmem:[%s1 + $0x480] sm:$0xff]
    %v301 = vld [vmem:[%s1 + $0x488] sm:$0xff]
    %v302 = vld [vmem:[%s1 + $0x490] sm:$0xff]
    %v303 = vld [vmem:[%s1 + $0x498] sm:$0xff]
    %v304 = vld [vmem:[%s1 + $0x4a0] sm:$0xff]
    %v305 = vld [vmem:[%s1 + $0x4a8] sm:$0xff]
    %v306 = vld [vmem:[%s1 + $0x4b0] sm:$0xff]
    %v307 = vld [vmem:[%s1 + $0x4b8] sm:$0xff]
    %v308 = vld [vmem:[%s1 + $0x4c0] sm:$0xff]
    %v309 = vld [vmem:[%s1 + $0x4c8] sm:$0xff]
    %v310 = vld [vmem:[%s1 + $0x4d0] sm:$0xff]
    %v311 = vld [vmem:[%s1 + $0x4d8] sm:$0xff]
    %v312 = vld [vmem:[%s1 + $0x4e0] sm:$0xff]
    %v313 = vld [vmem:[%s1 + $0x4e8] sm:$0xff]
    %v314 = vld [vmem:[%s1 + $0x4f0] sm:$0xff]
    %v315 = vld [vmem:[%s1 + $0x4f8] sm:$0xff]
    %v316 = vld [vmem:[%s1 + $0x500] sm:$0xff]
    %v317 = vld [vmem:[%s1 + $0x508] sm:$0xff]
    %v318 = vld [vmem:[%s1 + $0x510] sm:$0xff]
    %v319 = vld [vmem:[%s1 + $0x518] sm:$0xff]
    %v320 = vld [vmem:[%s1 + $0x520] sm:$0xff]
    %v321 = vld [vmem:[%s1 + $0x528] sm:$0xff]
    %v322 = vld [vmem:[%s1 + $0x530] sm:$0xff]
    %v323 = vld [vmem:[%s1 + $0x538] sm:$0xff]
    %v324 = vld [vmem:[%s1 + $0x540] sm:$0xff]
    %v325 = vld [vmem:[%s1 + $0x548] sm:$0xff]
    %v326 = vld [vmem:[%s1 + $0x550] sm:$0xff]
    %v327 = vld [vmem:[%s1 + $0x558] sm:$0xff]
    %v328 = vld [vmem:[%s1 + $0x560] sm:$0xff]
    %v329 = vld [vmem:[%s1 + $0x568] sm:$0xff]
    %v330 = vld [vmem:[%s1 + $0x570] sm:$0xff]
    %v331 = vld [vmem:[%s1 + $0x578] sm:$0xff]
    %v332 = vld [vmem:[%s1 + $0x580] sm:$0xff]
    %v333 = vld [vmem:[%s1 + $0x588] sm:$0xff]
    %v334 = vld [vmem:[%s1 + $0x590] sm:$0xff]
    %v335 = vld [vmem:[%s1 + $0x598] sm:$0xff]
    %v336 = vld [vmem:[%s1 + $0x5a0] sm:$0xff]
    %v337 = vld [vmem:[%s1 + $0x5a8] sm:$0xff]
    %v338 = vld [vmem:[%s1 + $0x5b0] sm:$0xff]
    %v339 = vld [vmem:[%s1 + $0x5b8] sm:$0xff]
    %v340 = vld [vmem:[%s1 + $0x5c0] sm:$0xff]
    %v341 = vld [vmem:[%s1 + $0x5c8] sm:$0xff]
    %v342 = vld [vmem:[%s1 + $0x5d0] sm:$0xff]
    %v343 = vld [vmem:[%s1 + $0x5d8] sm:$0xff]
    %v344 = vld [vmem:[%s1 + $0x5e0] sm:$0xff]
    %v345 = vld [vmem:[%s1 + $0x5e8] sm:$0xff]
    %v346 = vld [vmem:[%s1 + $0x5f0] sm:$0xff]
    %v347 = vld [vmem:[%s1 + $0x5f8] sm:$0xff]
    %v348 = vld [vmem:[%s1 + $0x600] sm:$0xff]
    %v349 = vld [vmem:[%s1 + $0x608] sm:$0xff]
    %v350 = vld [vmem:[%s1 + $0x610] sm:$0xff]
    %v351 = vld [vmem:[%s1 + $0x618] sm:$0xff]
    %v352 = vld [vmem:[%s1 + $0x620] sm:$0xff]
    %v353 = vld [vmem:[%s1 + $0x628] sm:$0xff]
    %v354 = vld [vmem:[%s1 + $0x630] sm:$0xff]
    %v355 = vld [vmem:[%s1 + $0x638] sm:$0xff]
    %v356 = vld [vmem:[%s1 + $0x640] sm:$0xff]
    %v357 = vld [vmem:[%s1 + $0x648] sm:$0xff]
    %v358 = vld [vmem:[%s1 + $0x650] sm:$0xff]
    %v359 = vld [vmem:[%s1 + $0x658] sm:$0xff]
    %v360 = vld [vmem:[%s1 + $0x660] sm:$0xff]
    %v361 = vld [vmem:[%s1 + $0x668] sm:$0xff]
    %v362 = vld [vmem:[%s1 + $0x670] sm:$0xff]
    %v363 = vld [vmem:[%s1 + $0x678] sm:$0xff]
    %v364 = vld [vmem:[%s1 + $0x680] sm:$0xff]
    %v365 = vld [vmem:[%s1 + $0x688] sm:$0xff]
    %v366 = vld [vmem:[%s1 + $0x690] sm:$0xff]
    %v367 = vld [vmem:[%s1 + $0x698] sm:$0xff]
    %v368 = vld [vmem:[%s1 + $0x6a0] sm:$0xff]
    %v369 = vld [vmem:[%s1 + $0x6a8] sm:$0xff]
    %v370 = vld [vmem:[%s1 + $0x6b0] sm:$0xff]
    %v371 = vld [vmem:[%s1 + $0x6b8] sm:$0xff]
    %v372 = vld [vmem:[%s1 + $0x6c0] sm:$0xff]
    %v373 = vld [vmem:[%s1 + $0x6c8] sm:$0xff]
    %v374 = vld [vmem:[%s1 + $0x6d0] sm:$0xff]
    %v375 = vld [vmem:[%s1 + $0x6d8] sm:$0xff]
    %v376 = vld [vmem:[%s1 + $0x6e0] sm:$0xff]
    %v377 = vld [vmem:[%s1 + $0x6e8] sm:$0xff]
    %v378 = vld [vmem:[%s1 + $0x6f0] sm:$0xff]
    %v379 = vld [vmem:[%s1 + $0x6f8] sm:$0xff]
    %v380 = vld [vmem:[%s1 + $0x700] sm:$0xff]
    %v381 = vld [vmem:[%s1 + $0x708] sm:$0xff]
    %v382 = vld [vmem:[%s1 + $0x710] sm:$0xff]
    %v383 = vld [vmem:[%s1 + $0x718] sm:$0xff]
    %v384 = vld [vmem:[%s1 + $0x720] sm:$0xff]
    %v385 = vld [vmem:[%s1 + $0x728] sm:$0xff]
    %v386 = vld [vmem:[%s1 + $0x730] sm:$0xff]
    %v387 = vld [vmem:[%s1 + $0x738] sm:$0xff]
    %v388 = vld [vmem:[%s1 + $0x740] sm:$0xff]
    %v389 = vld [vmem:[%s1 + $0x748] sm:$0xff]
    %v390 = vld [vmem:[%s1 + $0x750] sm:$0xff]
    %v391 = vld [vmem:[%s1 + $0x758] sm:$0xff]
    %v392 = vld [vmem:[%s1 + $0x760] sm:$0xff]
    %v393 = vld [vmem:[%s1 + $0x768] sm:$0xff]
    %v394 = vld [vmem:[%s1 + $0x770] sm:$0xff]
    %v395 = vld [vmem:[%s1 + $0x778] sm:$0xff]
    %v396 = vld [vmem:[%s1 + $0x780] sm:$0xff]
    %v397 = vld [vmem:[%s1 + $0x788] sm:$0xff]
    %v398 = vld [vmem:[%s1 + $0x790] sm:$0xff]
    %v399 = vld [vmem:[%s1 + $0x798] sm:$0xff]
    %v400 = vld [vmem:[%s1 + $0x7a0] sm:$0xff]
    %v401 = vld [vmem:[%s1 + $0x7a8] sm:$0xff]
    %v402 = vld [vmem:[%s1 + $0x7b0] sm:$0xff]
    %v403 = vld [vmem:[%s1 + $0x7b8] sm:$0xff]
    %v404 = vld [vmem:[%s1 + $0x7c0] sm:$0xff]
    %v405 = vld [vmem:[%s1 + $0x7c8] sm:$0xff]
    %v406 = vld [vmem:[%s1 + $0x7d0] sm:$0xff]
    %v407 = vld [vmem:[%s1 + $0x7d8] sm:$0xff]
    %v408 = vld [vmem:[%s1 + $0x7e0] sm:$0xff]
    %v409 = vld [vmem:[%s1 + $0x7e8] sm:$0xff]
    %v410 = vld [vmem:[%s1 + $0x7f0] sm:$0xff]
    %v411 = vld [vmem:[%s1 + $0x7f8] sm:$0xff]
    %v412 = vld [vmem:[%s1 + $0x800] sm:$0xff]
    %v413 = vld [vmem:[%s1 + $0x808] sm:$0xff]
    %v414 = vld [vmem:[%s1 + $0x810] sm:$0xff]
    %v415 = vld [vmem:[%s1 + $0x818] sm:$0xff]
    %v416 = vld [vmem:[%s1 + $0x820] sm:$0xff]
    %v417 = vld [vmem:[%s1 + $0x828] sm:$0xff]
    %v418 = vld [vmem:[%s1 + $0x830] sm:$0xff]
    %v419 = vld [vmem:[%s1 + $0x838] sm:$0xff]
    %v420 = vld [vmem:[%s1 + $0x840] sm:$0xff]
    %v421 = vld [vmem:[%s1 + $0x848] sm:$0xff]
    %v422 = vld [vmem:[%s1 + $0x850] sm:$0xff]
    %v423 = vld [vmem:[%s1 + $0x858] sm:$0xff]
    %v424 = vld [vmem:[%s1 + $0x860] sm:$0xff]
    %v425 = vld [vmem:[%s1 + $0x868] sm:$0xff]
    %v426 = vld [vmem:[%s1 + $0x870] sm:$0xff]
    %v427 = vld [vmem:[%s1 + $0x878] sm:$0xff]
    %v428 = vld [vmem:[%s1 + $0x880] sm:$0xff]
    %v429 = vld [vmem:[%s1 + $0x888] sm:$0xff]
    %v430 = vld [vmem:[%s1 + $0x890] sm:$0xff]
    %v431 = vld [vmem:[%s1 + $0x898] sm:$0xff]
    %v432 = vld [vmem:[%s1 + $0x8a0] sm:$0xff]
    %v433 = vld [vmem:[%s1 + $0x8a8] sm:$0xff]
    %v434 = vld [vmem:[%s1 + $0x8b0] sm:$0xff]
    %v435 = vld [vmem:[%s1 + $0x8b8] sm:$0xff]
    %v436 = vld [vmem:[%s1 + $0x8c0] sm:$0xff]
    %v437 = vld [vmem:[%s1 + $0x8c8] sm:$0xff]
    %v438 = vld [vmem:[%s1 + $0x8d0] sm:$0xff]
    %v439 = vld [vmem:[%s1 + $0x8d8] sm:$0xff]
    %v440 = vld [vmem:[%s1 + $0x8e0] sm:$0xff]
    %v441 = vld [vmem:[%s1 + $0x8e8] sm:$0xff]
    %v442 = vld [vmem:[%s1 + $0x8f0] sm:$0xff]
    %v443 = vld [vmem:[%s1 + $0x8f8] sm:$0xff]
    %v444 = vld [vmem:[%s1 + $0x900] sm:$0xff]
    %v445 = vld [vmem:[%s1 + $0x908] sm:$0xff]
    %v446 = vld [vmem:[%s1 + $0x910] sm:$0xff]
    %v447 = vld [vmem:[%s1 + $0x918] sm:$0xff]
    %v448 = vld [vmem:[%s1 + $0x920] sm:$0xff]
    %v449 = vld [vmem:[%s1 + $0x928] sm:$0xff]
    %v450 = vld [vmem:[%s1 + $0x930] sm:$0xff]
    %v451 = vld [vmem:[%s1 + $0x938] sm:$0xff]
    %v452 = vld [vmem:[%s1 + $0x940] sm:$0xff]
    %v453 = vld [vmem:[%s1 + $0x948] sm:$0xff]
    %v454 = vld [vmem:[%s1 + $0x950] sm:$0xff]
    %v455 = vld [vmem:[%s1 + $0x958] sm:$0xff]
    %v456 = vld [vmem:[%s1 + $0x960] sm:$0xff]
    %v457 = vld [vmem:[%s1 + $0x968] sm:$0xff]
    %v458 = vld [vmem:[%s1 + $0x970] sm:$0xff]
    %v459 = vld [vmem:[%s1 + $0x978] sm:$0xff]
    %v460 = vld [vmem:[%s1 + $0x980] sm:$0xff]
    %v461 = vld [vmem:[%s1 + $0x988] sm:$0xff]
    %v462 = vld [vmem:[%s1 + $0x990] sm:$0xff]
    %v463 = vld [vmem:[%s1 + $0x998] sm:$0xff]
    %v464 = vld [vmem:[%s1 + $0x9a0] sm:$0xff]
    %v465 = vld [vmem:[%s1 + $0x9a8] sm:$0xff]
    %v466 = vld [vmem:[%s1 + $0x9b0] sm:$0xff]
    %v467 = vld [vmem:[%s1 + $0x9b8] sm:$0xff]
    %v468 = vld [vmem:[%s1 + $0x9c0] sm:$0xff]
    %v469 = vld [vmem:[%s1 + $0x9c8] sm:$0xff]
    %v470 = vld [vmem:[%s1 + $0x9d0] sm:$0xff]
    %v471 = vld [vmem:[%s1 + $0x9d8] sm:$0xff]
    %v472 = vld [vmem:[%s1 + $0x9e0] sm:$0xff]
    %v473 = vld [vmem:[%s1 + $0x9e8] sm:$0xff]
    %v474 = vld [vmem:[%s1 + $0x9f0] sm:$0xff]
    %v475 = vld [vmem:[%s1 + $0x9f8] sm:$0xff]
    %v476 = vld [vmem:[%s1 + $0xa00] sm:$0xff]
    %v477 = vld [vmem:[%s1 + $0xa08] sm:$0xff]
    %v478 = vld [vmem:[%s1 + $0xa10] sm:$0xff]
    %v479 = vld [vmem:[%s1 + $0xa18] sm:$0xff]
    %v480 = vld [vmem:[%s1 + $0xa20] sm:$0xff]
    %v481 = vld [vmem:[%s1 + $0xa28] sm:$0xff]
    %v482 = vld [vmem:[%s1 + $0xa30] sm:$0xff]
    %v483 = vld [vmem:[%s1 + $0xa38] sm:$0xff]
    %v484 = vld [vmem:[%s1 + $0xa40] sm:$0xff]
    %v485 = vld [vmem:[%s1 + $0xa48] sm:$0xff]
    %v486 = vld [vmem:[%s1 + $0xa50] sm:$0xff]
    %v487 = vld [vmem:[%s1 + $0xa58] sm:$0xff]
    %v488 = vld [vmem:[%s1 + $0xa60] sm:$0xff]
    %v489 = vld [vmem:[%s1 + $0xa68] sm:$0xff]
    %v490 = vld [vmem:[%s1 + $0xa70] sm:$0xff]
    %v491 = vld [vmem:[%s1 + $0xa78] sm:$0xff]
    %v492 = vld [vmem:[%s1 + $0xa80] sm:$0xff]
    %v493 = vld [vmem:[%s1 + $0xa88] sm:$0xff]
    %v494 = vld [vmem:[%s1 + $0xa90] sm:$0xff]
    %v495 = vld [vmem:[%s1 + $0xa98] sm:$0xff]
    %v496 = vld [vmem:[%s1 + $0xaa0] sm:$0xff]
    %v497 = vld [vmem:[%s1 + $0xaa8] sm:$0xff]
    %v498 = vld [vmem:[%s1 + $0xab0] sm:$0xff]
    %v499 = vld [vmem:[%s1 + $0xab8] sm:$0xff]
    %v500 = vld [vmem:[%s1 + $0xac0] sm:$0xff]
    %v501 = vld [vmem:[%s1 + $0xac8] sm:$0xff]
    %v502 = vld [vmem:[%s1 + $0xad0] sm:$0xff]
    %v503 = vld [vmem:[%s1 + $0xad8] sm:$0xff]
    %v504 = vld [vmem:[%s1 + $0xae0] sm:$0xff]
    %v505 = vld [vmem:[%s1 + $0xae8] sm:$0xff]
    %v506 = vld [vmem:[%s1 + $0xaf0] sm:$0xff]
    %v507 = vld [vmem:[%s1 + $0xaf8] sm:$0xff]
    %v508 = vld [vmem:[%s1 + $0xb00] sm:$0xff]
    %v509 = vld [vmem:[%s1 + $0xb08] sm:$0xff]
    %v510 = vld [vmem:[%s1 + $0xb10] sm:$0xff]
    %v511 = vld [vmem:[%s1 + $0xb18] sm:$0xff]
    %v512 = vld [vmem:[%s1 + $0xb20] sm:$0xff]
    %v513 = vld [vmem:[%s1 + $0xb28] sm:$0xff]
    %v514 = vld [vmem:[%s1 + $0xb30] sm:$0xff]
    %v515 = vld [vmem:[%s1 + $0xb38] sm:$0xff]
    %v516 = vld [vmem:[%s1 + $0xb40] sm:$0xff]
    %v517 = vld [vmem:[%s1 + $0xb48] sm:$0xff]
    %v518 = vld [vmem:[%s1 + $0xb50] sm:$0xff]
    %v519 = vld [vmem:[%s1 + $0xb58] sm:$0xff]
    %v520 = vld [vmem:[%s1 + $0xb60] sm:$0xff]
    %v521 = vld [vmem:[%s1 + $0xb68] sm:$0xff]
    %v522 = vld [vmem:[%s1 + $0xb70] sm:$0xff]
    %v523 = vld [vmem:[%s1 + $0xb78] sm:$0xff]
    %v524 = vld [vmem:[%s1 + $0xb80] sm:$0xff]
    %v525 = vld [vmem:[%s1 + $0xb88] sm:$0xff]
    %v526 = vld [vmem:[%s1 + $0xb90] sm:$0xff]
    %v527 = vld [vmem:[%s1 + $0xb98] sm:$0xff]
    %v528 = vld [vmem:[%s1 + $0xba0] sm:$0xff]
    %v529 = vld [vmem:[%s1 + $0xba8] sm:$0xff]
    %v530 = vld [vmem:[%s1 + $0xbb0] sm:$0xff]
    %v531 = vld [vmem:[%s1 + $0xbb8] sm:$0xff]
    %v532 = vld [vmem:[%s1 + $0xbc0] sm:$0xff]
    %v533 = vld [vmem:[%s1 + $0xbc8] sm:$0xff]
    %v534 = vld [vmem:[%s1 + $0xbd0] sm:$0xff]
    %v535 = vld [vmem:[%s1 + $0xbd8] sm:$0xff]
    %v536 = vld [vmem:[%s1 + $0xbe0] sm:$0xff]
    %v537 = vld [vmem:[%s1 + $0xbe8] sm:$0xff]
    %v538 = vld [vmem:[%s1 + $0xbf0] sm:$0xff]
    %v539 = vld [vmem:[%s1 + $0xbf8] sm:$0xff]
    %v540 = vld [vmem:[%s1 + $0xc00] sm:$0xff]
    %v541 = vld [vmem:[%s1 + $0xc08] sm:$0xff]
    %v542 = vld [vmem:[%s1 + $0xc10] sm:$0xff]
    %v543 = vld [vmem:[%s1 + $0xc18] sm:$0xff]
    %v544 = vld [vmem:[%s1 + $0xc20] sm:$0xff]
    %v545 = vld [vmem:[%s1 + $0xc28] sm:$0xff]
    %v546 = vld [vmem:[%s1 + $0xc30] sm:$0xff]
    %v547 = vld [vmem:[%s1 + $0xc38] sm:$0xff]
    %v548 = vld [vmem:[%s1 + $0xc40] sm:$0xff]
    %v549 = vld [vmem:[%s1 + $0xc48] sm:$0xff]
    %v550 = vld [vmem:[%s1 + $0xc50] sm:$0xff]
    %v551 = vld [vmem:[%s1 + $0xc58] sm:$0xff]
    %v552 = vld [vmem:[%s1 + $0xc60] sm:$0xff]
    %v553 = vld [vmem:[%s1 + $0xc68] sm:$0xff]
    %v554 = vld [vmem:[%s1 + $0xc70] sm:$0xff]
    %v555 = vld [vmem:[%s1 + $0xc78] sm:$0xff]
    %v556 = vld [vmem:[%s1 + $0xc80] sm:$0xff]
    %v557 = vld [vmem:[%s1 + $0xc88] sm:$0xff]
    %v558 = vld [vmem:[%s1 + $0xc90] sm:$0xff]
    %v559 = vld [vmem:[%s1 + $0xc98] sm:$0xff]
    %v560 = vld [vmem:[%s1 + $0xca0] sm:$0xff]
    %v561 = vld [vmem:[%s1 + $0xca8] sm:$0xff]
    %v562 = vld [vmem:[%s1 + $0xcb0] sm:$0xff]
    %v563 = vld [vmem:[%s1 + $0xcb8] sm:$0xff]
    %v564 = vld [vmem:[%s1 + $0xcc0] sm:$0xff]
    %v565 = vld [vmem:[%s1 + $0xcc8] sm:$0xff]
    %v566 = vld [vmem:[%s1 + $0xcd0] sm:$0xff]
    %v567 = vld [vmem:[%s1 + $0xcd8] sm:$0xff]
    %v568 = vld [vmem:[%s1 + $0xce0] sm:$0xff]
    %v569 = vld [vmem:[%s1 + $0xce8] sm:$0xff]
    %v570 = vld [vmem:[%s1 + $0xcf0] sm:$0xff]
    %v571 = vld [vmem:[%s1 + $0xcf8] sm:$0xff]
    %v572 = vld [vmem:[%s1 + $0xd00] sm:$0xff]
    %v573 = vld [vmem:[%s1 + $0xd08] sm:$0xff]
    %v574 = vld [vmem:[%s1 + $0xd10] sm:$0xff]
    %v575 = vld [vmem:[%s1 + $0xd18] sm:$0xff]
    %v576 = vld [vmem:[%s1 + $0xd20] sm:$0xff]
    %v577 = vld [vmem:[%s1 + $0xd28] sm:$0xff]
    %v578 = vld [vmem:[%s1 + $0xd30] sm:$0xff]
    %v579 = vld [vmem:[%s1 + $0xd38] sm:$0xff]
    %v580 = vld [vmem:[%s1 + $0xd40] sm:$0xff]
    %v581 = vld [vmem:[%s1 + $0xd48] sm:$0xff]
    %v582 = vld [vmem:[%s1 + $0xd50] sm:$0xff]
    %v583 = vld [vmem:[%s1 + $0xd58] sm:$0xff]
    %v584 = vld [vmem:[%s1 + $0xd60] sm:$0xff]
    %v585 = vld [vmem:[%s1 + $0xd68] sm:$0xff]
    %v586 = vld [vmem:[%s1 + $0xd70] sm:$0xff]
    %v587 = vld [vmem:[%s1 + $0xd78] sm:$0xff]
    %v588 = vld [vmem:[%s1 + $0xd80] sm:$0xff]
    %v589 = vld [vmem:[%s1 + $0xd88] sm:$0xff]
    %v590 = vld [vmem:[%s1 + $0xd90] sm:$0xff]
    %v591 = vld [vmem:[%s1 + $0xd98] sm:$0xff]
    %v592 = vld [vmem:[%s1 + $0xda0] sm:$0xff]
    %v593 = vld [vmem:[%s1 + $0xda8] sm:$0xff]
    %v594 = vld [vmem:[%s1 + $0xdb0] sm:$0xff]
    %v595 = vld [vmem:[%s1 + $0xdb8] sm:$0xff]
    %v596 = vld [vmem:[%s1 + $0xdc0] sm:$0xff]
    %v597 = vld [vmem:[%s1 + $0xdc8] sm:$0xff]
    %v598 = vld [vmem:[%s1 + $0xdd0] sm:$0xff]
    %v599 = vld [vmem:[%s1 + $0xdd8] sm:$0xff]
    %v600 = vld [vmem:[%s1 + $0xde0] sm:$0xff]
    %v601 = vld [vmem:[%s1 + $0xde8] sm:$0xff]
    %v602 = vld [vmem:[%s1 + $0xdf0] sm:$0xff]
    %v603 = vld [vmem:[%s1 + $0xdf8] sm:$0xff]
    %v604 = vld [vmem:[%s1 + $0xe00] sm:$0xff]
    %v605 = vld [vmem:[%s1 + $0xe08] sm:$0xff]
    %v606 = vld [vmem:[%s1 + $0xe10] sm:$0xff]
    %v607 = vld [vmem:[%s1 + $0xe18] sm:$0xff]
    %v608 = vld [vmem:[%s1 + $0xe20] sm:$0xff]
    %v609 = vld [vmem:[%s1 + $0xe28] sm:$0xff]
    %v610 = vld [vmem:[%s1 + $0xe30] sm:$0xff]
    %v611 = vld [vmem:[%s1 + $0xe38] sm:$0xff]
    %v612 = vld [vmem:[%s1 + $0xe40] sm:$0xff]
    %v613 = vld [vmem:[%s1 + $0xe48] sm:$0xff]
    %v614 = vld [vmem:[%s1 + $0xe50] sm:$0xff]
    %v615 = vld [vmem:[%s1 + $0xe58] sm:$0xff]
    %v616 = vld [vmem:[%s1 + $0xe60] sm:$0xff]
    %v617 = vld [vmem:[%s1 + $0xe68] sm:$0xff]
    %v618 = vld [vmem:[%s1 + $0xe70] sm:$0xff]
    %v619 = vld [vmem:[%s1 + $0xe78] sm:$0xff]
    %v620 = vld [vmem:[%s1 + $0xe80] sm:$0xff]
    %v621 = vld [vmem:[%s1 + $0xe88] sm:$0xff]
    %v622 = vld [vmem:[%s1 + $0xe90] sm:$0xff]
    %v623 = vld [vmem:[%s1 + $0xe98] sm:$0xff]
    %v624 = vld [vmem:[%s1 + $0xea0] sm:$0xff]
    %v625 = vld [vmem:[%s1 + $0xea8] sm:$0xff]
    %v626 = vld [vmem:[%s1 + $0xeb0] sm:$0xff]
    %v627 = vld [vmem:[%s1 + $0xeb8] sm:$0xff]
    %v628 = vld [vmem:[%s1 + $0xec0] sm:$0xff]
    %v629 = vld [vmem:[%s1 + $0xec8] sm:$0xff]
    %v630 = vld [vmem:[%s1 + $0xed0] sm:$0xff]
    %v631 = vld [vmem:[%s1 + $0xed8] sm:$0xff]
    %v632 = vld [vmem:[%s1 + $0xee0] sm:$0xff]
    %v633 = vld [vmem:[%s1 + $0xee8] sm:$0xff]
    %v634 = vld [vmem:[%s1 + $0xef0] sm:$0xff]
    %v635 = vld [vmem:[%s1 + $0xef8] sm:$0xff]
    %v636 = vld [vmem:[%s1 + $0xf00] sm:$0xff]
    %v637 = vld [vmem:[%s1 + $0xf08] sm:$0xff]
    %v638 = vld [vmem:[%s1 + $0xf10] sm:$0xff]
    %v639 = vld [vmem:[%s1 + $0xf18] sm:$0xff]
    %v640 = vld [vmem:[%s1 + $0xf20] sm:$0xff]
    %v641 = vld [vmem:[%s1 + $0xf28] sm:$0xff]
    %v642 = vld [vmem:[%s1 + $0xf30] sm:$0xff]
    %v643 = vld [vmem:[%s1 + $0xf38] sm:$0xff]
    %v644 = vld [vmem:[%s1 + $0xf40] sm:$0xff]
    %v645 = vld [vmem:[%s1 + $0xf48] sm:$0xff]
    %v646 = vld [vmem:[%s1 + $0xf50] sm:$0xff]
    %v647 = vld [vmem:[%s1 + $0xf58] sm:$0xff]
    %v648 = vld [vmem:[%s1 + $0xf60] sm:$0xff]
    %v649 = vld [vmem:[%s1 + $0xf68] sm:$0xff]
    %v650 = vld [vmem:[%s1 + $0xf70] sm:$0xff]
    %v651 = vld [vmem:[%s1 + $0xf78] sm:$0xff]
    %v652 = vld [vmem:[%s1 + $0xf80] sm:$0xff]
    %v653 = vld [vmem:[%s1 + $0xf88] sm:$0xff]
    %v654 = vld [vmem:[%s1 + $0xf90] sm:$0xff]
    %v655 = vld [vmem:[%s1 + $0xf98] sm:$0xff]
    %v656 = vld [vmem:[%s1 + $0xfa0] sm:$0xff]
    %v657 = vld [vmem:[%s1 + $0xfa8] sm:$0xff]
    %v658 = vld [vmem:[%s1 + $0xfb0] sm:$0xff]
    %v659 = vld [vmem:[%s1 + $0xfb8] sm:$0xff]
    %v660 = vld [vmem:[%s1 + $0xfc0] sm:$0xff]
    %v661 = vld [vmem:[%s1 + $0xfc8] sm:$0xff]
    %v662 = vld [vmem:[%s1 + $0xfd0] sm:$0xff]
    %v663 = vld [vmem:[%s1 + $0xfd8] sm:$0xff]
    %v664 = vld [vmem:[%s1 + $0xfe0] sm:$0xff]
    %v665 = vld [vmem:[%s1 + $0xfe8] sm:$0xff]
    %v666 = vld [vmem:[%s1 + $0xff0] sm:$0xff]
    %v667 = vld [vmem:[%s1 + $0xff8] sm:$0xff]
    %v668 = vld [vmem:[%s1 + $0x1000] sm:$0xff]
    %v669 = vld [vmem:[%s1 + $0x1008] sm:$0xff]
    %v670 = vld [vmem:[%s1 + $0x1010] sm:$0xff]
    %v671 = vld [vmem:[%s1 + $0x1018] sm:$0xff]
    %v672 = vld [vmem:[%s1 + $0x1020] sm:$0xff]
    %v673 = vld [vmem:[%s1 + $0x1028] sm:$0xff]
    %v674 = vld [vmem:[%s1 + $0x1030] sm:$0xff]
    %v675 = vld [vmem:[%s1 + $0x1038] sm:$0xff]
    %v676 = vld [vmem:[%s1 + $0x1040] sm:$0xff]
    %v677 = vld [vmem:[%s1 + $0x1048] sm:$0xff]
    %v678 = vld [vmem:[%s1 + $0x1050] sm:$0xff]
    %v679 = vld [vmem:[%s1 + $0x1058] sm:$0xff]
    %v680 = vld [vmem:[%s1 + $0x1060] sm:$0xff]
    %v681 = vld [vmem:[%s1 + $0x1068] sm:$0xff]
    %v682 = vld [vmem:[%s1 + $0x1070] sm:$0xff]
    %v683 = vld [vmem:[%s1 + $0x1078] sm:$0xff]
    %v684 = vld [vmem:[%s1 + $0x1080] sm:$0xff]
    %v685 = vld [vmem:[%s1 + $0x1088] sm:$0xff]
    %v686 = vld [vmem:[%s1 + $0x1090] sm:$0xff]
    %v687 = vld [vmem:[%s1 + $0x1098] sm:$0xff]
    %v688 = vld [vmem:[%s1 + $0x10a0] sm:$0xff]
    %v689 = vld [vmem:[%s1 + $0x10a8] sm:$0xff]
    %v690 = vld [vmem:[%s1 + $0x10b0] sm:$0xff]
    %v691 = vld [vmem:[%s1 + $0x10b8] sm:$0xff]
    %v692 = vld [vmem:[%s1 + $0x10c0] sm:$0xff]
    %v693 = vld [vmem:[%s1 + $0x10c8] sm:$0xff]
    %v694 = vld [vmem:[%s1 + $0x10d0] sm:$0xff]
    %v695 = vld [vmem:[%s1 + $0x10d8] sm:$0xff]
    %v696 = vld [vmem:[%s1 + $0x10e0] sm:$0xff]
    %v697 = vld [vmem:[%s1 + $0x10e8] sm:$0xff]
    %v698 = vld [vmem:[%s1 + $0x10f0] sm:$0xff]
    %v699 = vld [vmem:[%s1 + $0x10f8] sm:$0xff]
    %v700 = vld [vmem:[%s1 + $0x1100] sm:$0xff]
    %v701 = vld [vmem:[%s1 + $0x1108] sm:$0xff]
    %v702 = vld [vmem:[%s1 + $0x1110] sm:$0xff]
    %v703 = vld [vmem:[%s1 + $0x1118] sm:$0xff]
    %v704 = vld [vmem:[%s1 + $0x1120] sm:$0xff]
    %v705 = vld [vmem:[%s1 + $0x1128] sm:$0xff]
    %v706 = vld [vmem:[%s1 + $0x1130] sm:$0xff]
    %v707 = vld [vmem:[%s1 + $0x1138] sm:$0xff]
    %v708 = vld [vmem:[%s1 + $0x1140] sm:$0xff]
    %v709 = vld [vmem:[%s1 + $0x1148] sm:$0xff]
    %v710 = vld [vmem:[%s1 + $0x1150] sm:$0xff]
    %v711 = vld [vmem:[%s1 + $0x1158] sm:$0xff]
    %v712 = vld [vmem:[%s1 + $0x1160] sm:$0xff]
    %v713 = vld [vmem:[%s1 + $0x1168] sm:$0xff]
    %v714 = vld [vmem:[%s1 + $0x1170] sm:$0xff]
    %v715 = vld [vmem:[%s1 + $0x1178] sm:$0xff]
    %v716 = vld [vmem:[%s1 + $0x1180] sm:$0xff]
    %v717 = vld [vmem:[%s1 + $0x1188] sm:$0xff]
    %v718 = vld [vmem:[%s1 + $0x1190] sm:$0xff]
    %v719 = vld [vmem:[%s1 + $0x1198] sm:$0xff]
    %v720 = vld [vmem:[%s1 + $0x11a0] sm:$0xff]
    %v721 = vld [vmem:[%s1 + $0x11a8] sm:$0xff]
    %v722 = vld [vmem:[%s1 + $0x11b0] sm:$0xff]
    %v723 = vld [vmem:[%s1 + $0x11b8] sm:$0xff]
    %v724 = vld [vmem:[%s1 + $0x11c0] sm:$0xff]
    %v725 = vld [vmem:[%s1 + $0x11c8] sm:$0xff]
    %v726 = vld [vmem:[%s1 + $0x11d0] sm:$0xff]
    %v727 = vld [vmem:[%s1 + $0x11d8] sm:$0xff]
    %v728 = vld [vmem:[%s1 + $0x11e0] sm:$0xff]
    %v729 = vld [vmem:[%s1 + $0x11e8] sm:$0xff]
    %v730 = vld [vmem:[%s1 + $0x11f0] sm:$0xff]
    %v731 = vld [vmem:[%s1 + $0x11f8] sm:$0xff]
    %v732 = vld [vmem:[%s1 + $0x1200] sm:$0xff]
    %v733 = vld [vmem:[%s1 + $0x1208] sm:$0xff]
    %v734 = vld [vmem:[%s1 + $0x1210] sm:$0xff]
    %v735 = vld [vmem:[%s1 + $0x1218] sm:$0xff]
    %v736 = vld [vmem:[%s1 + $0x1220] sm:$0xff]
    %v737 = vld [vmem:[%s1 + $0x1228] sm:$0xff]
    %v738 = vld [vmem:[%s1 + $0x1230] sm:$0xff]
    %v739 = vld [vmem:[%s1 + $0x1238] sm:$0xff]
    %v740 = vld [vmem:[%s1 + $0x1240] sm:$0xff]
    %v741 = vld [vmem:[%s1 + $0x1248] sm:$0xff]
    %v742 = vld [vmem:[%s1 + $0x1250] sm:$0xff]
    %v743 = vld [vmem:[%s1 + $0x1258] sm:$0xff]
    %v744 = vld [vmem:[%s1 + $0x1260] sm:$0xff]
    %v745 = vld [vmem:[%s1 + $0x1268] sm:$0xff]
    %v746 = vld [vmem:[%s1 + $0x1270] sm:$0xff]
    %v747 = vld [vmem:[%s1 + $0x1278] sm:$0xff]
    %v748 = vld [vmem:[%s1 + $0x1280] sm:$0xff]
    %v749 = vld [vmem:[%s1 + $0x1288] sm:$0xff]
    %v750 = vld [vmem:[%s1 + $0x1290] sm:$0xff]
    %v751 = vld [vmem:[%s1 + $0x1298] sm:$0xff]
    %v752 = vld [vmem:[%s1 + $0x12a0] sm:$0xff]
    %v753 = vld [vmem:[%s1 + $0x12a8] sm:$0xff]
    %v754 = vld [vmem:[%s1 + $0x12b0] sm:$0xff]
    %v755 = vld [vmem:[%s1 + $0x12b8] sm:$0xff]
    %v756 = vld [vmem:[%s1 + $0x12c0] sm:$0xff]
    %v757 = vld [vmem:[%s1 + $0x12c8] sm:$0xff]
    %v758 = vld [vmem:[%s1 + $0x12d0] sm:$0xff]
    %v759 = vld [vmem:[%s1 + $0x12d8] sm:$0xff]
    %v760 = vld [vmem:[%s1 + $0x12e0] sm:$0xff]
    %v761 = vld [vmem:[%s1 + $0x12e8] sm:$0xff]
    %v762 = vld [vmem:[%s1 + $0x12f0] sm:$0xff]
    %v763 = vld [vmem:[%s1 + $0x12f8] sm:$0xff]
    %v764 = vld [vmem:[%s1 + $0x1300] sm:$0xff]
    %v765 = vld [vmem:[%s1 + $0x1308] sm:$0xff]
    %v766 = vld [vmem:[%s1 + $0x1310] sm:$0xff]
    %v767 = vld [vmem:[%s1 + $0x1318] sm:$0xff]
    %v768 = vld [vmem:[%s1 + $0x1320] sm:$0xff]
    %v769 = vld [vmem:[%s1 + $0x1328] sm:$0xff]
    %v770 = vld [vmem:[%s1 + $0x1330] sm:$0xff]
    %v771 = vld [vmem:[%s1 + $0x1338] sm:$0xff]
    %v772 = vld [vmem:[%s1 + $0x1340] sm:$0xff]
    %v773 = vld [vmem:[%s1 + $0x1348] sm:$0xff]
    %v774 = vld [vmem:[%s1 + $0x1350] sm:$0xff]
    %v775 = vld [vmem:[%s1 + $0x1358] sm:$0xff]
    %v776 = vld [vmem:[%s1 + $0x1360] sm:$0xff]
    %v777 = vld [vmem:[%s1 + $0x1368] sm:$0xff]
    %v778 = vld [vmem:[%s1 + $0x1370] sm:$0xff]
    %v779 = vld [vmem:[%s1 + $0x1378] sm:$0xff]
    %v780 = vld [vmem:[%s1 + $0x1380] sm:$0xff]
    %v781 = vld [vmem:[%s1 + $0x1388] sm:$0xff]
    %v782 = vld [vmem:[%s1 + $0x1390] sm:$0xff]
    %v783 = vld [vmem:[%s1 + $0x1398] sm:$0xff]
    %v784 = vld [vmem:[%s1 + $0x13a0] sm:$0xff]
    %v785 = vld [vmem:[%s1 + $0x13a8] sm:$0xff]
    %v786 = vld [vmem:[%s1 + $0x13b0] sm:$0xff]
    %v787 = vld [vmem:[%s1 + $0x13b8] sm:$0xff]
    %v788 = vld [vmem:[%s1 + $0x13c0] sm:$0xff]
    %v789 = vld [vmem:[%s1 + $0x13c8] sm:$0xff]
    %v790 = vld [vmem:[%s1 + $0x13d0] sm:$0xff]
    %v791 = vld [vmem:[%s1 + $0x13d8] sm:$0xff]
    %v792 = vld [vmem:[%s1 + $0x13e0] sm:$0xff]
    %v793 = vld [vmem:[%s1 + $0x13e8] sm:$0xff]
    %v794 = vld [vmem:[%s1 + $0x13f0] sm:$0xff]
    %v795 = vld [vmem:[%s1 + $0x13f8] sm:$0xff]
    %v796 = vld [vmem:[%s1 + $0x1400] sm:$0xff]
    %v797 = vld [vmem:[%s1 + $0x1408] sm:$0xff]
    %v798 = vld [vmem:[%s1 + $0x1410] sm:$0xff]
    %v799 = vld [vmem:[%s1 + $0x1418] sm:$0xff]
    %v800 = vld [vmem:[%s1 + $0x1420] sm:$0xff]
    %v801 = vld [vmem:[%s1 + $0x1428] sm:$0xff]
    %v802 = vld [vmem:[%s1 + $0x1430] sm:$0xff]
    %v803 = vld [vmem:[%s1 + $0x1438] sm:$0xff]
    %v804 = vld [vmem:[%s1 + $0x1440] sm:$0xff]
    %v805 = vld [vmem:[%s1 + $0x1448] sm:$0xff]
    %v806 = vld [vmem:[%s1 + $0x1450] sm:$0xff]
    %v807 = vld [vmem:[%s1 + $0x1458] sm:$0xff]
    %v808 = vld [vmem:[%s1 + $0x1460] sm:$0xff]
    %v809 = vld [vmem:[%s1 + $0x1468] sm:$0xff]
    %v810 = vld [vmem:[%s1 + $0x1470] sm:$0xff]
    %v811 = vld [vmem:[%s1 + $0x1478] sm:$0xff]
    %v812 = vld [vmem:[%s1 + $0x1480] sm:$0xff]
    %v813 = vld [vmem:[%s1 + $0x1488] sm:$0xff]
    %v814 = vld [vmem:[%s1 + $0x1490] sm:$0xff]
    %v815 = vld [vmem:[%s1 + $0x1498] sm:$0xff]
    %v816 = vld [vmem:[%s1 + $0x14a0] sm:$0xff]
    %v817 = vld [vmem:[%s1 + $0x14a8] sm:$0xff]
    %v818 = vld [vmem:[%s1 + $0x14b0] sm:$0xff]
    %v819 = vld [vmem:[%s1 + $0x14b8] sm:$0xff]
    %v820 = vld [vmem:[%s1 + $0x14c0] sm:$0xff]
    %v821 = vld [vmem:[%s1 + $0x14c8] sm:$0xff]
    %v822 = vld [vmem:[%s1 + $0x14d0] sm:$0xff]
    %v823 = vld [vmem:[%s1 + $0x14d8] sm:$0xff]
    %v824 = vld [vmem:[%s1 + $0x14e0] sm:$0xff]
    %v825 = vld [vmem:[%s1 + $0x14e8] sm:$0xff]
    %v826 = vld [vmem:[%s1 + $0x14f0] sm:$0xff]
    %v827 = vld [vmem:[%s1 + $0x14f8] sm:$0xff]
    %v828 = vld [vmem:[%s1 + $0x1500] sm:$0xff]
    %v829 = vld [vmem:[%s1 + $0x1508] sm:$0xff]
    %v830 = vld [vmem:[%s1 + $0x1510] sm:$0xff]
    %v831 = vld [vmem:[%s1 + $0x1518] sm:$0xff]
    %v832 = vld [vmem:[%s1 + $0x1520] sm:$0xff]
    %v833 = vld [vmem:[%s1 + $0x1528] sm:$0xff]
    %v834 = vld [vmem:[%s1 + $0x1530] sm:$0xff]
    %v835 = vld [vmem:[%s1 + $0x1538] sm:$0xff]
    %v836 = vld [vmem:[%s1 + $0x1540] sm:$0xff]
    %v837 = vld [vmem:[%s1 + $0x1548] sm:$0xff]
    %v838 = vld [vmem:[%s1 + $0x1550] sm:$0xff]
    %v839 = vld [vmem:[%s1 + $0x1558] sm:$0xff]
    %v840 = vld [vmem:[%s1 + $0x1560] sm:$0xff]
    %v841 = vld [vmem:[%s1 + $0x1568] sm:$0xff]
    %v842 = vld [vmem:[%s1 + $0x1570] sm:$0xff]
    %v843 = vld [vmem:[%s1 + $0x1578] sm:$0xff]
    %v844 = vld [vmem:[%s1 + $0x1580] sm:$0xff]
    %v845 = vld [vmem:[%s1 + $0x1588] sm:$0xff]
    %v846 = vld [vmem:[%s1 + $0x1590] sm:$0xff]
    %v847 = vld [vmem:[%s1 + $0x1598] sm:$0xff]
    %v848 = vld [vmem:[%s1 + $0x15a0] sm:$0xff]
    %v849 = vld [vmem:[%s1 + $0x15a8] sm:$0xff]
    %v850 = vld [vmem:[%s1 + $0x15b0] sm:$0xff]
    %v851 = vld [vmem:[%s1 + $0x15b8] sm:$0xff]
    %v852 = vld [vmem:[%s1 + $0x15c0] sm:$0xff]
    %v853 = vld [vmem:[%s1 + $0x15c8] sm:$0xff]
    %v854 = vld [vmem:[%s1 + $0x15d0] sm:$0xff]
    %v855 = vld [vmem:[%s1 + $0x15d8] sm:$0xff]
    %v856 = vld [vmem:[%s1 + $0x15e0] sm:$0xff]
    %v857 = vld [vmem:[%s1 + $0x15e8] sm:$0xff]
    %v858 = vld [vmem:[%s1 + $0x15f0] sm:$0xff]
    %v859 = vld [vmem:[%s1 + $0x15f8] sm:$0xff]
    %v860 = vld [vmem:[%s1 + $0x1600] sm:$0xff]
    %v861 = vld [vmem:[%s1 + $0x1608] sm:$0xff]
    %v862 = vld [vmem:[%s1 + $0x1610] sm:$0xff]
    %v863 = vld [vmem:[%s1 + $0x1618] sm:$0xff]
    %v864 = vld [vmem:[%s1 + $0x1620] sm:$0xff]
    %v865 = vld [vmem:[%s1 + $0x1628] sm:$0xff]
    %v866 = vld [vmem:[%s1 + $0x1630] sm:$0xff]
    %v867 = vld [vmem:[%s1 + $0x1638] sm:$0xff]
    %v868 = vld [vmem:[%s1 + $0x1640] sm:$0xff]
    %v869 = vld [vmem:[%s1 + $0x1648] sm:$0xff]
    %v870 = vld [vmem:[%s1 + $0x1650] sm:$0xff]
    %v871 = vld [vmem:[%s1 + $0x1658] sm:$0xff]
    %v872 = vld [vmem:[%s1 + $0x1660] sm:$0xff]
    %v873 = vld [vmem:[%s1 + $0x1668] sm:$0xff]
    %v874 = vld [vmem:[%s1 + $0x1670] sm:$0xff]
    %v875 = vld [vmem:[%s1 + $0x1678] sm:$0xff]
    %v876 = vld [vmem:[%s1 + $0x1680] sm:$0xff]
    %v877 = vld [vmem:[%s1 + $0x1688] sm:$0xff]
    %v878 = vld [vmem:[%s1 + $0x1690] sm:$0xff]
    %v879 = vld [vmem:[%s1 + $0x1698] sm:$0xff]
    %v880 = vld [vmem:[%s1 + $0x16a0] sm:$0xff]
    %v881 = vld [vmem:[%s1 + $0x16a8] sm:$0xff]
    %v882 = vld [vmem:[%s1 + $0x16b0] sm:$0xff]
    %v883 = vld [vmem:[%s1 + $0x16b8] sm:$0xff]
    %v884 = vld [vmem:[%s1 + $0x16c0] sm:$0xff]
    %v885 = vld [vmem:[%s1 + $0x16c8] sm:$0xff]
    %v886 = vld [vmem:[%s1 + $0x16d0] sm:$0xff]
    %v887 = vld [vmem:[%s1 + $0x16d8] sm:$0xff]
    %v888 = vld [vmem:[%s1 + $0x16e0] sm:$0xff]
    %v889 = vld [vmem:[%s1 + $0x16e8] sm:$0xff]
    %v890 = vld [vmem:[%s1 + $0x16f0] sm:$0xff]
    %v891 = vld [vmem:[%s1 + $0x16f8] sm:$0xff]
    %v892 = vld [vmem:[%s1 + $0x1700] sm:$0xff]
    %v893 = vld [vmem:[%s1 + $0x1708] sm:$0xff]
    %v894 = vld [vmem:[%s1 + $0x1710] sm:$0xff]
    %v895 = vld [vmem:[%s1 + $0x1718] sm:$0xff]
    %v896 = vld [vmem:[%s1 + $0x1720] sm:$0xff]
    %v897 = vld [vmem:[%s1 + $0x1728] sm:$0xff]
    %v898 = vld [vmem:[%s1 + $0x1730] sm:$0xff]
    %v899 = vld [vmem:[%s1 + $0x1738] sm:$0xff]
    %v900 = vld [vmem:[%s2] sm:$0x3]
    %v902 = vlaneseq
    %v903 = vshrl.u32 %v902, 7
    %v904 = vsub.s32 0, %v903
    %v905 = vrot.slane %v900, %v904
    %v906 = vlaneseq
    %v907 = vshrl.u32 %v906, 7
    %v908 = vsub.s32 1, %v907
    %v909 = vrot.slane %v900, %v908
    %v1656 = vunpack.c.l.b16 %v156
    %v1657 = vunpack.c.h.b16 %v156
    %v1658 = vunpack.c.l.b16 %v157
    %v1659 = vunpack.c.h.b16 %v157
    %v1660 = vunpack.c.l.b16 %v158
    %v1661 = vunpack.c.h.b16 %v158
    %v1662 = vunpack.c.l.b16 %v159
    %v1663 = vunpack.c.h.b16 %v159
    %v1664 = vunpack.c.l.b16 %v160
    %v1665 = vunpack.c.h.b16 %v160
    %v1666 = vunpack.c.l.b16 %v161
    %v1667 = vunpack.c.h.b16 %v161
    %v1668 = vunpack.c.l.b16 %v162
    %v1669 = vunpack.c.h.b16 %v162
    %v1670 = vunpack.c.l.b16 %v163
    %v1671 = vunpack.c.h.b16 %v163
    %v1672 = vunpack.c.l.b16 %v164
    %v1673 = vunpack.c.h.b16 %v164
    %v1674 = vunpack.c.l.b16 %v165
    %v1675 = vunpack.c.h.b16 %v165
    %v1676 = vunpack.c.l.b16 %v166
    %v1677 = vunpack.c.h.b16 %v166
    %v1678 = vunpack.c.l.b16 %v167
    %v1679 = vunpack.c.h.b16 %v167
    %v1680 = vunpack.c.l.b16 %v168
    %v1681 = vunpack.c.h.b16 %v168
    %v1682 = vunpack.c.l.b16 %v169
    %v1683 = vunpack.c.h.b16 %v169
    %v1684 = vunpack.c.l.b16 %v170
    %v1685 = vunpack.c.h.b16 %v170
    %v1686 = vunpack.c.l.b16 %v171
    %v1687 = vunpack.c.h.b16 %v171
    %v1688 = vunpack.c.l.b16 %v172
    %v1689 = vunpack.c.h.b16 %v172
    %v1690 = vunpack.c.l.b16 %v173
    %v1691 = vunpack.c.h.b16 %v173
    %v1692 = vunpack.c.l.b16 %v174
    %v1693 = vunpack.c.h.b16 %v174
    %v1694 = vunpack.c.l.b16 %v175
    %v1695 = vunpack.c.h.b16 %v175
    %v1696 = vunpack.c.l.b16 %v176
    %v1697 = vunpack.c.h.b16 %v176
    %v1698 = vunpack.c.l.b16 %v177
    %v1699 = vunpack.c.h.b16 %v177
    %v1700 = vunpack.c.l.b16 %v178
    %v1701 = vunpack.c.h.b16 %v178
    %v1702 = vunpack.c.l.b16 %v179
    %v1703 = vunpack.c.h.b16 %v179
    %v1704 = vunpack.c.l.b16 %v180
    %v1705 = vunpack.c.h.b16 %v180
    %v1706 = vunpack.c.l.b16 %v181
    %v1707 = vunpack.c.h.b16 %v181
    %v1708 = vunpack.c.l.b16 %v182
    %v1709 = vunpack.c.h.b16 %v182
    %v1710 = vunpack.c.l.b16 %v183
    %v1711 = vunpack.c.h.b16 %v183
    %v1712 = vunpack.c.l.b16 %v184
    %v1713 = vunpack.c.h.b16 %v184
    %v1714 = vunpack.c.l.b16 %v185
    %v1715 = vunpack.c.h.b16 %v185
    %v1716 = vunpack.c.l.b16 %v186
    %v1717 = vunpack.c.h.b16 %v186
    %v1718 = vunpack.c.l.b16 %v187
    %v1719 = vunpack.c.h.b16 %v187
    %v1720 = vunpack.c.l.b16 %v188
    %v1721 = vunpack.c.h.b16 %v188
    %v1722 = vunpack.c.l.b16 %v189
    %v1723 = vunpack.c.h.b16 %v189
    %v1724 = vunpack.c.l.b16 %v190
    %v1725 = vunpack.c.h.b16 %v190
    %v1726 = vunpack.c.l.b16 %v191
    %v1727 = vunpack.c.h.b16 %v191
    %v1728 = vunpack.c.l.b16 %v192
    %v1729 = vunpack.c.h.b16 %v192
    %v1730 = vunpack.c.l.b16 %v193
    %v1731 = vunpack.c.h.b16 %v193
    %v1732 = vunpack.c.l.b16 %v194
    %v1733 = vunpack.c.h.b16 %v194
    %v1734 = vunpack.c.l.b16 %v195
    %v1735 = vunpack.c.h.b16 %v195
    %v1736 = vunpack.c.l.b16 %v196
    %v1737 = vunpack.c.h.b16 %v196
    %v1738 = vunpack.c.l.b16 %v197
    %v1739 = vunpack.c.h.b16 %v197
    %v1740 = vunpack.c.l.b16 %v198
    %v1741 = vunpack.c.h.b16 %v198
    %v1742 = vunpack.c.l.b16 %v199
    %v1743 = vunpack.c.h.b16 %v199
    %v1744 = vunpack.c.l.b16 %v200
    %v1745 = vunpack.c.h.b16 %v200
    %v1746 = vunpack.c.l.b16 %v201
    %v1747 = vunpack.c.h.b16 %v201
    %v1748 = vunpack.c.l.b16 %v202
    %v1749 = vunpack.c.h.b16 %v202
    %v1750 = vunpack.c.l.b16 %v203
    %v1751 = vunpack.c.h.b16 %v203
    %v1752 = vunpack.c.l.b16 %v204
    %v1753 = vunpack.c.h.b16 %v204
    %v1754 = vunpack.c.l.b16 %v205
    %v1755 = vunpack.c.h.b16 %v205
    %v1756 = vunpack.c.l.b16 %v206
    %v1757 = vunpack.c.h.b16 %v206
    %v1758 = vunpack.c.l.b16 %v207
    %v1759 = vunpack.c.h.b16 %v207
    %v1760 = vunpack.c.l.b16 %v208
    %v1761 = vunpack.c.h.b16 %v208
    %v1762 = vunpack.c.l.b16 %v209
    %v1763 = vunpack.c.h.b16 %v209
    %v1764 = vunpack.c.l.b16 %v210
    %v1765 = vunpack.c.h.b16 %v210
    %v1766 = vunpack.c.l.b16 %v211
    %v1767 = vunpack.c.h.b16 %v211
    %v1768 = vunpack.c.l.b16 %v212
    %v1769 = vunpack.c.h.b16 %v212
    %v1770 = vunpack.c.l.b16 %v213
    %v1771 = vunpack.c.h.b16 %v213
    %v1772 = vunpack.c.l.b16 %v214
    %v1773 = vunpack.c.h.b16 %v214
    %v1774 = vunpack.c.l.b16 %v215
    %v1775 = vunpack.c.h.b16 %v215
    %v1776 = vunpack.c.l.b16 %v216
    %v1777 = vunpack.c.h.b16 %v216
    %v1778 = vunpack.c.l.b16 %v217
    %v1779 = vunpack.c.h.b16 %v217
    %v1780 = vunpack.c.l.b16 %v218
    %v1781 = vunpack.c.h.b16 %v218
    %v1782 = vunpack.c.l.b16 %v219
    %v1783 = vunpack.c.h.b16 %v219
    %v1784 = vunpack.c.l.b16 %v220
    %v1785 = vunpack.c.h.b16 %v220
    %v1786 = vunpack.c.l.b16 %v221
    %v1787 = vunpack.c.h.b16 %v221
    %v1788 = vunpack.c.l.b16 %v222
    %v1789 = vunpack.c.h.b16 %v222
    %v1790 = vunpack.c.l.b16 %v223
    %v1791 = vunpack.c.h.b16 %v223
    %v1792 = vunpack.c.l.b16 %v224
    %v1793 = vunpack.c.h.b16 %v224
    %v1794 = vunpack.c.l.b16 %v225
    %v1795 = vunpack.c.h.b16 %v225
    %v1796 = vunpack.c.l.b16 %v226
    %v1797 = vunpack.c.h.b16 %v226
    %v1798 = vunpack.c.l.b16 %v227
    %v1799 = vunpack.c.h.b16 %v227
    %v1800 = vunpack.c.l.b16 %v228
    %v1801 = vunpack.c.h.b16 %v228
    %v1802 = vunpack.c.l.b16 %v229
    %v1803 = vunpack.c.h.b16 %v229
    %v1804 = vunpack.c.l.b16 %v230
    %v1805 = vunpack.c.h.b16 %v230
    %v1806 = vunpack.c.l.b16 %v231
    %v1807 = vunpack.c.h.b16 %v231
    %v1808 = vunpack.c.l.b16 %v232
    %v1809 = vunpack.c.h.b16 %v232
    %v1810 = vunpack.c.l.b16 %v233
    %v1811 = vunpack.c.h.b16 %v233
    %v1812 = vunpack.c.l.b16 %v234
    %v1813 = vunpack.c.h.b16 %v234
    %v1814 = vunpack.c.l.b16 %v235
    %v1815 = vunpack.c.h.b16 %v235
    %v1816 = vunpack.c.l.b16 %v236
    %v1817 = vunpack.c.h.b16 %v236
    %v1818 = vunpack.c.l.b16 %v237
    %v1819 = vunpack.c.h.b16 %v237
    %v1820 = vunpack.c.l.b16 %v238
    %v1821 = vunpack.c.h.b16 %v238
    %v1822 = vunpack.c.l.b16 %v239
    %v1823 = vunpack.c.h.b16 %v239
    %v1824 = vunpack.c.l.b16 %v240
    %v1825 = vunpack.c.h.b16 %v240
    %v1826 = vunpack.c.l.b16 %v241
    %v1827 = vunpack.c.h.b16 %v241
    %v1828 = vunpack.c.l.b16 %v242
    %v1829 = vunpack.c.h.b16 %v242
    %v1830 = vunpack.c.l.b16 %v243
    %v1831 = vunpack.c.h.b16 %v243
    %v1832 = vunpack.c.l.b16 %v244
    %v1833 = vunpack.c.h.b16 %v244
    %v1834 = vunpack.c.l.b16 %v245
    %v1835 = vunpack.c.h.b16 %v245
    %v1836 = vunpack.c.l.b16 %v246
    %v1837 = vunpack.c.h.b16 %v246
    %v1838 = vunpack.c.l.b16 %v247
    %v1839 = vunpack.c.h.b16 %v247
    %v1840 = vunpack.c.l.b16 %v248
    %v1841 = vunpack.c.h.b16 %v248
    %v1842 = vunpack.c.l.b16 %v249
    %v1843 = vunpack.c.h.b16 %v249
    %v1844 = vunpack.c.l.b16 %v250
    %v1845 = vunpack.c.h.b16 %v250
    %v1846 = vunpack.c.l.b16 %v251
    %v1847 = vunpack.c.h.b16 %v251
    %v1848 = vunpack.c.l.b16 %v252
    %v1849 = vunpack.c.h.b16 %v252
    %v1850 = vunpack.c.l.b16 %v253
    %v1851 = vunpack.c.h.b16 %v253
    %v1852 = vunpack.c.l.b16 %v254
    %v1853 = vunpack.c.h.b16 %v254
    %v1854 = vunpack.c.l.b16 %v255
    %v1855 = vunpack.c.h.b16 %v255
    %v1856 = vunpack.c.l.b16 %v256
    %v1857 = vunpack.c.h.b16 %v256
    %v1858 = vunpack.c.l.b16 %v257
    %v1859 = vunpack.c.h.b16 %v257
    %v1860 = vunpack.c.l.b16 %v258
    %v1861 = vunpack.c.h.b16 %v258
    %v1862 = vunpack.c.l.b16 %v259
    %v1863 = vunpack.c.h.b16 %v259
    %v1864 = vunpack.c.l.b16 %v260
    %v1865 = vunpack.c.h.b16 %v260
    %v1866 = vunpack.c.l.b16 %v261
    %v1867 = vunpack.c.h.b16 %v261
    %v1868 = vunpack.c.l.b16 %v262
    %v1869 = vunpack.c.h.b16 %v262
    %v1870 = vunpack.c.l.b16 %v263
    %v1871 = vunpack.c.h.b16 %v263
    %v1872 = vunpack.c.l.b16 %v264
    %v1873 = vunpack.c.h.b16 %v264
    %v1874 = vunpack.c.l.b16 %v265
    %v1875 = vunpack.c.h.b16 %v265
    %v1876 = vunpack.c.l.b16 %v266
    %v1877 = vunpack.c.h.b16 %v266
    %v1878 = vunpack.c.l.b16 %v267
    %v1879 = vunpack.c.h.b16 %v267
    %v1880 = vunpack.c.l.b16 %v268
    %v1881 = vunpack.c.h.b16 %v268
    %v1882 = vunpack.c.l.b16 %v269
    %v1883 = vunpack.c.h.b16 %v269
    %v1884 = vunpack.c.l.b16 %v270
    %v1885 = vunpack.c.h.b16 %v270
    %v1886 = vunpack.c.l.b16 %v271
    %v1887 = vunpack.c.h.b16 %v271
    %v1888 = vunpack.c.l.b16 %v272
    %v1889 = vunpack.c.h.b16 %v272
    %v1890 = vunpack.c.l.b16 %v273
    %v1891 = vunpack.c.h.b16 %v273
    %v1892 = vunpack.c.l.b16 %v274
    %v1893 = vunpack.c.h.b16 %v274
    %v1894 = vunpack.c.l.b16 %v275
    %v1895 = vunpack.c.h.b16 %v275
    %v1896 = vunpack.c.l.b16 %v276
    %v1897 = vunpack.c.h.b16 %v276
    %v1898 = vunpack.c.l.b16 %v277
    %v1899 = vunpack.c.h.b16 %v277
    %v1900 = vunpack.c.l.b16 %v278
    %v1901 = vunpack.c.h.b16 %v278
    %v1902 = vunpack.c.l.b16 %v279
    %v1903 = vunpack.c.h.b16 %v279
    %v1904 = vunpack.c.l.b16 %v280
    %v1905 = vunpack.c.h.b16 %v280
    %v1906 = vunpack.c.l.b16 %v281
    %v1907 = vunpack.c.h.b16 %v281
    %v1908 = vunpack.c.l.b16 %v282
    %v1909 = vunpack.c.h.b16 %v282
    %v1910 = vunpack.c.l.b16 %v283
    %v1911 = vunpack.c.h.b16 %v283
    %v1912 = vunpack.c.l.b16 %v284
    %v1913 = vunpack.c.h.b16 %v284
    %v1914 = vunpack.c.l.b16 %v285
    %v1915 = vunpack.c.h.b16 %v285
    %v1916 = vunpack.c.l.b16 %v286
    %v1917 = vunpack.c.h.b16 %v286
    %v1918 = vunpack.c.l.b16 %v287
    %v1919 = vunpack.c.h.b16 %v287
    %v1920 = vunpack.c.l.b16 %v288
    %v1921 = vunpack.c.h.b16 %v288
    %v1922 = vunpack.c.l.b16 %v289
    %v1923 = vunpack.c.h.b16 %v289
    %v1924 = vunpack.c.l.b16 %v290
    %v1925 = vunpack.c.h.b16 %v290
    %v1926 = vunpack.c.l.b16 %v291
    %v1927 = vunpack.c.h.b16 %v291
    %v1928 = vunpack.c.l.b16 %v292
    %v1929 = vunpack.c.h.b16 %v292
    %v1930 = vunpack.c.l.b16 %v293
    %v1931 = vunpack.c.h.b16 %v293
    %v1932 = vunpack.c.l.b16 %v294
    %v1933 = vunpack.c.h.b16 %v294
    %v1934 = vunpack.c.l.b16 %v295
    %v1935 = vunpack.c.h.b16 %v295
    %v1936 = vunpack.c.l.b16 %v296
    %v1937 = vunpack.c.h.b16 %v296
    %v1938 = vunpack.c.l.b16 %v297
    %v1939 = vunpack.c.h.b16 %v297
    %v1940 = vunpack.c.l.b16 %v298
    %v1941 = vunpack.c.h.b16 %v298
    %v1942 = vunpack.c.l.b16 %v299
    %v1943 = vunpack.c.h.b16 %v299
    %v1944 = vunpack.c.l.b16 %v300
    %v1945 = vunpack.c.h.b16 %v300
    %v1946 = vunpack.c.l.b16 %v301
    %v1947 = vunpack.c.h.b16 %v301
    %v1948 = vunpack.c.l.b16 %v302
    %v1949 = vunpack.c.h.b16 %v302
    %v1950 = vunpack.c.l.b16 %v303
    %v1951 = vunpack.c.h.b16 %v303
    %v1952 = vunpack.c.l.b16 %v304
    %v1953 = vunpack.c.h.b16 %v304
    %v1954 = vunpack.c.l.b16 %v305
    %v1955 = vunpack.c.h.b16 %v305
    %v1956 = vunpack.c.l.b16 %v306
    %v1957 = vunpack.c.h.b16 %v306
    %v1958 = vunpack.c.l.b16 %v307
    %v1959 = vunpack.c.h.b16 %v307
    %v1960 = vunpack.c.l.b16 %v308
    %v1961 = vunpack.c.h.b16 %v308
    %v1962 = vunpack.c.l.b16 %v309
    %v1963 = vunpack.c.h.b16 %v309
    %v1964 = vunpack.c.l.b16 %v310
    %v1965 = vunpack.c.h.b16 %v310
    %v1966 = vunpack.c.l.b16 %v311
    %v1967 = vunpack.c.h.b16 %v311
    %v1968 = vunpack.c.l.b16 %v312
    %v1969 = vunpack.c.h.b16 %v312
    %v1970 = vunpack.c.l.b16 %v313
    %v1971 = vunpack.c.h.b16 %v313
    %v1972 = vunpack.c.l.b16 %v314
    %v1973 = vunpack.c.h.b16 %v314
    %v1974 = vunpack.c.l.b16 %v315
    %v1975 = vunpack.c.h.b16 %v315
    %v1976 = vunpack.c.l.b16 %v316
    %v1977 = vunpack.c.h.b16 %v316
    %v1978 = vunpack.c.l.b16 %v317
    %v1979 = vunpack.c.h.b16 %v317
    %v1980 = vunpack.c.l.b16 %v318
    %v1981 = vunpack.c.h.b16 %v318
    %v1982 = vunpack.c.l.b16 %v319
    %v1983 = vunpack.c.h.b16 %v319
    %v1984 = vunpack.c.l.b16 %v320
    %v1985 = vunpack.c.h.b16 %v320
    %v1986 = vunpack.c.l.b16 %v321
    %v1987 = vunpack.c.h.b16 %v321
    %v1988 = vunpack.c.l.b16 %v322
    %v1989 = vunpack.c.h.b16 %v322
    %v1990 = vunpack.c.l.b16 %v323
    %v1991 = vunpack.c.h.b16 %v323
    %v1992 = vunpack.c.l.b16 %v324
    %v1993 = vunpack.c.h.b16 %v324
    %v1994 = vunpack.c.l.b16 %v325
    %v1995 = vunpack.c.h.b16 %v325
    %v1996 = vunpack.c.l.b16 %v326
    %v1997 = vunpack.c.h.b16 %v326
    %v1998 = vunpack.c.l.b16 %v327
    %v1999 = vunpack.c.h.b16 %v327
    %v2000 = vunpack.c.l.b16 %v328
    %v2001 = vunpack.c.h.b16 %v328
    %v2002 = vunpack.c.l.b16 %v329
    %v2003 = vunpack.c.h.b16 %v329
    %v2004 = vunpack.c.l.b16 %v330
    %v2005 = vunpack.c.h.b16 %v330
    %v2006 = vunpack.c.l.b16 %v331
    %v2007 = vunpack.c.h.b16 %v331
    %v2008 = vunpack.c.l.b16 %v332
    %v2009 = vunpack.c.h.b16 %v332
    %v2010 = vunpack.c.l.b16 %v333
    %v2011 = vunpack.c.h.b16 %v333
    %v2012 = vunpack.c.l.b16 %v334
    %v2013 = vunpack.c.h.b16 %v334
    %v2014 = vunpack.c.l.b16 %v335
    %v2015 = vunpack.c.h.b16 %v335
    %v2016 = vunpack.c.l.b16 %v336
    %v2017 = vunpack.c.h.b16 %v336
    %v2018 = vunpack.c.l.b16 %v337
    %v2019 = vunpack.c.h.b16 %v337
    %v2020 = vunpack.c.l.b16 %v338
    %v2021 = vunpack.c.h.b16 %v338
    %v2022 = vunpack.c.l.b16 %v339
    %v2023 = vunpack.c.h.b16 %v339
    %v2024 = vunpack.c.l.b16 %v340
    %v2025 = vunpack.c.h.b16 %v340
    %v2026 = vunpack.c.l.b16 %v341
    %v2027 = vunpack.c.h.b16 %v341
    %v2028 = vunpack.c.l.b16 %v342
    %v2029 = vunpack.c.h.b16 %v342
    %v2030 = vunpack.c.l.b16 %v343
    %v2031 = vunpack.c.h.b16 %v343
    %v2032 = vunpack.c.l.b16 %v344
    %v2033 = vunpack.c.h.b16 %v344
    %v2034 = vunpack.c.l.b16 %v345
    %v2035 = vunpack.c.h.b16 %v345
    %v2036 = vunpack.c.l.b16 %v346
    %v2037 = vunpack.c.h.b16 %v346
    %v2038 = vunpack.c.l.b16 %v347
    %v2039 = vunpack.c.h.b16 %v347
    %v2040 = vunpack.c.l.b16 %v348
    %v2041 = vunpack.c.h.b16 %v348
    %v2042 = vunpack.c.l.b16 %v349
    %v2043 = vunpack.c.h.b16 %v349
    %v2044 = vunpack.c.l.b16 %v350
    %v2045 = vunpack.c.h.b16 %v350
    %v2046 = vunpack.c.l.b16 %v351
    %v2047 = vunpack.c.h.b16 %v351
    %v2048 = vunpack.c.l.b16 %v352
    %v2049 = vunpack.c.h.b16 %v352
    %v2050 = vunpack.c.l.b16 %v353
    %v2051 = vunpack.c.h.b16 %v353
    %v2052 = vunpack.c.l.b16 %v354
    %v2053 = vunpack.c.h.b16 %v354
    %v2054 = vunpack.c.l.b16 %v355
    %v2055 = vunpack.c.h.b16 %v355
    %v2056 = vunpack.c.l.b16 %v356
    %v2057 = vunpack.c.h.b16 %v356
    %v2058 = vunpack.c.l.b16 %v357
    %v2059 = vunpack.c.h.b16 %v357
    %v2060 = vunpack.c.l.b16 %v358
    %v2061 = vunpack.c.h.b16 %v358
    %v2062 = vunpack.c.l.b16 %v359
    %v2063 = vunpack.c.h.b16 %v359
    %v2064 = vunpack.c.l.b16 %v360
    %v2065 = vunpack.c.h.b16 %v360
    %v2066 = vunpack.c.l.b16 %v361
    %v2067 = vunpack.c.h.b16 %v361
    %v2068 = vunpack.c.l.b16 %v362
    %v2069 = vunpack.c.h.b16 %v362
    %v2070 = vunpack.c.l.b16 %v363
    %v2071 = vunpack.c.h.b16 %v363
    %v2072 = vunpack.c.l.b16 %v364
    %v2073 = vunpack.c.h.b16 %v364
    %v2074 = vunpack.c.l.b16 %v365
    %v2075 = vunpack.c.h.b16 %v365
    %v2076 = vunpack.c.l.b16 %v366
    %v2077 = vunpack.c.h.b16 %v366
    %v2078 = vunpack.c.l.b16 %v367
    %v2079 = vunpack.c.h.b16 %v367
    %v2080 = vunpack.c.l.b16 %v368
    %v2081 = vunpack.c.h.b16 %v368
    %v2082 = vunpack.c.l.b16 %v369
    %v2083 = vunpack.c.h.b16 %v369
    %v2084 = vunpack.c.l.b16 %v370
    %v2085 = vunpack.c.h.b16 %v370
    %v2086 = vunpack.c.l.b16 %v371
    %v2087 = vunpack.c.h.b16 %v371
    %v2088 = vunpack.c.l.b16 %v372
    %v2089 = vunpack.c.h.b16 %v372
    %v2090 = vunpack.c.l.b16 %v373
    %v2091 = vunpack.c.h.b16 %v373
    %v2092 = vunpack.c.l.b16 %v374
    %v2093 = vunpack.c.h.b16 %v374
    %v2094 = vunpack.c.l.b16 %v375
    %v2095 = vunpack.c.h.b16 %v375
    %v2096 = vunpack.c.l.b16 %v376
    %v2097 = vunpack.c.h.b16 %v376
    %v2098 = vunpack.c.l.b16 %v377
    %v2099 = vunpack.c.h.b16 %v377
    %v2100 = vunpack.c.l.b16 %v378
    %v2101 = vunpack.c.h.b16 %v378
    %v2102 = vunpack.c.l.b16 %v379
    %v2103 = vunpack.c.h.b16 %v379
    %v2104 = vunpack.c.l.b16 %v380
    %v2105 = vunpack.c.h.b16 %v380
    %v2106 = vunpack.c.l.b16 %v381
    %v2107 = vunpack.c.h.b16 %v381
    %v2108 = vunpack.c.l.b16 %v382
    %v2109 = vunpack.c.h.b16 %v382
    %v2110 = vunpack.c.l.b16 %v383
    %v2111 = vunpack.c.h.b16 %v383
    %v2112 = vunpack.c.l.b16 %v384
    %v2113 = vunpack.c.h.b16 %v384
    %v2114 = vunpack.c.l.b16 %v385
    %v2115 = vunpack.c.h.b16 %v385
    %v2116 = vunpack.c.l.b16 %v386
    %v2117 = vunpack.c.h.b16 %v386
    %v2118 = vunpack.c.l.b16 %v387
    %v2119 = vunpack.c.h.b16 %v387
    %v2120 = vunpack.c.l.b16 %v388
    %v2121 = vunpack.c.h.b16 %v388
    %v2122 = vunpack.c.l.b16 %v389
    %v2123 = vunpack.c.h.b16 %v389
    %v2124 = vunpack.c.l.b16 %v390
    %v2125 = vunpack.c.h.b16 %v390
    %v2126 = vunpack.c.l.b16 %v391
    %v2127 = vunpack.c.h.b16 %v391
    %v2128 = vunpack.c.l.b16 %v392
    %v2129 = vunpack.c.h.b16 %v392
    %v2130 = vunpack.c.l.b16 %v393
    %v2131 = vunpack.c.h.b16 %v393
    %v2132 = vunpack.c.l.b16 %v394
    %v2133 = vunpack.c.h.b16 %v394
    %v2134 = vunpack.c.l.b16 %v395
    %v2135 = vunpack.c.h.b16 %v395
    %v2136 = vunpack.c.l.b16 %v396
    %v2137 = vunpack.c.h.b16 %v396
    %v2138 = vunpack.c.l.b16 %v397
    %v2139 = vunpack.c.h.b16 %v397
    %v2140 = vunpack.c.l.b16 %v398
    %v2141 = vunpack.c.h.b16 %v398
    %v2142 = vunpack.c.l.b16 %v399
    %v2143 = vunpack.c.h.b16 %v399
    %v2144 = vunpack.c.l.b16 %v400
    %v2145 = vunpack.c.h.b16 %v400
    %v2146 = vunpack.c.l.b16 %v401
    %v2147 = vunpack.c.h.b16 %v401
    %v2148 = vunpack.c.l.b16 %v402
    %v2149 = vunpack.c.h.b16 %v402
    %v2150 = vunpack.c.l.b16 %v403
    %v2151 = vunpack.c.h.b16 %v403
    %v2152 = vunpack.c.l.b16 %v404
    %v2153 = vunpack.c.h.b16 %v404
    %v2154 = vunpack.c.l.b16 %v405
    %v2155 = vunpack.c.h.b16 %v405
    %v2156 = vunpack.c.l.b16 %v406
    %v2157 = vunpack.c.h.b16 %v406
    %v2158 = vunpack.c.l.b16 %v407
    %v2159 = vunpack.c.h.b16 %v407
    %v2160 = vunpack.c.l.b16 %v408
    %v2161 = vunpack.c.h.b16 %v408
    %v2162 = vunpack.c.l.b16 %v409
    %v2163 = vunpack.c.h.b16 %v409
    %v2164 = vunpack.c.l.b16 %v410
    %v2165 = vunpack.c.h.b16 %v410
    %v2166 = vunpack.c.l.b16 %v411
    %v2167 = vunpack.c.h.b16 %v411
    %v2168 = vunpack.c.l.b16 %v412
    %v2169 = vunpack.c.h.b16 %v412
    %v2170 = vunpack.c.l.b16 %v413
    %v2171 = vunpack.c.h.b16 %v413
    %v2172 = vunpack.c.l.b16 %v414
    %v2173 = vunpack.c.h.b16 %v414
    %v2174 = vunpack.c.l.b16 %v415
    %v2175 = vunpack.c.h.b16 %v415
    %v2176 = vunpack.c.l.b16 %v416
    %v2177 = vunpack.c.h.b16 %v416
    %v2178 = vunpack.c.l.b16 %v417
    %v2179 = vunpack.c.h.b16 %v417
    %v2180 = vunpack.c.l.b16 %v418
    %v2181 = vunpack.c.h.b16 %v418
    %v2182 = vunpack.c.l.b16 %v419
    %v2183 = vunpack.c.h.b16 %v419
    %v2184 = vunpack.c.l.b16 %v420
    %v2185 = vunpack.c.h.b16 %v420
    %v2186 = vunpack.c.l.b16 %v421
    %v2187 = vunpack.c.h.b16 %v421
    %v2188 = vunpack.c.l.b16 %v422
    %v2189 = vunpack.c.h.b16 %v422
    %v2190 = vunpack.c.l.b16 %v423
    %v2191 = vunpack.c.h.b16 %v423
    %v2192 = vunpack.c.l.b16 %v424
    %v2193 = vunpack.c.h.b16 %v424
    %v2194 = vunpack.c.l.b16 %v425
    %v2195 = vunpack.c.h.b16 %v425
    %v2196 = vunpack.c.l.b16 %v426
    %v2197 = vunpack.c.h.b16 %v426
    %v2198 = vunpack.c.l.b16 %v427
    %v2199 = vunpack.c.h.b16 %v427
    %v2200 = vunpack.c.l.b16 %v428
    %v2201 = vunpack.c.h.b16 %v428
    %v2202 = vunpack.c.l.b16 %v429
    %v2203 = vunpack.c.h.b16 %v429
    %v2204 = vunpack.c.l.b16 %v430
    %v2205 = vunpack.c.h.b16 %v430
    %v2206 = vunpack.c.l.b16 %v431
    %v2207 = vunpack.c.h.b16 %v431
    %v2208 = vunpack.c.l.b16 %v432
    %v2209 = vunpack.c.h.b16 %v432
    %v2210 = vunpack.c.l.b16 %v433
    %v2211 = vunpack.c.h.b16 %v433
    %v2212 = vunpack.c.l.b16 %v434
    %v2213 = vunpack.c.h.b16 %v434
    %v2214 = vunpack.c.l.b16 %v435
    %v2215 = vunpack.c.h.b16 %v435
    %v2216 = vunpack.c.l.b16 %v436
    %v2217 = vunpack.c.h.b16 %v436
    %v2218 = vunpack.c.l.b16 %v437
    %v2219 = vunpack.c.h.b16 %v437
    %v2220 = vunpack.c.l.b16 %v438
    %v2221 = vunpack.c.h.b16 %v438
    %v2222 = vunpack.c.l.b16 %v439
    %v2223 = vunpack.c.h.b16 %v439
    %v2224 = vunpack.c.l.b16 %v440
    %v2225 = vunpack.c.h.b16 %v440
    %v2226 = vunpack.c.l.b16 %v441
    %v2227 = vunpack.c.h.b16 %v441
    %v2228 = vunpack.c.l.b16 %v442
    %v2229 = vunpack.c.h.b16 %v442
    %v2230 = vunpack.c.l.b16 %v443
    %v2231 = vunpack.c.h.b16 %v443
    %v2232 = vunpack.c.l.b16 %v444
    %v2233 = vunpack.c.h.b16 %v444
    %v2234 = vunpack.c.l.b16 %v445
    %v2235 = vunpack.c.h.b16 %v445
    %v2236 = vunpack.c.l.b16 %v446
    %v2237 = vunpack.c.h.b16 %v446
    %v2238 = vunpack.c.l.b16 %v447
    %v2239 = vunpack.c.h.b16 %v447
    %v2240 = vunpack.c.l.b16 %v448
    %v2241 = vunpack.c.h.b16 %v448
    %v2242 = vunpack.c.l.b16 %v449
    %v2243 = vunpack.c.h.b16 %v449
    %v2244 = vunpack.c.l.b16 %v450
    %v2245 = vunpack.c.h.b16 %v450
    %v2246 = vunpack.c.l.b16 %v451
    %v2247 = vunpack.c.h.b16 %v451
    %v2248 = vunpack.c.l.b16 %v452
    %v2249 = vunpack.c.h.b16 %v452
    %v2250 = vunpack.c.l.b16 %v453
    %v2251 = vunpack.c.h.b16 %v453
    %v2252 = vunpack.c.l.b16 %v454
    %v2253 = vunpack.c.h.b16 %v454
    %v2254 = vunpack.c.l.b16 %v455
    %v2255 = vunpack.c.h.b16 %v455
    %v2256 = vunpack.c.l.b16 %v456
    %v2257 = vunpack.c.h.b16 %v456
    %v2258 = vunpack.c.l.b16 %v457
    %v2259 = vunpack.c.h.b16 %v457
    %v2260 = vunpack.c.l.b16 %v458
    %v2261 = vunpack.c.h.b16 %v458
    %v2262 = vunpack.c.l.b16 %v459
    %v2263 = vunpack.c.h.b16 %v459
    %v2264 = vunpack.c.l.b16 %v460
    %v2265 = vunpack.c.h.b16 %v460
    %v2266 = vunpack.c.l.b16 %v461
    %v2267 = vunpack.c.h.b16 %v461
    %v2268 = vunpack.c.l.b16 %v462
    %v2269 = vunpack.c.h.b16 %v462
    %v2270 = vunpack.c.l.b16 %v463
    %v2271 = vunpack.c.h.b16 %v463
    %v2272 = vunpack.c.l.b16 %v464
    %v2273 = vunpack.c.h.b16 %v464
    %v2274 = vunpack.c.l.b16 %v465
    %v2275 = vunpack.c.h.b16 %v465
    %v2276 = vunpack.c.l.b16 %v466
    %v2277 = vunpack.c.h.b16 %v466
    %v2278 = vunpack.c.l.b16 %v467
    %v2279 = vunpack.c.h.b16 %v467
    %v2280 = vunpack.c.l.b16 %v468
    %v2281 = vunpack.c.h.b16 %v468
    %v2282 = vunpack.c.l.b16 %v469
    %v2283 = vunpack.c.h.b16 %v469
    %v2284 = vunpack.c.l.b16 %v470
    %v2285 = vunpack.c.h.b16 %v470
    %v2286 = vunpack.c.l.b16 %v471
    %v2287 = vunpack.c.h.b16 %v471
    %v2288 = vunpack.c.l.b16 %v472
    %v2289 = vunpack.c.h.b16 %v472
    %v2290 = vunpack.c.l.b16 %v473
    %v2291 = vunpack.c.h.b16 %v473
    %v2292 = vunpack.c.l.b16 %v474
    %v2293 = vunpack.c.h.b16 %v474
    %v2294 = vunpack.c.l.b16 %v475
    %v2295 = vunpack.c.h.b16 %v475
    %v2296 = vunpack.c.l.b16 %v476
    %v2297 = vunpack.c.h.b16 %v476
    %v2298 = vunpack.c.l.b16 %v477
    %v2299 = vunpack.c.h.b16 %v477
    %v2300 = vunpack.c.l.b16 %v478
    %v2301 = vunpack.c.h.b16 %v478
    %v2302 = vunpack.c.l.b16 %v479
    %v2303 = vunpack.c.h.b16 %v479
    %v2304 = vunpack.c.l.b16 %v480
    %v2305 = vunpack.c.h.b16 %v480
    %v2306 = vunpack.c.l.b16 %v481
    %v2307 = vunpack.c.h.b16 %v481
    %v2308 = vunpack.c.l.b16 %v482
    %v2309 = vunpack.c.h.b16 %v482
    %v2310 = vunpack.c.l.b16 %v483
    %v2311 = vunpack.c.h.b16 %v483
    %v2312 = vunpack.c.l.b16 %v484
    %v2313 = vunpack.c.h.b16 %v484
    %v2314 = vunpack.c.l.b16 %v485
    %v2315 = vunpack.c.h.b16 %v485
    %v2316 = vunpack.c.l.b16 %v486
    %v2317 = vunpack.c.h.b16 %v486
    %v2318 = vunpack.c.l.b16 %v487
    %v2319 = vunpack.c.h.b16 %v487
    %v2320 = vunpack.c.l.b16 %v488
    %v2321 = vunpack.c.h.b16 %v488
    %v2322 = vunpack.c.l.b16 %v489
    %v2323 = vunpack.c.h.b16 %v489
    %v2324 = vunpack.c.l.b16 %v490
    %v2325 = vunpack.c.h.b16 %v490
    %v2326 = vunpack.c.l.b16 %v491
    %v2327 = vunpack.c.h.b16 %v491
    %v2328 = vunpack.c.l.b16 %v492
    %v2329 = vunpack.c.h.b16 %v492
    %v2330 = vunpack.c.l.b16 %v493
    %v2331 = vunpack.c.h.b16 %v493
    %v2332 = vunpack.c.l.b16 %v494
    %v2333 = vunpack.c.h.b16 %v494
    %v2334 = vunpack.c.l.b16 %v495
    %v2335 = vunpack.c.h.b16 %v495
    %v2336 = vunpack.c.l.b16 %v496
    %v2337 = vunpack.c.h.b16 %v496
    %v2338 = vunpack.c.l.b16 %v497
    %v2339 = vunpack.c.h.b16 %v497
    %v2340 = vunpack.c.l.b16 %v498
    %v2341 = vunpack.c.h.b16 %v498
    %v2342 = vunpack.c.l.b16 %v499
    %v2343 = vunpack.c.h.b16 %v499
    %v2344 = vunpack.c.l.b16 %v500
    %v2345 = vunpack.c.h.b16 %v500
    %v2346 = vunpack.c.l.b16 %v501
    %v2347 = vunpack.c.h.b16 %v501
    %v2348 = vunpack.c.l.b16 %v502
    %v2349 = vunpack.c.h.b16 %v502
    %v2350 = vunpack.c.l.b16 %v503
    %v2351 = vunpack.c.h.b16 %v503
    %v2352 = vunpack.c.l.b16 %v504
    %v2353 = vunpack.c.h.b16 %v504
    %v2354 = vunpack.c.l.b16 %v505
    %v2355 = vunpack.c.h.b16 %v505
    %v2356 = vunpack.c.l.b16 %v506
    %v2357 = vunpack.c.h.b16 %v506
    %v2358 = vunpack.c.l.b16 %v507
    %v2359 = vunpack.c.h.b16 %v507
    %v2360 = vunpack.c.l.b16 %v508
    %v2361 = vunpack.c.h.b16 %v508
    %v2362 = vunpack.c.l.b16 %v509
    %v2363 = vunpack.c.h.b16 %v509
    %v2364 = vunpack.c.l.b16 %v510
    %v2365 = vunpack.c.h.b16 %v510
    %v2366 = vunpack.c.l.b16 %v511
    %v2367 = vunpack.c.h.b16 %v511
    %v2368 = vunpack.c.l.b16 %v512
    %v2369 = vunpack.c.h.b16 %v512
    %v2370 = vunpack.c.l.b16 %v513
    %v2371 = vunpack.c.h.b16 %v513
    %v2372 = vunpack.c.l.b16 %v514
    %v2373 = vunpack.c.h.b16 %v514
    %v2374 = vunpack.c.l.b16 %v515
    %v2375 = vunpack.c.h.b16 %v515
    %v2376 = vunpack.c.l.b16 %v516
    %v2377 = vunpack.c.h.b16 %v516
    %v2378 = vunpack.c.l.b16 %v517
    %v2379 = vunpack.c.h.b16 %v517
    %v2380 = vunpack.c.l.b16 %v518
    %v2381 = vunpack.c.h.b16 %v518
    %v2382 = vunpack.c.l.b16 %v519
    %v2383 = vunpack.c.h.b16 %v519
    %v2384 = vunpack.c.l.b16 %v520
    %v2385 = vunpack.c.h.b16 %v520
    %v2386 = vunpack.c.l.b16 %v521
    %v2387 = vunpack.c.h.b16 %v521
    %v2388 = vunpack.c.l.b16 %v522
    %v2389 = vunpack.c.h.b16 %v522
    %v2390 = vunpack.c.l.b16 %v523
    %v2391 = vunpack.c.h.b16 %v523
    %v2392 = vunpack.c.l.b16 %v524
    %v2393 = vunpack.c.h.b16 %v524
    %v2394 = vunpack.c.l.b16 %v525
    %v2395 = vunpack.c.h.b16 %v525
    %v2396 = vunpack.c.l.b16 %v526
    %v2397 = vunpack.c.h.b16 %v526
    %v2398 = vunpack.c.l.b16 %v527
    %v2399 = vunpack.c.h.b16 %v527
    %v2400 = vunpack.c.l.b16 %v528
    %v2401 = vunpack.c.h.b16 %v528
    %v2402 = vunpack.c.l.b16 %v529
    %v2403 = vunpack.c.h.b16 %v529
    %v2404 = vunpack.c.l.b16 %v530
    %v2405 = vunpack.c.h.b16 %v530
    %v2406 = vunpack.c.l.b16 %v531
    %v2407 = vunpack.c.h.b16 %v531
    %v2408 = vunpack.c.l.b16 %v532
    %v2409 = vunpack.c.h.b16 %v532
    %v2410 = vunpack.c.l.b16 %v533
    %v2411 = vunpack.c.h.b16 %v533
    %v2412 = vunpack.c.l.b16 %v534
    %v2413 = vunpack.c.h.b16 %v534
    %v2414 = vunpack.c.l.b16 %v535
    %v2415 = vunpack.c.h.b16 %v535
    %v2416 = vunpack.c.l.b16 %v536
    %v2417 = vunpack.c.h.b16 %v536
    %v2418 = vunpack.c.l.b16 %v537
    %v2419 = vunpack.c.h.b16 %v537
    %v2420 = vunpack.c.l.b16 %v538
    %v2421 = vunpack.c.h.b16 %v538
    %v2422 = vunpack.c.l.b16 %v539
    %v2423 = vunpack.c.h.b16 %v539
    %v2424 = vunpack.c.l.b16 %v540
    %v2425 = vunpack.c.h.b16 %v540
    %v2426 = vunpack.c.l.b16 %v541
    %v2427 = vunpack.c.h.b16 %v541
    %v2428 = vunpack.c.l.b16 %v542
    %v2429 = vunpack.c.h.b16 %v542
    %v2430 = vunpack.c.l.b16 %v543
    %v2431 = vunpack.c.h.b16 %v543
    %v2432 = vunpack.c.l.b16 %v544
    %v2433 = vunpack.c.h.b16 %v544
    %v2434 = vunpack.c.l.b16 %v545
    %v2435 = vunpack.c.h.b16 %v545
    %v2436 = vunpack.c.l.b16 %v546
    %v2437 = vunpack.c.h.b16 %v546
    %v2438 = vunpack.c.l.b16 %v547
    %v2439 = vunpack.c.h.b16 %v547
    %v2440 = vunpack.c.l.b16 %v548
    %v2441 = vunpack.c.h.b16 %v548
    %v2442 = vunpack.c.l.b16 %v549
    %v2443 = vunpack.c.h.b16 %v549
    %v2444 = vunpack.c.l.b16 %v550
    %v2445 = vunpack.c.h.b16 %v550
    %v2446 = vunpack.c.l.b16 %v551
    %v2447 = vunpack.c.h.b16 %v551
    %v2448 = vunpack.c.l.b16 %v552
    %v2449 = vunpack.c.h.b16 %v552
    %v2450 = vunpack.c.l.b16 %v553
    %v2451 = vunpack.c.h.b16 %v553
    %v2452 = vunpack.c.l.b16 %v554
    %v2453 = vunpack.c.h.b16 %v554
    %v2454 = vunpack.c.l.b16 %v555
    %v2455 = vunpack.c.h.b16 %v555
    %v2456 = vunpack.c.l.b16 %v556
    %v2457 = vunpack.c.h.b16 %v556
    %v2458 = vunpack.c.l.b16 %v557
    %v2459 = vunpack.c.h.b16 %v557
    %v2460 = vunpack.c.l.b16 %v558
    %v2461 = vunpack.c.h.b16 %v558
    %v2462 = vunpack.c.l.b16 %v559
    %v2463 = vunpack.c.h.b16 %v559
    %v2464 = vunpack.c.l.b16 %v560
    %v2465 = vunpack.c.h.b16 %v560
    %v2466 = vunpack.c.l.b16 %v561
    %v2467 = vunpack.c.h.b16 %v561
    %v2468 = vunpack.c.l.b16 %v562
    %v2469 = vunpack.c.h.b16 %v562
    %v2470 = vunpack.c.l.b16 %v563
    %v2471 = vunpack.c.h.b16 %v563
    %v2472 = vunpack.c.l.b16 %v564
    %v2473 = vunpack.c.h.b16 %v564
    %v2474 = vunpack.c.l.b16 %v565
    %v2475 = vunpack.c.h.b16 %v565
    %v2476 = vunpack.c.l.b16 %v566
    %v2477 = vunpack.c.h.b16 %v566
    %v2478 = vunpack.c.l.b16 %v567
    %v2479 = vunpack.c.h.b16 %v567
    %v2480 = vunpack.c.l.b16 %v568
    %v2481 = vunpack.c.h.b16 %v568
    %v2482 = vunpack.c.l.b16 %v569
    %v2483 = vunpack.c.h.b16 %v569
    %v2484 = vunpack.c.l.b16 %v570
    %v2485 = vunpack.c.h.b16 %v570
    %v2486 = vunpack.c.l.b16 %v571
    %v2487 = vunpack.c.h.b16 %v571
    %v2488 = vunpack.c.l.b16 %v572
    %v2489 = vunpack.c.h.b16 %v572
    %v2490 = vunpack.c.l.b16 %v573
    %v2491 = vunpack.c.h.b16 %v573
    %v2492 = vunpack.c.l.b16 %v574
    %v2493 = vunpack.c.h.b16 %v574
    %v2494 = vunpack.c.l.b16 %v575
    %v2495 = vunpack.c.h.b16 %v575
    %v2496 = vunpack.c.l.b16 %v576
    %v2497 = vunpack.c.h.b16 %v576
    %v2498 = vunpack.c.l.b16 %v577
    %v2499 = vunpack.c.h.b16 %v577
    %v2500 = vunpack.c.l.b16 %v578
    %v2501 = vunpack.c.h.b16 %v578
    %v2502 = vunpack.c.l.b16 %v579
    %v2503 = vunpack.c.h.b16 %v579
    %v2504 = vunpack.c.l.b16 %v580
    %v2505 = vunpack.c.h.b16 %v580
    %v2506 = vunpack.c.l.b16 %v581
    %v2507 = vunpack.c.h.b16 %v581
    %v2508 = vunpack.c.l.b16 %v582
    %v2509 = vunpack.c.h.b16 %v582
    %v2510 = vunpack.c.l.b16 %v583
    %v2511 = vunpack.c.h.b16 %v583
    %v2512 = vunpack.c.l.b16 %v584
    %v2513 = vunpack.c.h.b16 %v584
    %v2514 = vunpack.c.l.b16 %v585
    %v2515 = vunpack.c.h.b16 %v585
    %v2516 = vunpack.c.l.b16 %v586
    %v2517 = vunpack.c.h.b16 %v586
    %v2518 = vunpack.c.l.b16 %v587
    %v2519 = vunpack.c.h.b16 %v587
    %v2520 = vunpack.c.l.b16 %v588
    %v2521 = vunpack.c.h.b16 %v588
    %v2522 = vunpack.c.l.b16 %v589
    %v2523 = vunpack.c.h.b16 %v589
    %v2524 = vunpack.c.l.b16 %v590
    %v2525 = vunpack.c.h.b16 %v590
    %v2526 = vunpack.c.l.b16 %v591
    %v2527 = vunpack.c.h.b16 %v591
    %v2528 = vunpack.c.l.b16 %v592
    %v2529 = vunpack.c.h.b16 %v592
    %v2530 = vunpack.c.l.b16 %v593
    %v2531 = vunpack.c.h.b16 %v593
    %v2532 = vunpack.c.l.b16 %v594
    %v2533 = vunpack.c.h.b16 %v594
    %v2534 = vunpack.c.l.b16 %v595
    %v2535 = vunpack.c.h.b16 %v595
    %v2536 = vunpack.c.l.b16 %v596
    %v2537 = vunpack.c.h.b16 %v596
    %v2538 = vunpack.c.l.b16 %v597
    %v2539 = vunpack.c.h.b16 %v597
    %v2540 = vunpack.c.l.b16 %v598
    %v2541 = vunpack.c.h.b16 %v598
    %v2542 = vunpack.c.l.b16 %v599
    %v2543 = vunpack.c.h.b16 %v599
    %v2544 = vunpack.c.l.b16 %v600
    %v2545 = vunpack.c.h.b16 %v600
    %v2546 = vunpack.c.l.b16 %v601
    %v2547 = vunpack.c.h.b16 %v601
    %v2548 = vunpack.c.l.b16 %v602
    %v2549 = vunpack.c.h.b16 %v602
    %v2550 = vunpack.c.l.b16 %v603
    %v2551 = vunpack.c.h.b16 %v603
    %v2552 = vunpack.c.l.b16 %v604
    %v2553 = vunpack.c.h.b16 %v604
    %v2554 = vunpack.c.l.b16 %v605
    %v2555 = vunpack.c.h.b16 %v605
    %v2556 = vunpack.c.l.b16 %v606
    %v2557 = vunpack.c.h.b16 %v606
    %v2558 = vunpack.c.l.b16 %v607
    %v2559 = vunpack.c.h.b16 %v607
    %v2560 = vunpack.c.l.b16 %v608
    %v2561 = vunpack.c.h.b16 %v608
    %v2562 = vunpack.c.l.b16 %v609
    %v2563 = vunpack.c.h.b16 %v609
    %v2564 = vunpack.c.l.b16 %v610
    %v2565 = vunpack.c.h.b16 %v610
    %v2566 = vunpack.c.l.b16 %v611
    %v2567 = vunpack.c.h.b16 %v611
    %v2568 = vunpack.c.l.b16 %v612
    %v2569 = vunpack.c.h.b16 %v612
    %v2570 = vunpack.c.l.b16 %v613
    %v2571 = vunpack.c.h.b16 %v613
    %v2572 = vunpack.c.l.b16 %v614
    %v2573 = vunpack.c.h.b16 %v614
    %v2574 = vunpack.c.l.b16 %v615
    %v2575 = vunpack.c.h.b16 %v615
    %v2576 = vunpack.c.l.b16 %v616
    %v2577 = vunpack.c.h.b16 %v616
    %v2578 = vunpack.c.l.b16 %v617
    %v2579 = vunpack.c.h.b16 %v617
    %v2580 = vunpack.c.l.b16 %v618
    %v2581 = vunpack.c.h.b16 %v618
    %v2582 = vunpack.c.l.b16 %v619
    %v2583 = vunpack.c.h.b16 %v619
    %v2584 = vunpack.c.l.b16 %v620
    %v2585 = vunpack.c.h.b16 %v620
    %v2586 = vunpack.c.l.b16 %v621
    %v2587 = vunpack.c.h.b16 %v621
    %v2588 = vunpack.c.l.b16 %v622
    %v2589 = vunpack.c.h.b16 %v622
    %v2590 = vunpack.c.l.b16 %v623
    %v2591 = vunpack.c.h.b16 %v623
    %v2592 = vunpack.c.l.b16 %v624
    %v2593 = vunpack.c.h.b16 %v624
    %v2594 = vunpack.c.l.b16 %v625
    %v2595 = vunpack.c.h.b16 %v625
    %v2596 = vunpack.c.l.b16 %v626
    %v2597 = vunpack.c.h.b16 %v626
    %v2598 = vunpack.c.l.b16 %v627
    %v2599 = vunpack.c.h.b16 %v627
    %v2600 = vunpack.c.l.b16 %v628
    %v2601 = vunpack.c.h.b16 %v628
    %v2602 = vunpack.c.l.b16 %v629
    %v2603 = vunpack.c.h.b16 %v629
    %v2604 = vunpack.c.l.b16 %v630
    %v2605 = vunpack.c.h.b16 %v630
    %v2606 = vunpack.c.l.b16 %v631
    %v2607 = vunpack.c.h.b16 %v631
    %v2608 = vunpack.c.l.b16 %v632
    %v2609 = vunpack.c.h.b16 %v632
    %v2610 = vunpack.c.l.b16 %v633
    %v2611 = vunpack.c.h.b16 %v633
    %v2612 = vunpack.c.l.b16 %v634
    %v2613 = vunpack.c.h.b16 %v634
    %v2614 = vunpack.c.l.b16 %v635
    %v2615 = vunpack.c.h.b16 %v635
    %v2616 = vunpack.c.l.b16 %v636
    %v2617 = vunpack.c.h.b16 %v636
    %v2618 = vunpack.c.l.b16 %v637
    %v2619 = vunpack.c.h.b16 %v637
    %v2620 = vunpack.c.l.b16 %v638
    %v2621 = vunpack.c.h.b16 %v638
    %v2622 = vunpack.c.l.b16 %v639
    %v2623 = vunpack.c.h.b16 %v639
    %v2624 = vunpack.c.l.b16 %v640
    %v2625 = vunpack.c.h.b16 %v640
    %v2626 = vunpack.c.l.b16 %v641
    %v2627 = vunpack.c.h.b16 %v641
    %v2628 = vunpack.c.l.b16 %v642
    %v2629 = vunpack.c.h.b16 %v642
    %v2630 = vunpack.c.l.b16 %v643
    %v2631 = vunpack.c.h.b16 %v643
    %v2632 = vunpack.c.l.b16 %v644
    %v2633 = vunpack.c.h.b16 %v644
    %v2634 = vunpack.c.l.b16 %v645
    %v2635 = vunpack.c.h.b16 %v645
    %v2636 = vunpack.c.l.b16 %v646
    %v2637 = vunpack.c.h.b16 %v646
    %v2638 = vunpack.c.l.b16 %v647
    %v2639 = vunpack.c.h.b16 %v647
    %v2640 = vunpack.c.l.b16 %v648
    %v2641 = vunpack.c.h.b16 %v648
    %v2642 = vunpack.c.l.b16 %v649
    %v2643 = vunpack.c.h.b16 %v649
    %v2644 = vunpack.c.l.b16 %v650
    %v2645 = vunpack.c.h.b16 %v650
    %v2646 = vunpack.c.l.b16 %v651
    %v2647 = vunpack.c.h.b16 %v651
    %v2648 = vunpack.c.l.b16 %v652
    %v2649 = vunpack.c.h.b16 %v652
    %v2650 = vunpack.c.l.b16 %v653
    %v2651 = vunpack.c.h.b16 %v653
    %v2652 = vunpack.c.l.b16 %v654
    %v2653 = vunpack.c.h.b16 %v654
    %v2654 = vunpack.c.l.b16 %v655
    %v2655 = vunpack.c.h.b16 %v655
    %v2656 = vunpack.c.l.b16 %v656
    %v2657 = vunpack.c.h.b16 %v656
    %v2658 = vunpack.c.l.b16 %v657
    %v2659 = vunpack.c.h.b16 %v657
    %v2660 = vunpack.c.l.b16 %v658
    %v2661 = vunpack.c.h.b16 %v658
    %v2662 = vunpack.c.l.b16 %v659
    %v2663 = vunpack.c.h.b16 %v659
    %v2664 = vunpack.c.l.b16 %v660
    %v2665 = vunpack.c.h.b16 %v660
    %v2666 = vunpack.c.l.b16 %v661
    %v2667 = vunpack.c.h.b16 %v661
    %v2668 = vunpack.c.l.b16 %v662
    %v2669 = vunpack.c.h.b16 %v662
    %v2670 = vunpack.c.l.b16 %v663
    %v2671 = vunpack.c.h.b16 %v663
    %v2672 = vunpack.c.l.b16 %v664
    %v2673 = vunpack.c.h.b16 %v664
    %v2674 = vunpack.c.l.b16 %v665
    %v2675 = vunpack.c.h.b16 %v665
    %v2676 = vunpack.c.l.b16 %v666
    %v2677 = vunpack.c.h.b16 %v666
    %v2678 = vunpack.c.l.b16 %v667
    %v2679 = vunpack.c.h.b16 %v667
    %v2680 = vunpack.c.l.b16 %v668
    %v2681 = vunpack.c.h.b16 %v668
    %v2682 = vunpack.c.l.b16 %v669
    %v2683 = vunpack.c.h.b16 %v669
    %v2684 = vunpack.c.l.b16 %v670
    %v2685 = vunpack.c.h.b16 %v670
    %v2686 = vunpack.c.l.b16 %v671
    %v2687 = vunpack.c.h.b16 %v671
    %v2688 = vunpack.c.l.b16 %v672
    %v2689 = vunpack.c.h.b16 %v672
    %v2690 = vunpack.c.l.b16 %v673
    %v2691 = vunpack.c.h.b16 %v673
    %v2692 = vunpack.c.l.b16 %v674
    %v2693 = vunpack.c.h.b16 %v674
    %v2694 = vunpack.c.l.b16 %v675
    %v2695 = vunpack.c.h.b16 %v675
    %v2696 = vunpack.c.l.b16 %v676
    %v2697 = vunpack.c.h.b16 %v676
    %v2698 = vunpack.c.l.b16 %v677
    %v2699 = vunpack.c.h.b16 %v677
    %v2700 = vunpack.c.l.b16 %v678
    %v2701 = vunpack.c.h.b16 %v678
    %v2702 = vunpack.c.l.b16 %v679
    %v2703 = vunpack.c.h.b16 %v679
    %v2704 = vunpack.c.l.b16 %v680
    %v2705 = vunpack.c.h.b16 %v680
    %v2706 = vunpack.c.l.b16 %v681
    %v2707 = vunpack.c.h.b16 %v681
    %v2708 = vunpack.c.l.b16 %v682
    %v2709 = vunpack.c.h.b16 %v682
    %v2710 = vunpack.c.l.b16 %v683
    %v2711 = vunpack.c.h.b16 %v683
    %v2712 = vunpack.c.l.b16 %v684
    %v2713 = vunpack.c.h.b16 %v684
    %v2714 = vunpack.c.l.b16 %v685
    %v2715 = vunpack.c.h.b16 %v685
    %v2716 = vunpack.c.l.b16 %v686
    %v2717 = vunpack.c.h.b16 %v686
    %v2718 = vunpack.c.l.b16 %v687
    %v2719 = vunpack.c.h.b16 %v687
    %v2720 = vunpack.c.l.b16 %v688
    %v2721 = vunpack.c.h.b16 %v688
    %v2722 = vunpack.c.l.b16 %v689
    %v2723 = vunpack.c.h.b16 %v689
    %v2724 = vunpack.c.l.b16 %v690
    %v2725 = vunpack.c.h.b16 %v690
    %v2726 = vunpack.c.l.b16 %v691
    %v2727 = vunpack.c.h.b16 %v691
    %v2728 = vunpack.c.l.b16 %v692
    %v2729 = vunpack.c.h.b16 %v692
    %v2730 = vunpack.c.l.b16 %v693
    %v2731 = vunpack.c.h.b16 %v693
    %v2732 = vunpack.c.l.b16 %v694
    %v2733 = vunpack.c.h.b16 %v694
    %v2734 = vunpack.c.l.b16 %v695
    %v2735 = vunpack.c.h.b16 %v695
    %v2736 = vunpack.c.l.b16 %v696
    %v2737 = vunpack.c.h.b16 %v696
    %v2738 = vunpack.c.l.b16 %v697
    %v2739 = vunpack.c.h.b16 %v697
    %v2740 = vunpack.c.l.b16 %v698
    %v2741 = vunpack.c.h.b16 %v698
    %v2742 = vunpack.c.l.b16 %v699
    %v2743 = vunpack.c.h.b16 %v699
    %v2744 = vunpack.c.l.b16 %v700
    %v2745 = vunpack.c.h.b16 %v700
    %v2746 = vunpack.c.l.b16 %v701
    %v2747 = vunpack.c.h.b16 %v701
    %v2748 = vunpack.c.l.b16 %v702
    %v2749 = vunpack.c.h.b16 %v702
    %v2750 = vunpack.c.l.b16 %v703
    %v2751 = vunpack.c.h.b16 %v703
    %v2752 = vunpack.c.l.b16 %v704
    %v2753 = vunpack.c.h.b16 %v704
    %v2754 = vunpack.c.l.b16 %v705
    %v2755 = vunpack.c.h.b16 %v705
    %v2756 = vunpack.c.l.b16 %v706
    %v2757 = vunpack.c.h.b16 %v706
    %v2758 = vunpack.c.l.b16 %v707
    %v2759 = vunpack.c.h.b16 %v707
    %v2760 = vunpack.c.l.b16 %v708
    %v2761 = vunpack.c.h.b16 %v708
    %v2762 = vunpack.c.l.b16 %v709
    %v2763 = vunpack.c.h.b16 %v709
    %v2764 = vunpack.c.l.b16 %v710
    %v2765 = vunpack.c.h.b16 %v710
    %v2766 = vunpack.c.l.b16 %v711
    %v2767 = vunpack.c.h.b16 %v711
    %v2768 = vunpack.c.l.b16 %v712
    %v2769 = vunpack.c.h.b16 %v712
    %v2770 = vunpack.c.l.b16 %v713
    %v2771 = vunpack.c.h.b16 %v713
    %v2772 = vunpack.c.l.b16 %v714
    %v2773 = vunpack.c.h.b16 %v714
    %v2774 = vunpack.c.l.b16 %v715
    %v2775 = vunpack.c.h.b16 %v715
    %v2776 = vunpack.c.l.b16 %v716
    %v2777 = vunpack.c.h.b16 %v716
    %v2778 = vunpack.c.l.b16 %v717
    %v2779 = vunpack.c.h.b16 %v717
    %v2780 = vunpack.c.l.b16 %v718
    %v2781 = vunpack.c.h.b16 %v718
    %v2782 = vunpack.c.l.b16 %v719
    %v2783 = vunpack.c.h.b16 %v719
    %v2784 = vunpack.c.l.b16 %v720
    %v2785 = vunpack.c.h.b16 %v720
    %v2786 = vunpack.c.l.b16 %v721
    %v2787 = vunpack.c.h.b16 %v721
    %v2788 = vunpack.c.l.b16 %v722
    %v2789 = vunpack.c.h.b16 %v722
    %v2790 = vunpack.c.l.b16 %v723
    %v2791 = vunpack.c.h.b16 %v723
    %v2792 = vunpack.c.l.b16 %v724
    %v2793 = vunpack.c.h.b16 %v724
    %v2794 = vunpack.c.l.b16 %v725
    %v2795 = vunpack.c.h.b16 %v725
    %v2796 = vunpack.c.l.b16 %v726
    %v2797 = vunpack.c.h.b16 %v726
    %v2798 = vunpack.c.l.b16 %v727
    %v2799 = vunpack.c.h.b16 %v727
    %v2800 = vunpack.c.l.b16 %v728
    %v2801 = vunpack.c.h.b16 %v728
    %v2802 = vunpack.c.l.b16 %v729
    %v2803 = vunpack.c.h.b16 %v729
    %v2804 = vunpack.c.l.b16 %v730
    %v2805 = vunpack.c.h.b16 %v730
    %v2806 = vunpack.c.l.b16 %v731
    %v2807 = vunpack.c.h.b16 %v731
    %v2808 = vunpack.c.l.b16 %v732
    %v2809 = vunpack.c.h.b16 %v732
    %v2810 = vunpack.c.l.b16 %v733
    %v2811 = vunpack.c.h.b16 %v733
    %v2812 = vunpack.c.l.b16 %v734
    %v2813 = vunpack.c.h.b16 %v734
    %v2814 = vunpack.c.l.b16 %v735
    %v2815 = vunpack.c.h.b16 %v735
    %v2816 = vunpack.c.l.b16 %v736
    %v2817 = vunpack.c.h.b16 %v736
    %v2818 = vunpack.c.l.b16 %v737
    %v2819 = vunpack.c.h.b16 %v737
    %v2820 = vunpack.c.l.b16 %v738
    %v2821 = vunpack.c.h.b16 %v738
    %v2822 = vunpack.c.l.b16 %v739
    %v2823 = vunpack.c.h.b16 %v739
    %v2824 = vunpack.c.l.b16 %v740
    %v2825 = vunpack.c.h.b16 %v740
    %v2826 = vunpack.c.l.b16 %v741
    %v2827 = vunpack.c.h.b16 %v741
    %v2828 = vunpack.c.l.b16 %v742
    %v2829 = vunpack.c.h.b16 %v742
    %v2830 = vunpack.c.l.b16 %v743
    %v2831 = vunpack.c.h.b16 %v743
    %v2832 = vunpack.c.l.b16 %v744
    %v2833 = vunpack.c.h.b16 %v744
    %v2834 = vunpack.c.l.b16 %v745
    %v2835 = vunpack.c.h.b16 %v745
    %v2836 = vunpack.c.l.b16 %v746
    %v2837 = vunpack.c.h.b16 %v746
    %v2838 = vunpack.c.l.b16 %v747
    %v2839 = vunpack.c.h.b16 %v747
    %v2840 = vunpack.c.l.b16 %v748
    %v2841 = vunpack.c.h.b16 %v748
    %v2842 = vunpack.c.l.b16 %v749
    %v2843 = vunpack.c.h.b16 %v749
    %v2844 = vunpack.c.l.b16 %v750
    %v2845 = vunpack.c.h.b16 %v750
    %v2846 = vunpack.c.l.b16 %v751
    %v2847 = vunpack.c.h.b16 %v751
    %v2848 = vunpack.c.l.b16 %v752
    %v2849 = vunpack.c.h.b16 %v752
    %v2850 = vunpack.c.l.b16 %v753
    %v2851 = vunpack.c.h.b16 %v753
    %v2852 = vunpack.c.l.b16 %v754
    %v2853 = vunpack.c.h.b16 %v754
    %v2854 = vunpack.c.l.b16 %v755
    %v2855 = vunpack.c.h.b16 %v755
    %v2856 = vunpack.c.l.b16 %v756
    %v2857 = vunpack.c.h.b16 %v756
    %v2858 = vunpack.c.l.b16 %v757
    %v2859 = vunpack.c.h.b16 %v757
    %v2860 = vunpack.c.l.b16 %v758
    %v2861 = vunpack.c.h.b16 %v758
    %v2862 = vunpack.c.l.b16 %v759
    %v2863 = vunpack.c.h.b16 %v759
    %v2864 = vunpack.c.l.b16 %v760
    %v2865 = vunpack.c.h.b16 %v760
    %v2866 = vunpack.c.l.b16 %v761
    %v2867 = vunpack.c.h.b16 %v761
    %v2868 = vunpack.c.l.b16 %v762
    %v2869 = vunpack.c.h.b16 %v762
    %v2870 = vunpack.c.l.b16 %v763
    %v2871 = vunpack.c.h.b16 %v763
    %v2872 = vunpack.c.l.b16 %v764
    %v2873 = vunpack.c.h.b16 %v764
    %v2874 = vunpack.c.l.b16 %v765
    %v2875 = vunpack.c.h.b16 %v765
    %v2876 = vunpack.c.l.b16 %v766
    %v2877 = vunpack.c.h.b16 %v766
    %v2878 = vunpack.c.l.b16 %v767
    %v2879 = vunpack.c.h.b16 %v767
    %v2880 = vunpack.c.l.b16 %v768
    %v2881 = vunpack.c.h.b16 %v768
    %v2882 = vunpack.c.l.b16 %v769
    %v2883 = vunpack.c.h.b16 %v769
    %v2884 = vunpack.c.l.b16 %v770
    %v2885 = vunpack.c.h.b16 %v770
    %v2886 = vunpack.c.l.b16 %v771
    %v2887 = vunpack.c.h.b16 %v771
    %v2888 = vunpack.c.l.b16 %v772
    %v2889 = vunpack.c.h.b16 %v772
    %v2890 = vunpack.c.l.b16 %v773
    %v2891 = vunpack.c.h.b16 %v773
    %v2892 = vunpack.c.l.b16 %v774
    %v2893 = vunpack.c.h.b16 %v774
    %v2894 = vunpack.c.l.b16 %v775
    %v2895 = vunpack.c.h.b16 %v775
    %v2896 = vunpack.c.l.b16 %v776
    %v2897 = vunpack.c.h.b16 %v776
    %v2898 = vunpack.c.l.b16 %v777
    %v2899 = vunpack.c.h.b16 %v777
    %v2900 = vunpack.c.l.b16 %v778
    %v2901 = vunpack.c.h.b16 %v778
    %v2902 = vunpack.c.l.b16 %v779
    %v2903 = vunpack.c.h.b16 %v779
    %v2904 = vunpack.c.l.b16 %v780
    %v2905 = vunpack.c.h.b16 %v780
    %v2906 = vunpack.c.l.b16 %v781
    %v2907 = vunpack.c.h.b16 %v781
    %v2908 = vunpack.c.l.b16 %v782
    %v2909 = vunpack.c.h.b16 %v782
    %v2910 = vunpack.c.l.b16 %v783
    %v2911 = vunpack.c.h.b16 %v783
    %v2912 = vunpack.c.l.b16 %v784
    %v2913 = vunpack.c.h.b16 %v784
    %v2914 = vunpack.c.l.b16 %v785
    %v2915 = vunpack.c.h.b16 %v785
    %v2916 = vunpack.c.l.b16 %v786
    %v2917 = vunpack.c.h.b16 %v786
    %v2918 = vunpack.c.l.b16 %v787
    %v2919 = vunpack.c.h.b16 %v787
    %v2920 = vunpack.c.l.b16 %v788
    %v2921 = vunpack.c.h.b16 %v788
    %v2922 = vunpack.c.l.b16 %v789
    %v2923 = vunpack.c.h.b16 %v789
    %v2924 = vunpack.c.l.b16 %v790
    %v2925 = vunpack.c.h.b16 %v790
    %v2926 = vunpack.c.l.b16 %v791
    %v2927 = vunpack.c.h.b16 %v791
    %v2928 = vunpack.c.l.b16 %v792
    %v2929 = vunpack.c.h.b16 %v792
    %v2930 = vunpack.c.l.b16 %v793
    %v2931 = vunpack.c.h.b16 %v793
    %v2932 = vunpack.c.l.b16 %v794
    %v2933 = vunpack.c.h.b16 %v794
    %v2934 = vunpack.c.l.b16 %v795
    %v2935 = vunpack.c.h.b16 %v795
    %v2936 = vunpack.c.l.b16 %v796
    %v2937 = vunpack.c.h.b16 %v796
    %v2938 = vunpack.c.l.b16 %v797
    %v2939 = vunpack.c.h.b16 %v797
    %v2940 = vunpack.c.l.b16 %v798
    %v2941 = vunpack.c.h.b16 %v798
    %v2942 = vunpack.c.l.b16 %v799
    %v2943 = vunpack.c.h.b16 %v799
    %v2944 = vunpack.c.l.b16 %v800
    %v2945 = vunpack.c.h.b16 %v800
    %v2946 = vunpack.c.l.b16 %v801
    %v2947 = vunpack.c.h.b16 %v801
    %v2948 = vunpack.c.l.b16 %v802
    %v2949 = vunpack.c.h.b16 %v802
    %v2950 = vunpack.c.l.b16 %v803
    %v2951 = vunpack.c.h.b16 %v803
    %v2952 = vunpack.c.l.b16 %v804
    %v2953 = vunpack.c.h.b16 %v804
    %v2954 = vunpack.c.l.b16 %v805
    %v2955 = vunpack.c.h.b16 %v805
    %v2956 = vunpack.c.l.b16 %v806
    %v2957 = vunpack.c.h.b16 %v806
    %v2958 = vunpack.c.l.b16 %v807
    %v2959 = vunpack.c.h.b16 %v807
    %v2960 = vunpack.c.l.b16 %v808
    %v2961 = vunpack.c.h.b16 %v808
    %v2962 = vunpack.c.l.b16 %v809
    %v2963 = vunpack.c.h.b16 %v809
    %v2964 = vunpack.c.l.b16 %v810
    %v2965 = vunpack.c.h.b16 %v810
    %v2966 = vunpack.c.l.b16 %v811
    %v2967 = vunpack.c.h.b16 %v811
    %v2968 = vunpack.c.l.b16 %v812
    %v2969 = vunpack.c.h.b16 %v812
    %v2970 = vunpack.c.l.b16 %v813
    %v2971 = vunpack.c.h.b16 %v813
    %v2972 = vunpack.c.l.b16 %v814
    %v2973 = vunpack.c.h.b16 %v814
    %v2974 = vunpack.c.l.b16 %v815
    %v2975 = vunpack.c.h.b16 %v815
    %v2976 = vunpack.c.l.b16 %v816
    %v2977 = vunpack.c.h.b16 %v816
    %v2978 = vunpack.c.l.b16 %v817
    %v2979 = vunpack.c.h.b16 %v817
    %v2980 = vunpack.c.l.b16 %v818
    %v2981 = vunpack.c.h.b16 %v818
    %v2982 = vunpack.c.l.b16 %v819
    %v2983 = vunpack.c.h.b16 %v819
    %v2984 = vunpack.c.l.b16 %v820
    %v2985 = vunpack.c.h.b16 %v820
    %v2986 = vunpack.c.l.b16 %v821
    %v2987 = vunpack.c.h.b16 %v821
    %v2988 = vunpack.c.l.b16 %v822
    %v2989 = vunpack.c.h.b16 %v822
    %v2990 = vunpack.c.l.b16 %v823
    %v2991 = vunpack.c.h.b16 %v823
    %v2992 = vunpack.c.l.b16 %v824
    %v2993 = vunpack.c.h.b16 %v824
    %v2994 = vunpack.c.l.b16 %v825
    %v2995 = vunpack.c.h.b16 %v825
    %v2996 = vunpack.c.l.b16 %v826
    %v2997 = vunpack.c.h.b16 %v826
    %v2998 = vunpack.c.l.b16 %v827
    %v2999 = vunpack.c.h.b16 %v827
    %v3000 = vunpack.c.l.b16 %v828
    %v3001 = vunpack.c.h.b16 %v828
    %v3002 = vunpack.c.l.b16 %v829
    %v3003 = vunpack.c.h.b16 %v829
    %v3004 = vunpack.c.l.b16 %v830
    %v3005 = vunpack.c.h.b16 %v830
    %v3006 = vunpack.c.l.b16 %v831
    %v3007 = vunpack.c.h.b16 %v831
    %v3008 = vunpack.c.l.b16 %v832
    %v3009 = vunpack.c.h.b16 %v832
    %v3010 = vunpack.c.l.b16 %v833
    %v3011 = vunpack.c.h.b16 %v833
    %v3012 = vunpack.c.l.b16 %v834
    %v3013 = vunpack.c.h.b16 %v834
    %v3014 = vunpack.c.l.b16 %v835
    %v3015 = vunpack.c.h.b16 %v835
    %v3016 = vunpack.c.l.b16 %v836
    %v3017 = vunpack.c.h.b16 %v836
    %v3018 = vunpack.c.l.b16 %v837
    %v3019 = vunpack.c.h.b16 %v837
    %v3020 = vunpack.c.l.b16 %v838
    %v3021 = vunpack.c.h.b16 %v838
    %v3022 = vunpack.c.l.b16 %v839
    %v3023 = vunpack.c.h.b16 %v839
    %v3024 = vunpack.c.l.b16 %v840
    %v3025 = vunpack.c.h.b16 %v840
    %v3026 = vunpack.c.l.b16 %v841
    %v3027 = vunpack.c.h.b16 %v841
    %v3028 = vunpack.c.l.b16 %v842
    %v3029 = vunpack.c.h.b16 %v842
    %v3030 = vunpack.c.l.b16 %v843
    %v3031 = vunpack.c.h.b16 %v843
    %v3032 = vunpack.c.l.b16 %v844
    %v3033 = vunpack.c.h.b16 %v844
    %v3034 = vunpack.c.l.b16 %v845
    %v3035 = vunpack.c.h.b16 %v845
    %v3036 = vunpack.c.l.b16 %v846
    %v3037 = vunpack.c.h.b16 %v846
    %v3038 = vunpack.c.l.b16 %v847
    %v3039 = vunpack.c.h.b16 %v847
    %v3040 = vunpack.c.l.b16 %v848
    %v3041 = vunpack.c.h.b16 %v848
    %v3042 = vunpack.c.l.b16 %v849
    %v3043 = vunpack.c.h.b16 %v849
    %v3044 = vunpack.c.l.b16 %v850
    %v3045 = vunpack.c.h.b16 %v850
    %v3046 = vunpack.c.l.b16 %v851
    %v3047 = vunpack.c.h.b16 %v851
    %v3048 = vunpack.c.l.b16 %v852
    %v3049 = vunpack.c.h.b16 %v852
    %v3050 = vunpack.c.l.b16 %v853
    %v3051 = vunpack.c.h.b16 %v853
    %v3052 = vunpack.c.l.b16 %v854
    %v3053 = vunpack.c.h.b16 %v854
    %v3054 = vunpack.c.l.b16 %v855
    %v3055 = vunpack.c.h.b16 %v855
    %v3056 = vunpack.c.l.b16 %v856
    %v3057 = vunpack.c.h.b16 %v856
    %v3058 = vunpack.c.l.b16 %v857
    %v3059 = vunpack.c.h.b16 %v857
    %v3060 = vunpack.c.l.b16 %v858
    %v3061 = vunpack.c.h.b16 %v858
    %v3062 = vunpack.c.l.b16 %v859
    %v3063 = vunpack.c.h.b16 %v859
    %v3064 = vunpack.c.l.b16 %v860
    %v3065 = vunpack.c.h.b16 %v860
    %v3066 = vunpack.c.l.b16 %v861
    %v3067 = vunpack.c.h.b16 %v861
    %v3068 = vunpack.c.l.b16 %v862
    %v3069 = vunpack.c.h.b16 %v862
    %v3070 = vunpack.c.l.b16 %v863
    %v3071 = vunpack.c.h.b16 %v863
    %v3072 = vunpack.c.l.b16 %v864
    %v3073 = vunpack.c.h.b16 %v864
    %v3074 = vunpack.c.l.b16 %v865
    %v3075 = vunpack.c.h.b16 %v865
    %v3076 = vunpack.c.l.b16 %v866
    %v3077 = vunpack.c.h.b16 %v866
    %v3078 = vunpack.c.l.b16 %v867
    %v3079 = vunpack.c.h.b16 %v867
    %v3080 = vunpack.c.l.b16 %v868
    %v3081 = vunpack.c.h.b16 %v868
    %v3082 = vunpack.c.l.b16 %v869
    %v3083 = vunpack.c.h.b16 %v869
    %v3084 = vunpack.c.l.b16 %v870
    %v3085 = vunpack.c.h.b16 %v870
    %v3086 = vunpack.c.l.b16 %v871
    %v3087 = vunpack.c.h.b16 %v871
    %v3088 = vunpack.c.l.b16 %v872
    %v3089 = vunpack.c.h.b16 %v872
    %v3090 = vunpack.c.l.b16 %v873
    %v3091 = vunpack.c.h.b16 %v873
    %v3092 = vunpack.c.l.b16 %v874
    %v3093 = vunpack.c.h.b16 %v874
    %v3094 = vunpack.c.l.b16 %v875
    %v3095 = vunpack.c.h.b16 %v875
    %v3096 = vunpack.c.l.b16 %v876
    %v3097 = vunpack.c.h.b16 %v876
    %v3098 = vunpack.c.l.b16 %v877
    %v3099 = vunpack.c.h.b16 %v877
    %v3100 = vunpack.c.l.b16 %v878
    %v3101 = vunpack.c.h.b16 %v878
    %v3102 = vunpack.c.l.b16 %v879
    %v3103 = vunpack.c.h.b16 %v879
    %v3104 = vunpack.c.l.b16 %v880
    %v3105 = vunpack.c.h.b16 %v880
    %v3106 = vunpack.c.l.b16 %v881
    %v3107 = vunpack.c.h.b16 %v881
    %v3108 = vunpack.c.l.b16 %v882
    %v3109 = vunpack.c.h.b16 %v882
    %v3110 = vunpack.c.l.b16 %v883
    %v3111 = vunpack.c.h.b16 %v883
    %v3112 = vunpack.c.l.b16 %v884
    %v3113 = vunpack.c.h.b16 %v884
    %v3114 = vunpack.c.l.b16 %v885
    %v3115 = vunpack.c.h.b16 %v885
    %v3116 = vunpack.c.l.b16 %v886
    %v3117 = vunpack.c.h.b16 %v886
    %v3118 = vunpack.c.l.b16 %v887
    %v3119 = vunpack.c.h.b16 %v887
    %v3120 = vunpack.c.l.b16 %v888
    %v3121 = vunpack.c.h.b16 %v888
    %v3122 = vunpack.c.l.b16 %v889
    %v3123 = vunpack.c.h.b16 %v889
    %v3124 = vunpack.c.l.b16 %v890
    %v3125 = vunpack.c.h.b16 %v890
    %v3126 = vunpack.c.l.b16 %v891
    %v3127 = vunpack.c.h.b16 %v891
    %v3128 = vunpack.c.l.b16 %v892
    %v3129 = vunpack.c.h.b16 %v892
    %v3130 = vunpack.c.l.b16 %v893
    %v3131 = vunpack.c.h.b16 %v893
    %v3132 = vunpack.c.l.b16 %v894
    %v3133 = vunpack.c.h.b16 %v894
    %v3134 = vunpack.c.l.b16 %v895
    %v3135 = vunpack.c.h.b16 %v895
    %v3136 = vunpack.c.l.b16 %v896
    %v3137 = vunpack.c.h.b16 %v896
    %v3138 = vunpack.c.l.b16 %v897
    %v3139 = vunpack.c.h.b16 %v897
    %v3140 = vunpack.c.l.b16 %v898
    %v3141 = vunpack.c.h.b16 %v898
    %v3142 = vunpack.c.l.b16 %v899
    %v3143 = vunpack.c.h.b16 %v899
    %v3144 = vpack.c.b16 %v1658, %v1656
    %v3145 = vpack.c.b16 %v1659, %v1657
    %v3146 = vpack.c.b16 %v1662, %v1660
    %v3147 = vpack.c.b16 %v1663, %v1661
    %v3148 = vpack.c.b16 %v1666, %v1664
    %v3149 = vpack.c.b16 %v1667, %v1665
    %v3150 = vpack.c.b16 %v1670, %v1668
    %v3151 = vpack.c.b16 %v1671, %v1669
    %v3152 = vpack.c.b16 %v1674, %v1672
    %v3153 = vpack.c.b16 %v1675, %v1673
    %v3154 = vpack.c.b16 %v1678, %v1676
    %v3155 = vpack.c.b16 %v1679, %v1677
    %v3156 = vpack.c.b16 %v1682, %v1680
    %v3157 = vpack.c.b16 %v1683, %v1681
    %v3158 = vpack.c.b16 %v1686, %v1684
    %v3159 = vpack.c.b16 %v1687, %v1685
    %v3160 = vpack.c.b16 %v1690, %v1688
    %v3161 = vpack.c.b16 %v1691, %v1689
    %v3162 = vpack.c.b16 %v1694, %v1692
    %v3163 = vpack.c.b16 %v1695, %v1693
    %v3164 = vpack.c.b16 %v1698, %v1696
    %v3165 = vpack.c.b16 %v1699, %v1697
    %v3166 = vpack.c.b16 %v1702, %v1700
    %v3167 = vpack.c.b16 %v1703, %v1701
    %v3168 = vpack.c.b16 %v1706, %v1704
    %v3169 = vpack.c.b16 %v1707, %v1705
    %v3170 = vpack.c.b16 %v1710, %v1708
    %v3171 = vpack.c.b16 %v1711, %v1709
    %v3172 = vpack.c.b16 %v1714, %v1712
    %v3173 = vpack.c.b16 %v1715, %v1713
    %v3174 = vpack.c.b16 %v1718, %v1716
    %v3175 = vpack.c.b16 %v1719, %v1717
    %v3176 = vpack.c.b16 %v1722, %v1720
    %v3177 = vpack.c.b16 %v1723, %v1721
    %v3178 = vpack.c.b16 %v1726, %v1724
    %v3179 = vpack.c.b16 %v1727, %v1725
    %v3180 = vpack.c.b16 %v1730, %v1728
    %v3181 = vpack.c.b16 %v1731, %v1729
    %v3182 = vpack.c.b16 %v1734, %v1732
    %v3183 = vpack.c.b16 %v1735, %v1733
    %v3184 = vpack.c.b16 %v1738, %v1736
    %v3185 = vpack.c.b16 %v1739, %v1737
    %v3186 = vpack.c.b16 %v1742, %v1740
    %v3187 = vpack.c.b16 %v1743, %v1741
    %v3188 = vpack.c.b16 %v1746, %v1744
    %v3189 = vpack.c.b16 %v1747, %v1745
    %v3190 = vpack.c.b16 %v1750, %v1748
    %v3191 = vpack.c.b16 %v1751, %v1749
    %v3192 = vpack.c.b16 %v1754, %v1752
    %v3193 = vpack.c.b16 %v1755, %v1753
    %v3194 = vpack.c.b16 %v1758, %v1756
    %v3195 = vpack.c.b16 %v1759, %v1757
    %v3196 = vpack.c.b16 %v1762, %v1760
    %v3197 = vpack.c.b16 %v1763, %v1761
    %v3198 = vpack.c.b16 %v1766, %v1764
    %v3199 = vpack.c.b16 %v1767, %v1765
    %v3200 = vpack.c.b16 %v1770, %v1768
    %v3201 = vpack.c.b16 %v1771, %v1769
    %v3202 = vpack.c.b16 %v1774, %v1772
    %v3203 = vpack.c.b16 %v1775, %v1773
    %v3204 = vpack.c.b16 %v1778, %v1776
    %v3205 = vpack.c.b16 %v1779, %v1777
    %v3206 = vpack.c.b16 %v1782, %v1780
    %v3207 = vpack.c.b16 %v1783, %v1781
    %v3208 = vpack.c.b16 %v1786, %v1784
    %v3209 = vpack.c.b16 %v1787, %v1785
    %v3210 = vpack.c.b16 %v1790, %v1788
    %v3211 = vpack.c.b16 %v1791, %v1789
    %v3212 = vpack.c.b16 %v1794, %v1792
    %v3213 = vpack.c.b16 %v1795, %v1793
    %v3214 = vpack.c.b16 %v1798, %v1796
    %v3215 = vpack.c.b16 %v1799, %v1797
    %v3216 = vpack.c.b16 %v1802, %v1800
    %v3217 = vpack.c.b16 %v1803, %v1801
    %v3218 = vpack.c.b16 %v1806, %v1804
    %v3219 = vpack.c.b16 %v1807, %v1805
    %v3220 = vpack.c.b16 %v1810, %v1808
    %v3221 = vpack.c.b16 %v1811, %v1809
    %v3222 = vpack.c.b16 %v1814, %v1812
    %v3223 = vpack.c.b16 %v1815, %v1813
    %v3224 = vpack.c.b16 %v1818, %v1816
    %v3225 = vpack.c.b16 %v1819, %v1817
    %v3226 = vpack.c.b16 %v1822, %v1820
    %v3227 = vpack.c.b16 %v1823, %v1821
    %v3228 = vpack.c.b16 %v1826, %v1824
    %v3229 = vpack.c.b16 %v1827, %v1825
    %v3230 = vpack.c.b16 %v1830, %v1828
    %v3231 = vpack.c.b16 %v1831, %v1829
    %v3232 = vpack.c.b16 %v1834, %v1832
    %v3233 = vpack.c.b16 %v1835, %v1833
    %v3234 = vpack.c.b16 %v1838, %v1836
    %v3235 = vpack.c.b16 %v1839, %v1837
    %v3236 = vpack.c.b16 %v1842, %v1840
    %v3237 = vpack.c.b16 %v1843, %v1841
    %v3238 = vpack.c.b16 %v1846, %v1844
    %v3239 = vpack.c.b16 %v1847, %v1845
    %v3240 = vpack.c.b16 %v1850, %v1848
    %v3241 = vpack.c.b16 %v1851, %v1849
    %v3242 = vpack.c.b16 %v1854, %v1852
    %v3243 = vpack.c.b16 %v1855, %v1853
    %v3244 = vpack.c.b16 %v1858, %v1856
    %v3245 = vpack.c.b16 %v1859, %v1857
    %v3246 = vpack.c.b16 %v1862, %v1860
    %v3247 = vpack.c.b16 %v1863, %v1861
    %v3248 = vpack.c.b16 %v1866, %v1864
    %v3249 = vpack.c.b16 %v1867, %v1865
    %v3250 = vpack.c.b16 %v1870, %v1868
    %v3251 = vpack.c.b16 %v1871, %v1869
    %v3252 = vpack.c.b16 %v1874, %v1872
    %v3253 = vpack.c.b16 %v1875, %v1873
    %v3254 = vpack.c.b16 %v1878, %v1876
    %v3255 = vpack.c.b16 %v1879, %v1877
    %v3256 = vpack.c.b16 %v1882, %v1880
    %v3257 = vpack.c.b16 %v1883, %v1881
    %v3258 = vpack.c.b16 %v1886, %v1884
    %v3259 = vpack.c.b16 %v1887, %v1885
    %v3260 = vpack.c.b16 %v1890, %v1888
    %v3261 = vpack.c.b16 %v1891, %v1889
    %v3262 = vpack.c.b16 %v1894, %v1892
    %v3263 = vpack.c.b16 %v1895, %v1893
    %v3264 = vpack.c.b16 %v1898, %v1896
    %v3265 = vpack.c.b16 %v1899, %v1897
    %v3266 = vpack.c.b16 %v1902, %v1900
    %v3267 = vpack.c.b16 %v1903, %v1901
    %v3268 = vpack.c.b16 %v1906, %v1904
    %v3269 = vpack.c.b16 %v1907, %v1905
    %v3270 = vpack.c.b16 %v1910, %v1908
    %v3271 = vpack.c.b16 %v1911, %v1909
    %v3272 = vpack.c.b16 %v1914, %v1912
    %v3273 = vpack.c.b16 %v1915, %v1913
    %v3274 = vpack.c.b16 %v1918, %v1916
    %v3275 = vpack.c.b16 %v1919, %v1917
    %v3276 = vpack.c.b16 %v1922, %v1920
    %v3277 = vpack.c.b16 %v1923, %v1921
    %v3278 = vpack.c.b16 %v1926, %v1924
    %v3279 = vpack.c.b16 %v1927, %v1925
    %v3280 = vpack.c.b16 %v1930, %v1928
    %v3281 = vpack.c.b16 %v1931, %v1929
    %v3282 = vpack.c.b16 %v1934, %v1932
    %v3283 = vpack.c.b16 %v1935, %v1933
    %v3284 = vpack.c.b16 %v1938, %v1936
    %v3285 = vpack.c.b16 %v1939, %v1937
    %v3286 = vpack.c.b16 %v1942, %v1940
    %v3287 = vpack.c.b16 %v1943, %v1941
    %v3288 = vpack.c.b16 %v1946, %v1944
    %v3289 = vpack.c.b16 %v1947, %v1945
    %v3290 = vpack.c.b16 %v1950, %v1948
    %v3291 = vpack.c.b16 %v1951, %v1949
    %v3292 = vpack.c.b16 %v1954, %v1952
    %v3293 = vpack.c.b16 %v1955, %v1953
    %v3294 = vpack.c.b16 %v1958, %v1956
    %v3295 = vpack.c.b16 %v1959, %v1957
    %v3296 = vpack.c.b16 %v1962, %v1960
    %v3297 = vpack.c.b16 %v1963, %v1961
    %v3298 = vpack.c.b16 %v1966, %v1964
    %v3299 = vpack.c.b16 %v1967, %v1965
    %v3300 = vpack.c.b16 %v1970, %v1968
    %v3301 = vpack.c.b16 %v1971, %v1969
    %v3302 = vpack.c.b16 %v1974, %v1972
    %v3303 = vpack.c.b16 %v1975, %v1973
    %v3304 = vpack.c.b16 %v1978, %v1976
    %v3305 = vpack.c.b16 %v1979, %v1977
    %v3306 = vpack.c.b16 %v1982, %v1980
    %v3307 = vpack.c.b16 %v1983, %v1981
    %v3308 = vpack.c.b16 %v1986, %v1984
    %v3309 = vpack.c.b16 %v1987, %v1985
    %v3310 = vpack.c.b16 %v1990, %v1988
    %v3311 = vpack.c.b16 %v1991, %v1989
    %v3312 = vpack.c.b16 %v1994, %v1992
    %v3313 = vpack.c.b16 %v1995, %v1993
    %v3314 = vpack.c.b16 %v1998, %v1996
    %v3315 = vpack.c.b16 %v1999, %v1997
    %v3316 = vpack.c.b16 %v2002, %v2000
    %v3317 = vpack.c.b16 %v2003, %v2001
    %v3318 = vpack.c.b16 %v2006, %v2004
    %v3319 = vpack.c.b16 %v2007, %v2005
    %v3320 = vpack.c.b16 %v2010, %v2008
    %v3321 = vpack.c.b16 %v2011, %v2009
    %v3322 = vpack.c.b16 %v2014, %v2012
    %v3323 = vpack.c.b16 %v2015, %v2013
    %v3324 = vpack.c.b16 %v2018, %v2016
    %v3325 = vpack.c.b16 %v2019, %v2017
    %v3326 = vpack.c.b16 %v2022, %v2020
    %v3327 = vpack.c.b16 %v2023, %v2021
    %v3328 = vpack.c.b16 %v2026, %v2024
    %v3329 = vpack.c.b16 %v2027, %v2025
    %v3330 = vpack.c.b16 %v2030, %v2028
    %v3331 = vpack.c.b16 %v2031, %v2029
    %v3332 = vpack.c.b16 %v2034, %v2032
    %v3333 = vpack.c.b16 %v2035, %v2033
    %v3334 = vpack.c.b16 %v2038, %v2036
    %v3335 = vpack.c.b16 %v2039, %v2037
    %v3336 = vpack.c.b16 %v2042, %v2040
    %v3337 = vpack.c.b16 %v2043, %v2041
    %v3338 = vpack.c.b16 %v2046, %v2044
    %v3339 = vpack.c.b16 %v2047, %v2045
    %v3340 = vpack.c.b16 %v2050, %v2048
    %v3341 = vpack.c.b16 %v2051, %v2049
    %v3342 = vpack.c.b16 %v2054, %v2052
    %v3343 = vpack.c.b16 %v2055, %v2053
    %v3344 = vpack.c.b16 %v2058, %v2056
    %v3345 = vpack.c.b16 %v2059, %v2057
    %v3346 = vpack.c.b16 %v2062, %v2060
    %v3347 = vpack.c.b16 %v2063, %v2061
    %v3348 = vpack.c.b16 %v2066, %v2064
    %v3349 = vpack.c.b16 %v2067, %v2065
    %v3350 = vpack.c.b16 %v2070, %v2068
    %v3351 = vpack.c.b16 %v2071, %v2069
    %v3352 = vpack.c.b16 %v2074, %v2072
    %v3353 = vpack.c.b16 %v2075, %v2073
    %v3354 = vpack.c.b16 %v2078, %v2076
    %v3355 = vpack.c.b16 %v2079, %v2077
    %v3356 = vpack.c.b16 %v2082, %v2080
    %v3357 = vpack.c.b16 %v2083, %v2081
    %v3358 = vpack.c.b16 %v2086, %v2084
    %v3359 = vpack.c.b16 %v2087, %v2085
    %v3360 = vpack.c.b16 %v2090, %v2088
    %v3361 = vpack.c.b16 %v2091, %v2089
    %v3362 = vpack.c.b16 %v2094, %v2092
    %v3363 = vpack.c.b16 %v2095, %v2093
    %v3364 = vpack.c.b16 %v2098, %v2096
    %v3365 = vpack.c.b16 %v2099, %v2097
    %v3366 = vpack.c.b16 %v2102, %v2100
    %v3367 = vpack.c.b16 %v2103, %v2101
    %v3368 = vpack.c.b16 %v2106, %v2104
    %v3369 = vpack.c.b16 %v2107, %v2105
    %v3370 = vpack.c.b16 %v2110, %v2108
    %v3371 = vpack.c.b16 %v2111, %v2109
    %v3372 = vpack.c.b16 %v2114, %v2112
    %v3373 = vpack.c.b16 %v2115, %v2113
    %v3374 = vpack.c.b16 %v2118, %v2116
    %v3375 = vpack.c.b16 %v2119, %v2117
    %v3376 = vpack.c.b16 %v2122, %v2120
    %v3377 = vpack.c.b16 %v2123, %v2121
    %v3378 = vpack.c.b16 %v2126, %v2124
    %v3379 = vpack.c.b16 %v2127, %v2125
    %v3380 = vpack.c.b16 %v2130, %v2128
    %v3381 = vpack.c.b16 %v2131, %v2129
    %v3382 = vpack.c.b16 %v2134, %v2132
    %v3383 = vpack.c.b16 %v2135, %v2133
    %v3384 = vpack.c.b16 %v2138, %v2136
    %v3385 = vpack.c.b16 %v2139, %v2137
    %v3386 = vpack.c.b16 %v2142, %v2140
    %v3387 = vpack.c.b16 %v2143, %v2141
    %v3388 = vpack.c.b16 %v2146, %v2144
    %v3389 = vpack.c.b16 %v2147, %v2145
    %v3390 = vpack.c.b16 %v2150, %v2148
    %v3391 = vpack.c.b16 %v2151, %v2149
    %v3392 = vpack.c.b16 %v2154, %v2152
    %v3393 = vpack.c.b16 %v2155, %v2153
    %v3394 = vpack.c.b16 %v2158, %v2156
    %v3395 = vpack.c.b16 %v2159, %v2157
    %v3396 = vpack.c.b16 %v2162, %v2160
    %v3397 = vpack.c.b16 %v2163, %v2161
    %v3398 = vpack.c.b16 %v2166, %v2164
    %v3399 = vpack.c.b16 %v2167, %v2165
    %v3400 = vpack.c.b16 %v2170, %v2168
    %v3401 = vpack.c.b16 %v2171, %v2169
    %v3402 = vpack.c.b16 %v2174, %v2172
    %v3403 = vpack.c.b16 %v2175, %v2173
    %v3404 = vpack.c.b16 %v2178, %v2176
    %v3405 = vpack.c.b16 %v2179, %v2177
    %v3406 = vpack.c.b16 %v2182, %v2180
    %v3407 = vpack.c.b16 %v2183, %v2181
    %v3408 = vpack.c.b16 %v2186, %v2184
    %v3409 = vpack.c.b16 %v2187, %v2185
    %v3410 = vpack.c.b16 %v2190, %v2188
    %v3411 = vpack.c.b16 %v2191, %v2189
    %v3412 = vpack.c.b16 %v2194, %v2192
    %v3413 = vpack.c.b16 %v2195, %v2193
    %v3414 = vpack.c.b16 %v2198, %v2196
    %v3415 = vpack.c.b16 %v2199, %v2197
    %v3416 = vpack.c.b16 %v2202, %v2200
    %v3417 = vpack.c.b16 %v2203, %v2201
    %v3418 = vpack.c.b16 %v2206, %v2204
    %v3419 = vpack.c.b16 %v2207, %v2205
    %v3420 = vpack.c.b16 %v2210, %v2208
    %v3421 = vpack.c.b16 %v2211, %v2209
    %v3422 = vpack.c.b16 %v2214, %v2212
    %v3423 = vpack.c.b16 %v2215, %v2213
    %v3424 = vpack.c.b16 %v2218, %v2216
    %v3425 = vpack.c.b16 %v2219, %v2217
    %v3426 = vpack.c.b16 %v2222, %v2220
    %v3427 = vpack.c.b16 %v2223, %v2221
    %v3428 = vpack.c.b16 %v2226, %v2224
    %v3429 = vpack.c.b16 %v2227, %v2225
    %v3430 = vpack.c.b16 %v2230, %v2228
    %v3431 = vpack.c.b16 %v2231, %v2229
    %v3432 = vpack.c.b16 %v2234, %v2232
    %v3433 = vpack.c.b16 %v2235, %v2233
    %v3434 = vpack.c.b16 %v2238, %v2236
    %v3435 = vpack.c.b16 %v2239, %v2237
    %v3436 = vpack.c.b16 %v2242, %v2240
    %v3437 = vpack.c.b16 %v2243, %v2241
    %v3438 = vpack.c.b16 %v2246, %v2244
    %v3439 = vpack.c.b16 %v2247, %v2245
    %v3440 = vpack.c.b16 %v2250, %v2248
    %v3441 = vpack.c.b16 %v2251, %v2249
    %v3442 = vpack.c.b16 %v2254, %v2252
    %v3443 = vpack.c.b16 %v2255, %v2253
    %v3444 = vpack.c.b16 %v2258, %v2256
    %v3445 = vpack.c.b16 %v2259, %v2257
    %v3446 = vpack.c.b16 %v2262, %v2260
    %v3447 = vpack.c.b16 %v2263, %v2261
    %v3448 = vpack.c.b16 %v2266, %v2264
    %v3449 = vpack.c.b16 %v2267, %v2265
    %v3450 = vpack.c.b16 %v2270, %v2268
    %v3451 = vpack.c.b16 %v2271, %v2269
    %v3452 = vpack.c.b16 %v2274, %v2272
    %v3453 = vpack.c.b16 %v2275, %v2273
    %v3454 = vpack.c.b16 %v2278, %v2276
    %v3455 = vpack.c.b16 %v2279, %v2277
    %v3456 = vpack.c.b16 %v2282, %v2280
    %v3457 = vpack.c.b16 %v2283, %v2281
    %v3458 = vpack.c.b16 %v2286, %v2284
    %v3459 = vpack.c.b16 %v2287, %v2285
    %v3460 = vpack.c.b16 %v2290, %v2288
    %v3461 = vpack.c.b16 %v2291, %v2289
    %v3462 = vpack.c.b16 %v2294, %v2292
    %v3463 = vpack.c.b16 %v2295, %v2293
    %v3464 = vpack.c.b16 %v2298, %v2296
    %v3465 = vpack.c.b16 %v2299, %v2297
    %v3466 = vpack.c.b16 %v2302, %v2300
    %v3467 = vpack.c.b16 %v2303, %v2301
    %v3468 = vpack.c.b16 %v2306, %v2304
    %v3469 = vpack.c.b16 %v2307, %v2305
    %v3470 = vpack.c.b16 %v2310, %v2308
    %v3471 = vpack.c.b16 %v2311, %v2309
    %v3472 = vpack.c.b16 %v2314, %v2312
    %v3473 = vpack.c.b16 %v2315, %v2313
    %v3474 = vpack.c.b16 %v2318, %v2316
    %v3475 = vpack.c.b16 %v2319, %v2317
    %v3476 = vpack.c.b16 %v2322, %v2320
    %v3477 = vpack.c.b16 %v2323, %v2321
    %v3478 = vpack.c.b16 %v2326, %v2324
    %v3479 = vpack.c.b16 %v2327, %v2325
    %v3480 = vpack.c.b16 %v2330, %v2328
    %v3481 = vpack.c.b16 %v2331, %v2329
    %v3482 = vpack.c.b16 %v2334, %v2332
    %v3483 = vpack.c.b16 %v2335, %v2333
    %v3484 = vpack.c.b16 %v2338, %v2336
    %v3485 = vpack.c.b16 %v2339, %v2337
    %v3486 = vpack.c.b16 %v2342, %v2340
    %v3487 = vpack.c.b16 %v2343, %v2341
    %v3488 = vpack.c.b16 %v2346, %v2344
    %v3489 = vpack.c.b16 %v2347, %v2345
    %v3490 = vpack.c.b16 %v2350, %v2348
    %v3491 = vpack.c.b16 %v2351, %v2349
    %v3492 = vpack.c.b16 %v2354, %v2352
    %v3493 = vpack.c.b16 %v2355, %v2353
    %v3494 = vpack.c.b16 %v2358, %v2356
    %v3495 = vpack.c.b16 %v2359, %v2357
    %v3496 = vpack.c.b16 %v2362, %v2360
    %v3497 = vpack.c.b16 %v2363, %v2361
    %v3498 = vpack.c.b16 %v2366, %v2364
    %v3499 = vpack.c.b16 %v2367, %v2365
    %v3500 = vpack.c.b16 %v2370, %v2368
    %v3501 = vpack.c.b16 %v2371, %v2369
    %v3502 = vpack.c.b16 %v2374, %v2372
    %v3503 = vpack.c.b16 %v2375, %v2373
    %v3504 = vpack.c.b16 %v2378, %v2376
    %v3505 = vpack.c.b16 %v2379, %v2377
    %v3506 = vpack.c.b16 %v2382, %v2380
    %v3507 = vpack.c.b16 %v2383, %v2381
    %v3508 = vpack.c.b16 %v2386, %v2384
    %v3509 = vpack.c.b16 %v2387, %v2385
    %v3510 = vpack.c.b16 %v2390, %v2388
    %v3511 = vpack.c.b16 %v2391, %v2389
    %v3512 = vpack.c.b16 %v2394, %v2392
    %v3513 = vpack.c.b16 %v2395, %v2393
    %v3514 = vpack.c.b16 %v2398, %v2396
    %v3515 = vpack.c.b16 %v2399, %v2397
    %v3516 = vpack.c.b16 %v2402, %v2400
    %v3517 = vpack.c.b16 %v2403, %v2401
    %v3518 = vpack.c.b16 %v2406, %v2404
    %v3519 = vpack.c.b16 %v2407, %v2405
    %v3520 = vpack.c.b16 %v2410, %v2408
    %v3521 = vpack.c.b16 %v2411, %v2409
    %v3522 = vpack.c.b16 %v2414, %v2412
    %v3523 = vpack.c.b16 %v2415, %v2413
    %v3524 = vpack.c.b16 %v2418, %v2416
    %v3525 = vpack.c.b16 %v2419, %v2417
    %v3526 = vpack.c.b16 %v2422, %v2420
    %v3527 = vpack.c.b16 %v2423, %v2421
    %v3528 = vpack.c.b16 %v2426, %v2424
    %v3529 = vpack.c.b16 %v2427, %v2425
    %v3530 = vpack.c.b16 %v2430, %v2428
    %v3531 = vpack.c.b16 %v2431, %v2429
    %v3532 = vpack.c.b16 %v2434, %v2432
    %v3533 = vpack.c.b16 %v2435, %v2433
    %v3534 = vpack.c.b16 %v2438, %v2436
    %v3535 = vpack.c.b16 %v2439, %v2437
    %v3536 = vpack.c.b16 %v2442, %v2440
    %v3537 = vpack.c.b16 %v2443, %v2441
    %v3538 = vpack.c.b16 %v2446, %v2444
    %v3539 = vpack.c.b16 %v2447, %v2445
    %v3540 = vpack.c.b16 %v2450, %v2448
    %v3541 = vpack.c.b16 %v2451, %v2449
    %v3542 = vpack.c.b16 %v2454, %v2452
    %v3543 = vpack.c.b16 %v2455, %v2453
    %v3544 = vpack.c.b16 %v2458, %v2456
    %v3545 = vpack.c.b16 %v2459, %v2457
    %v3546 = vpack.c.b16 %v2462, %v2460
    %v3547 = vpack.c.b16 %v2463, %v2461
    %v3548 = vpack.c.b16 %v2466, %v2464
    %v3549 = vpack.c.b16 %v2467, %v2465
    %v3550 = vpack.c.b16 %v2470, %v2468
    %v3551 = vpack.c.b16 %v2471, %v2469
    %v3552 = vpack.c.b16 %v2474, %v2472
    %v3553 = vpack.c.b16 %v2475, %v2473
    %v3554 = vpack.c.b16 %v2478, %v2476
    %v3555 = vpack.c.b16 %v2479, %v2477
    %v3556 = vpack.c.b16 %v2482, %v2480
    %v3557 = vpack.c.b16 %v2483, %v2481
    %v3558 = vpack.c.b16 %v2486, %v2484
    %v3559 = vpack.c.b16 %v2487, %v2485
    %v3560 = vpack.c.b16 %v2490, %v2488
    %v3561 = vpack.c.b16 %v2491, %v2489
    %v3562 = vpack.c.b16 %v2494, %v2492
    %v3563 = vpack.c.b16 %v2495, %v2493
    %v3564 = vpack.c.b16 %v2498, %v2496
    %v3565 = vpack.c.b16 %v2499, %v2497
    %v3566 = vpack.c.b16 %v2502, %v2500
    %v3567 = vpack.c.b16 %v2503, %v2501
    %v3568 = vpack.c.b16 %v2506, %v2504
    %v3569 = vpack.c.b16 %v2507, %v2505
    %v3570 = vpack.c.b16 %v2510, %v2508
    %v3571 = vpack.c.b16 %v2511, %v2509
    %v3572 = vpack.c.b16 %v2514, %v2512
    %v3573 = vpack.c.b16 %v2515, %v2513
    %v3574 = vpack.c.b16 %v2518, %v2516
    %v3575 = vpack.c.b16 %v2519, %v2517
    %v3576 = vpack.c.b16 %v2522, %v2520
    %v3577 = vpack.c.b16 %v2523, %v2521
    %v3578 = vpack.c.b16 %v2526, %v2524
    %v3579 = vpack.c.b16 %v2527, %v2525
    %v3580 = vpack.c.b16 %v2530, %v2528
    %v3581 = vpack.c.b16 %v2531, %v2529
    %v3582 = vpack.c.b16 %v2534, %v2532
    %v3583 = vpack.c.b16 %v2535, %v2533
    %v3584 = vpack.c.b16 %v2538, %v2536
    %v3585 = vpack.c.b16 %v2539, %v2537
    %v3586 = vpack.c.b16 %v2542, %v2540
    %v3587 = vpack.c.b16 %v2543, %v2541
    %v3588 = vpack.c.b16 %v2546, %v2544
    %v3589 = vpack.c.b16 %v2547, %v2545
    %v3590 = vpack.c.b16 %v2550, %v2548
    %v3591 = vpack.c.b16 %v2551, %v2549
    %v3592 = vpack.c.b16 %v2554, %v2552
    %v3593 = vpack.c.b16 %v2555, %v2553
    %v3594 = vpack.c.b16 %v2558, %v2556
    %v3595 = vpack.c.b16 %v2559, %v2557
    %v3596 = vpack.c.b16 %v2562, %v2560
    %v3597 = vpack.c.b16 %v2563, %v2561
    %v3598 = vpack.c.b16 %v2566, %v2564
    %v3599 = vpack.c.b16 %v2567, %v2565
    %v3600 = vpack.c.b16 %v2570, %v2568
    %v3601 = vpack.c.b16 %v2571, %v2569
    %v3602 = vpack.c.b16 %v2574, %v2572
    %v3603 = vpack.c.b16 %v2575, %v2573
    %v3604 = vpack.c.b16 %v2578, %v2576
    %v3605 = vpack.c.b16 %v2579, %v2577
    %v3606 = vpack.c.b16 %v2582, %v2580
    %v3607 = vpack.c.b16 %v2583, %v2581
    %v3608 = vpack.c.b16 %v2586, %v2584
    %v3609 = vpack.c.b16 %v2587, %v2585
    %v3610 = vpack.c.b16 %v2590, %v2588
    %v3611 = vpack.c.b16 %v2591, %v2589
    %v3612 = vpack.c.b16 %v2594, %v2592
    %v3613 = vpack.c.b16 %v2595, %v2593
    %v3614 = vpack.c.b16 %v2598, %v2596
    %v3615 = vpack.c.b16 %v2599, %v2597
    %v3616 = vpack.c.b16 %v2602, %v2600
    %v3617 = vpack.c.b16 %v2603, %v2601
    %v3618 = vpack.c.b16 %v2606, %v2604
    %v3619 = vpack.c.b16 %v2607, %v2605
    %v3620 = vpack.c.b16 %v2610, %v2608
    %v3621 = vpack.c.b16 %v2611, %v2609
    %v3622 = vpack.c.b16 %v2614, %v2612
    %v3623 = vpack.c.b16 %v2615, %v2613
    %v3624 = vpack.c.b16 %v2618, %v2616
    %v3625 = vpack.c.b16 %v2619, %v2617
    %v3626 = vpack.c.b16 %v2622, %v2620
    %v3627 = vpack.c.b16 %v2623, %v2621
    %v3628 = vpack.c.b16 %v2626, %v2624
    %v3629 = vpack.c.b16 %v2627, %v2625
    %v3630 = vpack.c.b16 %v2630, %v2628
    %v3631 = vpack.c.b16 %v2631, %v2629
    %v3632 = vpack.c.b16 %v2634, %v2632
    %v3633 = vpack.c.b16 %v2635, %v2633
    %v3634 = vpack.c.b16 %v2638, %v2636
    %v3635 = vpack.c.b16 %v2639, %v2637
    %v3636 = vpack.c.b16 %v2642, %v2640
    %v3637 = vpack.c.b16 %v2643, %v2641
    %v3638 = vpack.c.b16 %v2646, %v2644
    %v3639 = vpack.c.b16 %v2647, %v2645
    %v3640 = vpack.c.b16 %v2650, %v2648
    %v3641 = vpack.c.b16 %v2651, %v2649
    %v3642 = vpack.c.b16 %v2654, %v2652
    %v3643 = vpack.c.b16 %v2655, %v2653
    %v3644 = vpack.c.b16 %v2658, %v2656
    %v3645 = vpack.c.b16 %v2659, %v2657
    %v3646 = vpack.c.b16 %v2662, %v2660
    %v3647 = vpack.c.b16 %v2663, %v2661
    %v3648 = vpack.c.b16 %v2666, %v2664
    %v3649 = vpack.c.b16 %v2667, %v2665
    %v3650 = vpack.c.b16 %v2670, %v2668
    %v3651 = vpack.c.b16 %v2671, %v2669
    %v3652 = vpack.c.b16 %v2674, %v2672
    %v3653 = vpack.c.b16 %v2675, %v2673
    %v3654 = vpack.c.b16 %v2678, %v2676
    %v3655 = vpack.c.b16 %v2679, %v2677
    %v3656 = vpack.c.b16 %v2682, %v2680
    %v3657 = vpack.c.b16 %v2683, %v2681
    %v3658 = vpack.c.b16 %v2686, %v2684
    %v3659 = vpack.c.b16 %v2687, %v2685
    %v3660 = vpack.c.b16 %v2690, %v2688
    %v3661 = vpack.c.b16 %v2691, %v2689
    %v3662 = vpack.c.b16 %v2694, %v2692
    %v3663 = vpack.c.b16 %v2695, %v2693
    %v3664 = vpack.c.b16 %v2698, %v2696
    %v3665 = vpack.c.b16 %v2699, %v2697
    %v3666 = vpack.c.b16 %v2702, %v2700
    %v3667 = vpack.c.b16 %v2703, %v2701
    %v3668 = vpack.c.b16 %v2706, %v2704
    %v3669 = vpack.c.b16 %v2707, %v2705
    %v3670 = vpack.c.b16 %v2710, %v2708
    %v3671 = vpack.c.b16 %v2711, %v2709
    %v3672 = vpack.c.b16 %v2714, %v2712
    %v3673 = vpack.c.b16 %v2715, %v2713
    %v3674 = vpack.c.b16 %v2718, %v2716
    %v3675 = vpack.c.b16 %v2719, %v2717
    %v3676 = vpack.c.b16 %v2722, %v2720
    %v3677 = vpack.c.b16 %v2723, %v2721
    %v3678 = vpack.c.b16 %v2726, %v2724
    %v3679 = vpack.c.b16 %v2727, %v2725
    %v3680 = vpack.c.b16 %v2730, %v2728
    %v3681 = vpack.c.b16 %v2731, %v2729
    %v3682 = vpack.c.b16 %v2734, %v2732
    %v3683 = vpack.c.b16 %v2735, %v2733
    %v3684 = vpack.c.b16 %v2738, %v2736
    %v3685 = vpack.c.b16 %v2739, %v2737
    %v3686 = vpack.c.b16 %v2742, %v2740
    %v3687 = vpack.c.b16 %v2743, %v2741
    %v3688 = vpack.c.b16 %v2746, %v2744
    %v3689 = vpack.c.b16 %v2747, %v2745
    %v3690 = vpack.c.b16 %v2750, %v2748
    %v3691 = vpack.c.b16 %v2751, %v2749
    %v3692 = vpack.c.b16 %v2754, %v2752
    %v3693 = vpack.c.b16 %v2755, %v2753
    %v3694 = vpack.c.b16 %v2758, %v2756
    %v3695 = vpack.c.b16 %v2759, %v2757
    %v3696 = vpack.c.b16 %v2762, %v2760
    %v3697 = vpack.c.b16 %v2763, %v2761
    %v3698 = vpack.c.b16 %v2766, %v2764
    %v3699 = vpack.c.b16 %v2767, %v2765
    %v3700 = vpack.c.b16 %v2770, %v2768
    %v3701 = vpack.c.b16 %v2771, %v2769
    %v3702 = vpack.c.b16 %v2774, %v2772
    %v3703 = vpack.c.b16 %v2775, %v2773
    %v3704 = vpack.c.b16 %v2778, %v2776
    %v3705 = vpack.c.b16 %v2779, %v2777
    %v3706 = vpack.c.b16 %v2782, %v2780
    %v3707 = vpack.c.b16 %v2783, %v2781
    %v3708 = vpack.c.b16 %v2786, %v2784
    %v3709 = vpack.c.b16 %v2787, %v2785
    %v3710 = vpack.c.b16 %v2790, %v2788
    %v3711 = vpack.c.b16 %v2791, %v2789
    %v3712 = vpack.c.b16 %v2794, %v2792
    %v3713 = vpack.c.b16 %v2795, %v2793
    %v3714 = vpack.c.b16 %v2798, %v2796
    %v3715 = vpack.c.b16 %v2799, %v2797
    %v3716 = vpack.c.b16 %v2802, %v2800
    %v3717 = vpack.c.b16 %v2803, %v2801
    %v3718 = vpack.c.b16 %v2806, %v2804
    %v3719 = vpack.c.b16 %v2807, %v2805
    %v3720 = vpack.c.b16 %v2810, %v2808
    %v3721 = vpack.c.b16 %v2811, %v2809
    %v3722 = vpack.c.b16 %v2814, %v2812
    %v3723 = vpack.c.b16 %v2815, %v2813
    %v3724 = vpack.c.b16 %v2818, %v2816
    %v3725 = vpack.c.b16 %v2819, %v2817
    %v3726 = vpack.c.b16 %v2822, %v2820
    %v3727 = vpack.c.b16 %v2823, %v2821
    %v3728 = vpack.c.b16 %v2826, %v2824
    %v3729 = vpack.c.b16 %v2827, %v2825
    %v3730 = vpack.c.b16 %v2830, %v2828
    %v3731 = vpack.c.b16 %v2831, %v2829
    %v3732 = vpack.c.b16 %v2834, %v2832
    %v3733 = vpack.c.b16 %v2835, %v2833
    %v3734 = vpack.c.b16 %v2838, %v2836
    %v3735 = vpack.c.b16 %v2839, %v2837
    %v3736 = vpack.c.b16 %v2842, %v2840
    %v3737 = vpack.c.b16 %v2843, %v2841
    %v3738 = vpack.c.b16 %v2846, %v2844
    %v3739 = vpack.c.b16 %v2847, %v2845
    %v3740 = vpack.c.b16 %v2850, %v2848
    %v3741 = vpack.c.b16 %v2851, %v2849
    %v3742 = vpack.c.b16 %v2854, %v2852
    %v3743 = vpack.c.b16 %v2855, %v2853
    %v3744 = vpack.c.b16 %v2858, %v2856
    %v3745 = vpack.c.b16 %v2859, %v2857
    %v3746 = vpack.c.b16 %v2862, %v2860
    %v3747 = vpack.c.b16 %v2863, %v2861
    %v3748 = vpack.c.b16 %v2866, %v2864
    %v3749 = vpack.c.b16 %v2867, %v2865
    %v3750 = vpack.c.b16 %v2870, %v2868
    %v3751 = vpack.c.b16 %v2871, %v2869
    %v3752 = vpack.c.b16 %v2874, %v2872
    %v3753 = vpack.c.b16 %v2875, %v2873
    %v3754 = vpack.c.b16 %v2878, %v2876
    %v3755 = vpack.c.b16 %v2879, %v2877
    %v3756 = vpack.c.b16 %v2882, %v2880
    %v3757 = vpack.c.b16 %v2883, %v2881
    %v3758 = vpack.c.b16 %v2886, %v2884
    %v3759 = vpack.c.b16 %v2887, %v2885
    %v3760 = vpack.c.b16 %v2890, %v2888
    %v3761 = vpack.c.b16 %v2891, %v2889
    %v3762 = vpack.c.b16 %v2894, %v2892
    %v3763 = vpack.c.b16 %v2895, %v2893
    %v3764 = vpack.c.b16 %v2898, %v2896
    %v3765 = vpack.c.b16 %v2899, %v2897
    %v3766 = vpack.c.b16 %v2902, %v2900
    %v3767 = vpack.c.b16 %v2903, %v2901
    %v3768 = vpack.c.b16 %v2906, %v2904
    %v3769 = vpack.c.b16 %v2907, %v2905
    %v3770 = vpack.c.b16 %v2910, %v2908
    %v3771 = vpack.c.b16 %v2911, %v2909
    %v3772 = vpack.c.b16 %v2914, %v2912
    %v3773 = vpack.c.b16 %v2915, %v2913
    %v3774 = vpack.c.b16 %v2918, %v2916
    %v3775 = vpack.c.b16 %v2919, %v2917
    %v3776 = vpack.c.b16 %v2922, %v2920
    %v3777 = vpack.c.b16 %v2923, %v2921
    %v3778 = vpack.c.b16 %v2926, %v2924
    %v3779 = vpack.c.b16 %v2927, %v2925
    %v3780 = vpack.c.b16 %v2930, %v2928
    %v3781 = vpack.c.b16 %v2931, %v2929
    %v3782 = vpack.c.b16 %v2934, %v2932
    %v3783 = vpack.c.b16 %v2935, %v2933
    %v3784 = vpack.c.b16 %v2938, %v2936
    %v3785 = vpack.c.b16 %v2939, %v2937
    %v3786 = vpack.c.b16 %v2942, %v2940
    %v3787 = vpack.c.b16 %v2943, %v2941
    %v3788 = vpack.c.b16 %v2946, %v2944
    %v3789 = vpack.c.b16 %v2947, %v2945
    %v3790 = vpack.c.b16 %v2950, %v2948
    %v3791 = vpack.c.b16 %v2951, %v2949
    %v3792 = vpack.c.b16 %v2954, %v2952
    %v3793 = vpack.c.b16 %v2955, %v2953
    %v3794 = vpack.c.b16 %v2958, %v2956
    %v3795 = vpack.c.b16 %v2959, %v2957
    %v3796 = vpack.c.b16 %v2962, %v2960
    %v3797 = vpack.c.b16 %v2963, %v2961
    %v3798 = vpack.c.b16 %v2966, %v2964
    %v3799 = vpack.c.b16 %v2967, %v2965
    %v3800 = vpack.c.b16 %v2970, %v2968
    %v3801 = vpack.c.b16 %v2971, %v2969
    %v3802 = vpack.c.b16 %v2974, %v2972
    %v3803 = vpack.c.b16 %v2975, %v2973
    %v3804 = vpack.c.b16 %v2978, %v2976
    %v3805 = vpack.c.b16 %v2979, %v2977
    %v3806 = vpack.c.b16 %v2982, %v2980
    %v3807 = vpack.c.b16 %v2983, %v2981
    %v3808 = vpack.c.b16 %v2986, %v2984
    %v3809 = vpack.c.b16 %v2987, %v2985
    %v3810 = vpack.c.b16 %v2990, %v2988
    %v3811 = vpack.c.b16 %v2991, %v2989
    %v3812 = vpack.c.b16 %v2994, %v2992
    %v3813 = vpack.c.b16 %v2995, %v2993
    %v3814 = vpack.c.b16 %v2998, %v2996
    %v3815 = vpack.c.b16 %v2999, %v2997
    %v3816 = vpack.c.b16 %v3002, %v3000
    %v3817 = vpack.c.b16 %v3003, %v3001
    %v3818 = vpack.c.b16 %v3006, %v3004
    %v3819 = vpack.c.b16 %v3007, %v3005
    %v3820 = vpack.c.b16 %v3010, %v3008
    %v3821 = vpack.c.b16 %v3011, %v3009
    %v3822 = vpack.c.b16 %v3014, %v3012
    %v3823 = vpack.c.b16 %v3015, %v3013
    %v3824 = vpack.c.b16 %v3018, %v3016
    %v3825 = vpack.c.b16 %v3019, %v3017
    %v3826 = vpack.c.b16 %v3022, %v3020
    %v3827 = vpack.c.b16 %v3023, %v3021
    %v3828 = vpack.c.b16 %v3026, %v3024
    %v3829 = vpack.c.b16 %v3027, %v3025
    %v3830 = vpack.c.b16 %v3030, %v3028
    %v3831 = vpack.c.b16 %v3031, %v3029
    %v3832 = vpack.c.b16 %v3034, %v3032
    %v3833 = vpack.c.b16 %v3035, %v3033
    %v3834 = vpack.c.b16 %v3038, %v3036
    %v3835 = vpack.c.b16 %v3039, %v3037
    %v3836 = vpack.c.b16 %v3042, %v3040
    %v3837 = vpack.c.b16 %v3043, %v3041
    %v3838 = vpack.c.b16 %v3046, %v3044
    %v3839 = vpack.c.b16 %v3047, %v3045
    %v3840 = vpack.c.b16 %v3050, %v3048
    %v3841 = vpack.c.b16 %v3051, %v3049
    %v3842 = vpack.c.b16 %v3054, %v3052
    %v3843 = vpack.c.b16 %v3055, %v3053
    %v3844 = vpack.c.b16 %v3058, %v3056
    %v3845 = vpack.c.b16 %v3059, %v3057
    %v3846 = vpack.c.b16 %v3062, %v3060
    %v3847 = vpack.c.b16 %v3063, %v3061
    %v3848 = vpack.c.b16 %v3066, %v3064
    %v3849 = vpack.c.b16 %v3067, %v3065
    %v3850 = vpack.c.b16 %v3070, %v3068
    %v3851 = vpack.c.b16 %v3071, %v3069
    %v3852 = vpack.c.b16 %v3074, %v3072
    %v3853 = vpack.c.b16 %v3075, %v3073
    %v3854 = vpack.c.b16 %v3078, %v3076
    %v3855 = vpack.c.b16 %v3079, %v3077
    %v3856 = vpack.c.b16 %v3082, %v3080
    %v3857 = vpack.c.b16 %v3083, %v3081
    %v3858 = vpack.c.b16 %v3086, %v3084
    %v3859 = vpack.c.b16 %v3087, %v3085
    %v3860 = vpack.c.b16 %v3090, %v3088
    %v3861 = vpack.c.b16 %v3091, %v3089
    %v3862 = vpack.c.b16 %v3094, %v3092
    %v3863 = vpack.c.b16 %v3095, %v3093
    %v3864 = vpack.c.b16 %v3098, %v3096
    %v3865 = vpack.c.b16 %v3099, %v3097
    %v3866 = vpack.c.b16 %v3102, %v3100
    %v3867 = vpack.c.b16 %v3103, %v3101
    %v3868 = vpack.c.b16 %v3106, %v3104
    %v3869 = vpack.c.b16 %v3107, %v3105
    %v3870 = vpack.c.b16 %v3110, %v3108
    %v3871 = vpack.c.b16 %v3111, %v3109
    %v3872 = vpack.c.b16 %v3114, %v3112
    %v3873 = vpack.c.b16 %v3115, %v3113
    %v3874 = vpack.c.b16 %v3118, %v3116
    %v3875 = vpack.c.b16 %v3119, %v3117
    %v3876 = vpack.c.b16 %v3122, %v3120
    %v3877 = vpack.c.b16 %v3123, %v3121
    %v3878 = vpack.c.b16 %v3126, %v3124
    %v3879 = vpack.c.b16 %v3127, %v3125
    %v3880 = vpack.c.b16 %v3130, %v3128
    %v3881 = vpack.c.b16 %v3131, %v3129
    %v3882 = vpack.c.b16 %v3134, %v3132
    %v3883 = vpack.c.b16 %v3135, %v3133
    %v3884 = vpack.c.b16 %v3138, %v3136
    %v3885 = vpack.c.b16 %v3139, %v3137
    %v3886 = vpack.c.b16 %v3142, %v3140
    %v3887 = vpack.c.b16 %v3143, %v3141
    %vm4632 = vcmask 523264
    %v4634 = vsel %vm4632, %v155, 0
    %4636 = vmatprep.subr.bf16.mxu0 %v3145
    %4637 = vmatpush1.bf16.msra.mxu0 %v3144
    %4638 = vmatprep.subr.bf16.mxu0 %v3147
    %4639 = vmatpush1.bf16.msra.mxu0 %v3146
    %4640 = vmatprep.subr.bf16.mxu0 %v3149
    %4641 = vmatpush1.bf16.msra.mxu0 %v3148
    %4642 = vmatprep.subr.bf16.mxu0 %v3151
    %4643 = vmatpush1.bf16.msra.mxu0 %v3150
    %4644 = vmatprep.subr.bf16.mxu0 %v3153
    %4645 = vmatpush1.bf16.msra.mxu0 %v3152
    %4646 = vmatprep.subr.bf16.mxu0 %v3155
    %4647 = vmatpush1.bf16.msra.mxu0 %v3154
    %4648 = vmatprep.subr.bf16.mxu0 %v3157
    %4649 = vmatpush1.bf16.msra.mxu0 %v3156
    %4650 = vmatprep.subr.bf16.mxu0 %v3159
    %4651 = vmatpush1.bf16.msra.mxu0 %v3158
    %4652 = vmatprep.subr.bf16.mxu0 %v3161
    %4653 = vmatpush1.bf16.msra.mxu0 %v3160
    %4654 = vmatprep.subr.bf16.mxu0 %v3163
    %4655 = vmatpush1.bf16.msra.mxu0 %v3162
    %4656 = vmatprep.subr.bf16.mxu0 %v3165
    %4657 = vmatpush1.bf16.msra.mxu0 %v3164
    %4658 = vmatprep.subr.bf16.mxu0 %v3167
    %4659 = vmatpush1.bf16.msra.mxu0 %v3166
    %4660 = vmatprep.subr.bf16.mxu0 %v3169
    %4661 = vmatpush1.bf16.msra.mxu0 %v3168
    %4662 = vmatprep.subr.bf16.mxu0 %v3171
    %4663 = vmatpush1.bf16.msra.mxu0 %v3170
    %4664 = vmatprep.subr.bf16.mxu0 %v3173
    %4665 = vmatpush1.bf16.msra.mxu0 %v3172
    %4666 = vmatprep.subr.bf16.mxu0 %v3175
    %4667 = vmatpush1.bf16.msra.mxu0 %v3174
    %4668 = vmatprep.mubr.bf16.mxu0 %v110
    %4669 = vmatmul.mubr.bf16.gmra.mrb[0].mxu0 %v109
    %v4670 = vpop.f32.mrb[0].mxu0
    %v4671 = vadd.f32 %v905, %v4670
    %v4672 = vpop.f32.mrb[0].mxu0
    %v4673 = vadd.f32 %v909, %v4672
    %v4674 = vpop.f32.mrb[0].mxu0
    %v4675 = vpop.f32.mrb[0].mxu0
    %4676 = vdwg.mxu0
    %4677 = vmatprep.subr.bf16.mxu0 %v3177
    %4678 = vmatpush1.bf16.msra.mxu0 %v3176
    %4679 = vmatprep.subr.bf16.mxu0 %v3179
    %4680 = vmatpush1.bf16.msra.mxu0 %v3178
    %4681 = vmatprep.subr.bf16.mxu0 %v3181
    %4682 = vmatpush1.bf16.msra.mxu0 %v3180
    %4683 = vmatprep.subr.bf16.mxu0 %v3183
    %4684 = vmatpush1.bf16.msra.mxu0 %v3182
    %4685 = vmatprep.subr.bf16.mxu0 %v3185
    %4686 = vmatpush1.bf16.msra.mxu0 %v3184
    %4687 = vmatprep.subr.bf16.mxu0 %v3187
    %4688 = vmatpush1.bf16.msra.mxu0 %v3186
    %4689 = vmatprep.subr.bf16.mxu0 %v3189
    %4690 = vmatpush1.bf16.msra.mxu0 %v3188
    %4691 = vmatprep.subr.bf16.mxu0 %v3191
    %4692 = vmatpush1.bf16.msra.mxu0 %v3190
    %4693 = vmatprep.subr.bf16.mxu0 %v3193
    %4694 = vmatpush1.bf16.msra.mxu0 %v3192
    %4695 = vmatprep.subr.bf16.mxu0 %v3195
    %4696 = vmatpush1.bf16.msra.mxu0 %v3194
    %4697 = vmatprep.subr.bf16.mxu0 %v3197
    %4698 = vmatpush1.bf16.msra.mxu0 %v3196
    %4699 = vmatprep.subr.bf16.mxu0 %v3199
    %4700 = vmatpush1.bf16.msra.mxu0 %v3198
    %4701 = vmatprep.subr.bf16.mxu0 %v3201
    %4702 = vmatpush1.bf16.msra.mxu0 %v3200
    %4703 = vmatprep.subr.bf16.mxu0 %v3203
    %4704 = vmatpush1.bf16.msra.mxu0 %v3202
    %4705 = vmatprep.subr.bf16.mxu0 %v3205
    %4706 = vmatpush1.bf16.msra.mxu0 %v3204
    %4707 = vmatprep.subr.bf16.mxu0 %v3207
    %4708 = vmatpush1.bf16.msra.mxu0 %v3206
    %4709 = vmatprep.mubr.bf16.mxu0 %v112
    %4710 = vmatmul.mubr.bf16.gmra.mrb[0].mxu0 %v111
    %v4711 = vpop.f32.mrb[0].mxu0
    %v4712 = vadd.f32 %v4671, %v4711
    %v4713 = vpop.f32.mrb[0].mxu0
    %v4714 = vadd.f32 %v4673, %v4713
    %v4715 = vpop.f32.mrb[0].mxu0
    %v4716 = vpop.f32.mrb[0].mxu0
    %4717 = vdwg.mxu0
    %4718 = vmatprep.subr.bf16.mxu0 %v3209
    %4719 = vmatpush1.bf16.msra.mxu0 %v3208
    %4720 = vmatprep.subr.bf16.mxu0 %v3211
    %4721 = vmatpush1.bf16.msra.mxu0 %v3210
    %4722 = vmatprep.subr.bf16.mxu0 %v3213
    %4723 = vmatpush1.bf16.msra.mxu0 %v3212
    %4724 = vmatprep.subr.bf16.mxu0 %v3215
    %4725 = vmatpush1.bf16.msra.mxu0 %v3214
    %4726 = vmatprep.subr.bf16.mxu0 %v3217
    %4727 = vmatpush1.bf16.msra.mxu0 %v3216
    %4728 = vmatprep.subr.bf16.mxu0 %v3219
    %4729 = vmatpush1.bf16.msra.mxu0 %v3218
    %4730 = vmatprep.subr.bf16.mxu0 %v3221
    %4731 = vmatpush1.bf16.msra.mxu0 %v3220
    %4732 = vmatprep.subr.bf16.mxu0 %v3223
    %4733 = vmatpush1.bf16.msra.mxu0 %v3222
    %4734 = vmatprep.subr.bf16.mxu0 %v3225
    %4735 = vmatpush1.bf16.msra.mxu0 %v3224
    %4736 = vmatprep.subr.bf16.mxu0 %v3227
    %4737 = vmatpush1.bf16.msra.mxu0 %v3226
    %4738 = vmatprep.subr.bf16.mxu0 %v3229
    %4739 = vmatpush1.bf16.msra.mxu0 %v3228
    %4740 = vmatprep.subr.bf16.mxu0 %v3231
    %4741 = vmatpush1.bf16.msra.mxu0 %v3230
    %4742 = vmatprep.subr.bf16.mxu0 %v3233
    %4743 = vmatpush1.bf16.msra.mxu0 %v3232
    %4744 = vmatprep.subr.bf16.mxu0 %v3235
    %4745 = vmatpush1.bf16.msra.mxu0 %v3234
    %4746 = vmatprep.subr.bf16.mxu0 %v3237
    %4747 = vmatpush1.bf16.msra.mxu0 %v3236
    %4748 = vmatprep.subr.bf16.mxu0 %v3239
    %4749 = vmatpush1.bf16.msra.mxu0 %v3238
    %4750 = vmatprep.mubr.bf16.mxu0 %v114
    %4751 = vmatmul.mubr.bf16.gmra.mrb[0].mxu0 %v113
    %v4752 = vpop.f32.mrb[0].mxu0
    %v4753 = vadd.f32 %v4712, %v4752
    %v4754 = vpop.f32.mrb[0].mxu0
    %v4755 = vadd.f32 %v4714, %v4754
    %v4756 = vpop.f32.mrb[0].mxu0
    %v4757 = vpop.f32.mrb[0].mxu0
    %4758 = vdwg.mxu0
    %4759 = vmatprep.subr.bf16.mxu0 %v3241
    %4760 = vmatpush1.bf16.msra.mxu0 %v3240
    %4761 = vmatprep.subr.bf16.mxu0 %v3243
    %4762 = vmatpush1.bf16.msra.mxu0 %v3242
    %4763 = vmatprep.subr.bf16.mxu0 %v3245
    %4764 = vmatpush1.bf16.msra.mxu0 %v3244
    %4765 = vmatprep.subr.bf16.mxu0 %v3247
    %4766 = vmatpush1.bf16.msra.mxu0 %v3246
    %4767 = vmatprep.subr.bf16.mxu0 %v3249
    %4768 = vmatpush1.bf16.msra.mxu0 %v3248
    %4769 = vmatprep.subr.bf16.mxu0 %v3251
    %4770 = vmatpush1.bf16.msra.mxu0 %v3250
    %4771 = vmatprep.subr.bf16.mxu0 %v3253
    %4772 = vmatpush1.bf16.msra.mxu0 %v3252
    %4773 = vmatprep.subr.bf16.mxu0 %v3255
    %4774 = vmatpush1.bf16.msra.mxu0 %v3254
    %4775 = vmatprep.subr.bf16.mxu0 %v3257
    %4776 = vmatpush1.bf16.msra.mxu0 %v3256
    %4777 = vmatprep.subr.bf16.mxu0 %v3259
    %4778 = vmatpush1.bf16.msra.mxu0 %v3258
    %4779 = vmatprep.subr.bf16.mxu0 %v3261
    %4780 = vmatpush1.bf16.msra.mxu0 %v3260
    %4781 = vmatprep.subr.bf16.mxu0 %v3263
    %4782 = vmatpush1.bf16.msra.mxu0 %v3262
    %4783 = vmatprep.subr.bf16.mxu0 %v3265
    %4784 = vmatpush1.bf16.msra.mxu0 %v3264
    %4785 = vmatprep.subr.bf16.mxu0 %v3267
    %4786 = vmatpush1.bf16.msra.mxu0 %v3266
    %4787 = vmatprep.subr.bf16.mxu0 %v3269
    %4788 = vmatpush1.bf16.msra.mxu0 %v3268
    %4789 = vmatprep.subr.bf16.mxu0 %v3271
    %4790 = vmatpush1.bf16.msra.mxu0 %v3270
    %4791 = vmatprep.mubr.bf16.mxu0 %v116
    %4792 = vmatmul.mubr.bf16.gmra.mrb[0].mxu0 %v115
    %v4793 = vpop.f32.mrb[0].mxu0
    %v4794 = vadd.f32 %v4753, %v4793
    %v4795 = vpop.f32.mrb[0].mxu0
    %v4796 = vadd.f32 %v4755, %v4795
    %v4797 = vpop.f32.mrb[0].mxu0
    %v4798 = vpop.f32.mrb[0].mxu0
    %4799 = vdwg.mxu0
    %4800 = vmatprep.subr.bf16.mxu0 %v3273
    %4801 = vmatpush1.bf16.msra.mxu0 %v3272
    %4802 = vmatprep.subr.bf16.mxu0 %v3275
    %4803 = vmatpush1.bf16.msra.mxu0 %v3274
    %4804 = vmatprep.subr.bf16.mxu0 %v3277
    %4805 = vmatpush1.bf16.msra.mxu0 %v3276
    %4806 = vmatprep.subr.bf16.mxu0 %v3279
    %4807 = vmatpush1.bf16.msra.mxu0 %v3278
    %4808 = vmatprep.subr.bf16.mxu0 %v3281
    %4809 = vmatpush1.bf16.msra.mxu0 %v3280
    %4810 = vmatprep.subr.bf16.mxu0 %v3283
    %4811 = vmatpush1.bf16.msra.mxu0 %v3282
    %4812 = vmatprep.subr.bf16.mxu0 %v3285
    %4813 = vmatpush1.bf16.msra.mxu0 %v3284
    %4814 = vmatprep.subr.bf16.mxu0 %v3287
    %4815 = vmatpush1.bf16.msra.mxu0 %v3286
    %4816 = vmatprep.subr.bf16.mxu0 %v3289
    %4817 = vmatpush1.bf16.msra.mxu0 %v3288
    %4818 = vmatprep.subr.bf16.mxu0 %v3291
    %4819 = vmatpush1.bf16.msra.mxu0 %v3290
    %4820 = vmatprep.subr.bf16.mxu0 %v3293
    %4821 = vmatpush1.bf16.msra.mxu0 %v3292
    %4822 = vmatprep.subr.bf16.mxu0 %v3295
    %4823 = vmatpush1.bf16.msra.mxu0 %v3294
    %4824 = vmatprep.subr.bf16.mxu0 %v3297
    %4825 = vmatpush1.bf16.msra.mxu0 %v3296
    %4826 = vmatprep.subr.bf16.mxu0 %v3299
    %4827 = vmatpush1.bf16.msra.mxu0 %v3298
    %4828 = vmatprep.subr.bf16.mxu0 %v3301
    %4829 = vmatpush1.bf16.msra.mxu0 %v3300
    %4830 = vmatprep.subr.bf16.mxu0 %v3303
    %4831 = vmatpush1.bf16.msra.mxu0 %v3302
    %4832 = vmatprep.mubr.bf16.mxu0 %v118
    %4833 = vmatmul.mubr.bf16.gmra.mrb[0].mxu0 %v117
    %v4834 = vpop.f32.mrb[0].mxu0
    %v4835 = vadd.f32 %v4794, %v4834
    %v4836 = vpop.f32.mrb[0].mxu0
    %v4837 = vadd.f32 %v4796, %v4836
    %v4838 = vpop.f32.mrb[0].mxu0
    %v4839 = vpop.f32.mrb[0].mxu0
    %4840 = vdwg.mxu0
    %4841 = vmatprep.subr.bf16.mxu0 %v3305
    %4842 = vmatpush1.bf16.msra.mxu0 %v3304
    %4843 = vmatprep.subr.bf16.mxu0 %v3307
    %4844 = vmatpush1.bf16.msra.mxu0 %v3306
    %4845 = vmatprep.subr.bf16.mxu0 %v3309
    %4846 = vmatpush1.bf16.msra.mxu0 %v3308
    %4847 = vmatprep.subr.bf16.mxu0 %v3311
    %4848 = vmatpush1.bf16.msra.mxu0 %v3310
    %4849 = vmatprep.subr.bf16.mxu0 %v3313
    %4850 = vmatpush1.bf16.msra.mxu0 %v3312
    %4851 = vmatprep.subr.bf16.mxu0 %v3315
    %4852 = vmatpush1.bf16.msra.mxu0 %v3314
    %4853 = vmatprep.subr.bf16.mxu0 %v3317
    %4854 = vmatpush1.bf16.msra.mxu0 %v3316
    %4855 = vmatprep.subr.bf16.mxu0 %v3319
    %4856 = vmatpush1.bf16.msra.mxu0 %v3318
    %4857 = vmatprep.subr.bf16.mxu0 %v3321
    %4858 = vmatpush1.bf16.msra.mxu0 %v3320
    %4859 = vmatprep.subr.bf16.mxu0 %v3323
    %4860 = vmatpush1.bf16.msra.mxu0 %v3322
    %4861 = vmatprep.subr.bf16.mxu0 %v3325
    %4862 = vmatpush1.bf16.msra.mxu0 %v3324
    %4863 = vmatprep.subr.bf16.mxu0 %v3327
    %4864 = vmatpush1.bf16.msra.mxu0 %v3326
    %4865 = vmatprep.subr.bf16.mxu0 %v3329
    %4866 = vmatpush1.bf16.msra.mxu0 %v3328
    %4867 = vmatprep.subr.bf16.mxu0 %v3331
    %4868 = vmatpush1.bf16.msra.mxu0 %v3330
    %4869 = vmatprep.subr.bf16.mxu0 %v3333
    %4870 = vmatpush1.bf16.msra.mxu0 %v3332
    %4871 = vmatprep.subr.bf16.mxu0 %v3335
    %4872 = vmatpush1.bf16.msra.mxu0 %v3334
    %4873 = vmatprep.mubr.bf16.mxu0 %v120
    %4874 = vmatmul.mubr.bf16.gmra.mrb[0].mxu0 %v119
    %v4875 = vpop.f32.mrb[0].mxu0
    %v4876 = vadd.f32 %v4835, %v4875
    %v4877 = vpop.f32.mrb[0].mxu0
    %v4878 = vadd.f32 %v4837, %v4877
    %v4879 = vpop.f32.mrb[0].mxu0
    %v4880 = vpop.f32.mrb[0].mxu0
    %4881 = vdwg.mxu0
    %4882 = vmatprep.subr.bf16.mxu0 %v3337
    %4883 = vmatpush1.bf16.msra.mxu0 %v3336
    %4884 = vmatprep.subr.bf16.mxu0 %v3339
    %4885 = vmatpush1.bf16.msra.mxu0 %v3338
    %4886 = vmatprep.subr.bf16.mxu0 %v3341
    %4887 = vmatpush1.bf16.msra.mxu0 %v3340
    %4888 = vmatprep.subr.bf16.mxu0 %v3343
    %4889 = vmatpush1.bf16.msra.mxu0 %v3342
    %4890 = vmatprep.subr.bf16.mxu0 %v3345
    %4891 = vmatpush1.bf16.msra.mxu0 %v3344
    %4892 = vmatprep.subr.bf16.mxu0 %v3347
    %4893 = vmatpush1.bf16.msra.mxu0 %v3346
    %4894 = vmatprep.subr.bf16.mxu0 %v3349
    %4895 = vmatpush1.bf16.msra.mxu0 %v3348
    %4896 = vmatprep.subr.bf16.mxu0 %v3351
    %4897 = vmatpush1.bf16.msra.mxu0 %v3350
    %4898 = vmatprep.subr.bf16.mxu0 %v3353
    %4899 = vmatpush1.bf16.msra.mxu0 %v3352
    %4900 = vmatprep.subr.bf16.mxu0 %v3355
    %4901 = vmatpush1.bf16.msra.mxu0 %v3354
    %4902 = vmatprep.subr.bf16.mxu0 %v3357
    %4903 = vmatpush1.bf16.msra.mxu0 %v3356
    %4904 = vmatprep.subr.bf16.mxu0 %v3359
    %4905 = vmatpush1.bf16.msra.mxu0 %v3358
    %4906 = vmatprep.subr.bf16.mxu0 %v3361
    %4907 = vmatpush1.bf16.msra.mxu0 %v3360
    %4908 = vmatprep.subr.bf16.mxu0 %v3363
    %4909 = vmatpush1.bf16.msra.mxu0 %v3362
    %4910 = vmatprep.subr.bf16.mxu0 %v3365
    %4911 = vmatpush1.bf16.msra.mxu0 %v3364
    %4912 = vmatprep.subr.bf16.mxu0 %v3367
    %4913 = vmatpush1.bf16.msra.mxu0 %v3366
    %4914 = vmatprep.mubr.bf16.mxu0 %v122
    %4915 = vmatmul.mubr.bf16.gmra.mrb[0].mxu0 %v121
    %v4916 = vpop.f32.mrb[0].mxu0
    %v4917 = vadd.f32 %v4876, %v4916
    %v4918 = vpop.f32.mrb[0].mxu0
    %v4919 = vadd.f32 %v4878, %v4918
    %v4920 = vpop.f32.mrb[0].mxu0
    %v4921 = vpop.f32.mrb[0].mxu0
    %4922 = vdwg.mxu0
    %4923 = vmatprep.subr.bf16.mxu0 %v3369
    %4924 = vmatpush1.bf16.msra.mxu0 %v3368
    %4925 = vmatprep.subr.bf16.mxu0 %v3371
    %4926 = vmatpush1.bf16.msra.mxu0 %v3370
    %4927 = vmatprep.subr.bf16.mxu0 %v3373
    %4928 = vmatpush1.bf16.msra.mxu0 %v3372
    %4929 = vmatprep.subr.bf16.mxu0 %v3375
    %4930 = vmatpush1.bf16.msra.mxu0 %v3374
    %4931 = vmatprep.subr.bf16.mxu0 %v3377
    %4932 = vmatpush1.bf16.msra.mxu0 %v3376
    %4933 = vmatprep.subr.bf16.mxu0 %v3379
    %4934 = vmatpush1.bf16.msra.mxu0 %v3378
    %4935 = vmatprep.subr.bf16.mxu0 %v3381
    %4936 = vmatpush1.bf16.msra.mxu0 %v3380
    %4937 = vmatprep.subr.bf16.mxu0 %v3383
    %4938 = vmatpush1.bf16.msra.mxu0 %v3382
    %4939 = vmatprep.subr.bf16.mxu0 %v3385
    %4940 = vmatpush1.bf16.msra.mxu0 %v3384
    %4941 = vmatprep.subr.bf16.mxu0 %v3387
    %4942 = vmatpush1.bf16.msra.mxu0 %v3386
    %4943 = vmatprep.subr.bf16.mxu0 %v3389
    %4944 = vmatpush1.bf16.msra.mxu0 %v3388
    %4945 = vmatprep.subr.bf16.mxu0 %v3391
    %4946 = vmatpush1.bf16.msra.mxu0 %v3390
    %4947 = vmatprep.subr.bf16.mxu0 %v3393
    %4948 = vmatpush1.bf16.msra.mxu0 %v3392
    %4949 = vmatprep.subr.bf16.mxu0 %v3395
    %4950 = vmatpush1.bf16.msra.mxu0 %v3394
    %4951 = vmatprep.subr.bf16.mxu0 %v3397
    %4952 = vmatpush1.bf16.msra.mxu0 %v3396
    %4953 = vmatprep.subr.bf16.mxu0 %v3399
    %4954 = vmatpush1.bf16.msra.mxu0 %v3398
    %4955 = vmatprep.mubr.bf16.mxu0 %v124
    %4956 = vmatmul.mubr.bf16.gmra.mrb[0].mxu0 %v123
    %v4957 = vpop.f32.mrb[0].mxu0
    %v4958 = vadd.f32 %v4917, %v4957
    %v4959 = vpop.f32.mrb[0].mxu0
    %v4960 = vadd.f32 %v4919, %v4959
    %v4961 = vpop.f32.mrb[0].mxu0
    %v4962 = vpop.f32.mrb[0].mxu0
    %4963 = vdwg.mxu0
    %4964 = vmatprep.subr.bf16.mxu0 %v3401
    %4965 = vmatpush1.bf16.msra.mxu0 %v3400
    %4966 = vmatprep.subr.bf16.mxu0 %v3403
    %4967 = vmatpush1.bf16.msra.mxu0 %v3402
    %4968 = vmatprep.subr.bf16.mxu0 %v3405
    %4969 = vmatpush1.bf16.msra.mxu0 %v3404
    %4970 = vmatprep.subr.bf16.mxu0 %v3407
    %4971 = vmatpush1.bf16.msra.mxu0 %v3406
    %4972 = vmatprep.subr.bf16.mxu0 %v3409
    %4973 = vmatpush1.bf16.msra.mxu0 %v3408
    %4974 = vmatprep.subr.bf16.mxu0 %v3411
    %4975 = vmatpush1.bf16.msra.mxu0 %v3410
    %4976 = vmatprep.subr.bf16.mxu0 %v3413
    %4977 = vmatpush1.bf16.msra.mxu0 %v3412
    %4978 = vmatprep.subr.bf16.mxu0 %v3415
    %4979 = vmatpush1.bf16.msra.mxu0 %v3414
    %4980 = vmatprep.subr.bf16.mxu0 %v3417
    %4981 = vmatpush1.bf16.msra.mxu0 %v3416
    %4982 = vmatprep.subr.bf16.mxu0 %v3419
    %4983 = vmatpush1.bf16.msra.mxu0 %v3418
    %4984 = vmatprep.subr.bf16.mxu0 %v3421
    %4985 = vmatpush1.bf16.msra.mxu0 %v3420
    %4986 = vmatprep.subr.bf16.mxu0 %v3423
    %4987 = vmatpush1.bf16.msra.mxu0 %v3422
    %4988 = vmatprep.subr.bf16.mxu0 %v3425
    %4989 = vmatpush1.bf16.msra.mxu0 %v3424
    %4990 = vmatprep.subr.bf16.mxu0 %v3427
    %4991 = vmatpush1.bf16.msra.mxu0 %v3426
    %4992 = vmatprep.subr.bf16.mxu0 %v3429
    %4993 = vmatpush1.bf16.msra.mxu0 %v3428
    %4994 = vmatprep.subr.bf16.mxu0 %v3431
    %4995 = vmatpush1.bf16.msra.mxu0 %v3430
    %4996 = vmatprep.mubr.bf16.mxu0 %v126
    %4997 = vmatmul.mubr.bf16.gmra.mrb[0].mxu0 %v125
    %v4998 = vpop.f32.mrb[0].mxu0
    %v4999 = vadd.f32 %v4958, %v4998
    %v5000 = vpop.f32.mrb[0].mxu0
    %v5001 = vadd.f32 %v4960, %v5000
    %v5002 = vpop.f32.mrb[0].mxu0
    %v5003 = vpop.f32.mrb[0].mxu0
    %5004 = vdwg.mxu0
    %5005 = vmatprep.subr.bf16.mxu0 %v3433
    %5006 = vmatpush1.bf16.msra.mxu0 %v3432
    %5007 = vmatprep.subr.bf16.mxu0 %v3435
    %5008 = vmatpush1.bf16.msra.mxu0 %v3434
    %5009 = vmatprep.subr.bf16.mxu0 %v3437
    %5010 = vmatpush1.bf16.msra.mxu0 %v3436
    %5011 = vmatprep.subr.bf16.mxu0 %v3439
    %5012 = vmatpush1.bf16.msra.mxu0 %v3438
    %5013 = vmatprep.subr.bf16.mxu0 %v3441
    %5014 = vmatpush1.bf16.msra.mxu0 %v3440
    %5015 = vmatprep.subr.bf16.mxu0 %v3443
    %5016 = vmatpush1.bf16.msra.mxu0 %v3442
    %5017 = vmatprep.subr.bf16.mxu0 %v3445
    %5018 = vmatpush1.bf16.msra.mxu0 %v3444
    %5019 = vmatprep.subr.bf16.mxu0 %v3447
    %5020 = vmatpush1.bf16.msra.mxu0 %v3446
    %5021 = vmatprep.subr.bf16.mxu0 %v3449
    %5022 = vmatpush1.bf16.msra.mxu0 %v3448
    %5023 = vmatprep.subr.bf16.mxu0 %v3451
    %5024 = vmatpush1.bf16.msra.mxu0 %v3450
    %5025 = vmatprep.subr.bf16.mxu0 %v3453
    %5026 = vmatpush1.bf16.msra.mxu0 %v3452
    %5027 = vmatprep.subr.bf16.mxu0 %v3455
    %5028 = vmatpush1.bf16.msra.mxu0 %v3454
    %5029 = vmatprep.subr.bf16.mxu0 %v3457
    %5030 = vmatpush1.bf16.msra.mxu0 %v3456
    %5031 = vmatprep.subr.bf16.mxu0 %v3459
    %5032 = vmatpush1.bf16.msra.mxu0 %v3458
    %5033 = vmatprep.subr.bf16.mxu0 %v3461
    %5034 = vmatpush1.bf16.msra.mxu0 %v3460
    %5035 = vmatprep.subr.bf16.mxu0 %v3463
    %5036 = vmatpush1.bf16.msra.mxu0 %v3462
    %5037 = vmatprep.mubr.bf16.mxu0 %v128
    %5038 = vmatmul.mubr.bf16.gmra.mrb[0].mxu0 %v127
    %v5039 = vpop.f32.mrb[0].mxu0
    %v5040 = vadd.f32 %v4999, %v5039
    %v5041 = vpop.f32.mrb[0].mxu0
    %v5042 = vadd.f32 %v5001, %v5041
    %v5043 = vpop.f32.mrb[0].mxu0
    %v5044 = vpop.f32.mrb[0].mxu0
    %5045 = vdwg.mxu0
    %5046 = vmatprep.subr.bf16.mxu0 %v3465
    %5047 = vmatpush1.bf16.msra.mxu0 %v3464
    %5048 = vmatprep.subr.bf16.mxu0 %v3467
    %5049 = vmatpush1.bf16.msra.mxu0 %v3466
    %5050 = vmatprep.subr.bf16.mxu0 %v3469
    %5051 = vmatpush1.bf16.msra.mxu0 %v3468
    %5052 = vmatprep.subr.bf16.mxu0 %v3471
    %5053 = vmatpush1.bf16.msra.mxu0 %v3470
    %5054 = vmatprep.subr.bf16.mxu0 %v3473
    %5055 = vmatpush1.bf16.msra.mxu0 %v3472
    %5056 = vmatprep.subr.bf16.mxu0 %v3475
    %5057 = vmatpush1.bf16.msra.mxu0 %v3474
    %5058 = vmatprep.subr.bf16.mxu0 %v3477
    %5059 = vmatpush1.bf16.msra.mxu0 %v3476
    %5060 = vmatprep.subr.bf16.mxu0 %v3479
    %5061 = vmatpush1.bf16.msra.mxu0 %v3478
    %5062 = vmatprep.subr.bf16.mxu0 %v3481
    %5063 = vmatpush1.bf16.msra.mxu0 %v3480
    %5064 = vmatprep.subr.bf16.mxu0 %v3483
    %5065 = vmatpush1.bf16.msra.mxu0 %v3482
    %5066 = vmatprep.subr.bf16.mxu0 %v3485
    %5067 = vmatpush1.bf16.msra.mxu0 %v3484
    %5068 = vmatprep.subr.bf16.mxu0 %v3487
    %5069 = vmatpush1.bf16.msra.mxu0 %v3486
    %5070 = vmatprep.subr.bf16.mxu0 %v3489
    %5071 = vmatpush1.bf16.msra.mxu0 %v3488
    %5072 = vmatprep.subr.bf16.mxu0 %v3491
    %5073 = vmatpush1.bf16.msra.mxu0 %v3490
    %5074 = vmatprep.subr.bf16.mxu0 %v3493
    %5075 = vmatpush1.bf16.msra.mxu0 %v3492
    %5076 = vmatprep.subr.bf16.mxu0 %v3495
    %5077 = vmatpush1.bf16.msra.mxu0 %v3494
    %5078 = vmatprep.mubr.bf16.mxu0 %v130
    %5079 = vmatmul.mubr.bf16.gmra.mrb[0].mxu0 %v129
    %v5080 = vpop.f32.mrb[0].mxu0
    %v5081 = vadd.f32 %v5040, %v5080
    %v5082 = vpop.f32.mrb[0].mxu0
    %v5083 = vadd.f32 %v5042, %v5082
    %v5084 = vpop.f32.mrb[0].mxu0
    %v5085 = vpop.f32.mrb[0].mxu0
    %5086 = vdwg.mxu0
    %5087 = vmatprep.subr.bf16.mxu0 %v3497
    %5088 = vmatpush1.bf16.msra.mxu0 %v3496
    %5089 = vmatprep.subr.bf16.mxu0 %v3499
    %5090 = vmatpush1.bf16.msra.mxu0 %v3498
    %5091 = vmatprep.subr.bf16.mxu0 %v3501
    %5092 = vmatpush1.bf16.msra.mxu0 %v3500
    %5093 = vmatprep.subr.bf16.mxu0 %v3503
    %5094 = vmatpush1.bf16.msra.mxu0 %v3502
    %5095 = vmatprep.subr.bf16.mxu0 %v3505
    %5096 = vmatpush1.bf16.msra.mxu0 %v3504
    %5097 = vmatprep.subr.bf16.mxu0 %v3507
    %5098 = vmatpush1.bf16.msra.mxu0 %v3506
    %5099 = vmatprep.subr.bf16.mxu0 %v3509
    %5100 = vmatpush1.bf16.msra.mxu0 %v3508
    %5101 = vmatprep.subr.bf16.mxu0 %v3511
    %5102 = vmatpush1.bf16.msra.mxu0 %v3510
    %5103 = vmatprep.subr.bf16.mxu0 %v3513
    %5104 = vmatpush1.bf16.msra.mxu0 %v3512
    %5105 = vmatprep.subr.bf16.mxu0 %v3515
    %5106 = vmatpush1.bf16.msra.mxu0 %v3514
    %5107 = vmatprep.subr.bf16.mxu0 %v3517
    %5108 = vmatpush1.bf16.msra.mxu0 %v3516
    %5109 = vmatprep.subr.bf16.mxu0 %v3519
    %5110 = vmatpush1.bf16.msra.mxu0 %v3518
    %5111 = vmatprep.subr.bf16.mxu0 %v3521
    %5112 = vmatpush1.bf16.msra.mxu0 %v3520
    %5113 = vmatprep.subr.bf16.mxu0 %v3523
    %5114 = vmatpush1.bf16.msra.mxu0 %v3522
    %5115 = vmatprep.subr.bf16.mxu0 %v3525
    %5116 = vmatpush1.bf16.msra.mxu0 %v3524
    %5117 = vmatprep.subr.bf16.mxu0 %v3527
    %5118 = vmatpush1.bf16.msra.mxu0 %v3526
    %5119 = vmatprep.mubr.bf16.mxu0 %v132
    %5120 = vmatmul.mubr.bf16.gmra.mrb[0].mxu0 %v131
    %v5121 = vpop.f32.mrb[0].mxu0
    %v5122 = vadd.f32 %v5081, %v5121
    %v5123 = vpop.f32.mrb[0].mxu0
    %v5124 = vadd.f32 %v5083, %v5123
    %v5125 = vpop.f32.mrb[0].mxu0
    %v5126 = vpop.f32.mrb[0].mxu0
    %5127 = vdwg.mxu0
    %5128 = vmatprep.subr.bf16.mxu0 %v3529
    %5129 = vmatpush1.bf16.msra.mxu0 %v3528
    %5130 = vmatprep.subr.bf16.mxu0 %v3531
    %5131 = vmatpush1.bf16.msra.mxu0 %v3530
    %5132 = vmatprep.subr.bf16.mxu0 %v3533
    %5133 = vmatpush1.bf16.msra.mxu0 %v3532
    %5134 = vmatprep.subr.bf16.mxu0 %v3535
    %5135 = vmatpush1.bf16.msra.mxu0 %v3534
    %5136 = vmatprep.subr.bf16.mxu0 %v3537
    %5137 = vmatpush1.bf16.msra.mxu0 %v3536
    %5138 = vmatprep.subr.bf16.mxu0 %v3539
    %5139 = vmatpush1.bf16.msra.mxu0 %v3538
    %5140 = vmatprep.subr.bf16.mxu0 %v3541
    %5141 = vmatpush1.bf16.msra.mxu0 %v3540
    %5142 = vmatprep.subr.bf16.mxu0 %v3543
    %5143 = vmatpush1.bf16.msra.mxu0 %v3542
    %5144 = vmatprep.subr.bf16.mxu0 %v3545
    %5145 = vmatpush1.bf16.msra.mxu0 %v3544
    %5146 = vmatprep.subr.bf16.mxu0 %v3547
    %5147 = vmatpush1.bf16.msra.mxu0 %v3546
    %5148 = vmatprep.subr.bf16.mxu0 %v3549
    %5149 = vmatpush1.bf16.msra.mxu0 %v3548
    %5150 = vmatprep.subr.bf16.mxu0 %v3551
    %5151 = vmatpush1.bf16.msra.mxu0 %v3550
    %5152 = vmatprep.subr.bf16.mxu0 %v3553
    %5153 = vmatpush1.bf16.msra.mxu0 %v3552
    %5154 = vmatprep.subr.bf16.mxu0 %v3555
    %5155 = vmatpush1.bf16.msra.mxu0 %v3554
    %5156 = vmatprep.subr.bf16.mxu0 %v3557
    %5157 = vmatpush1.bf16.msra.mxu0 %v3556
    %5158 = vmatprep.subr.bf16.mxu0 %v3559
    %5159 = vmatpush1.bf16.msra.mxu0 %v3558
    %5160 = vmatprep.mubr.bf16.mxu0 %v134
    %5161 = vmatmul.mubr.bf16.gmra.mrb[0].mxu0 %v133
    %v5162 = vpop.f32.mrb[0].mxu0
    %v5163 = vadd.f32 %v5122, %v5162
    %v5164 = vpop.f32.mrb[0].mxu0
    %v5165 = vadd.f32 %v5124, %v5164
    %v5166 = vpop.f32.mrb[0].mxu0
    %v5167 = vpop.f32.mrb[0].mxu0
    %5168 = vdwg.mxu0
    %5169 = vmatprep.subr.bf16.mxu0 %v3561
    %5170 = vmatpush1.bf16.msra.mxu0 %v3560
    %5171 = vmatprep.subr.bf16.mxu0 %v3563
    %5172 = vmatpush1.bf16.msra.mxu0 %v3562
    %5173 = vmatprep.subr.bf16.mxu0 %v3565
    %5174 = vmatpush1.bf16.msra.mxu0 %v3564
    %5175 = vmatprep.subr.bf16.mxu0 %v3567
    %5176 = vmatpush1.bf16.msra.mxu0 %v3566
    %5177 = vmatprep.subr.bf16.mxu0 %v3569
    %5178 = vmatpush1.bf16.msra.mxu0 %v3568
    %5179 = vmatprep.subr.bf16.mxu0 %v3571
    %5180 = vmatpush1.bf16.msra.mxu0 %v3570
    %5181 = vmatprep.subr.bf16.mxu0 %v3573
    %5182 = vmatpush1.bf16.msra.mxu0 %v3572
    %5183 = vmatprep.subr.bf16.mxu0 %v3575
    %5184 = vmatpush1.bf16.msra.mxu0 %v3574
    %5185 = vmatprep.subr.bf16.mxu0 %v3577
    %5186 = vmatpush1.bf16.msra.mxu0 %v3576
    %5187 = vmatprep.subr.bf16.mxu0 %v3579
    %5188 = vmatpush1.bf16.msra.mxu0 %v3578
    %5189 = vmatprep.subr.bf16.mxu0 %v3581
    %5190 = vmatpush1.bf16.msra.mxu0 %v3580
    %5191 = vmatprep.subr.bf16.mxu0 %v3583
    %5192 = vmatpush1.bf16.msra.mxu0 %v3582
    %5193 = vmatprep.subr.bf16.mxu0 %v3585
    %5194 = vmatpush1.bf16.msra.mxu0 %v3584
    %5195 = vmatprep.subr.bf16.mxu0 %v3587
    %5196 = vmatpush1.bf16.msra.mxu0 %v3586
    %5197 = vmatprep.subr.bf16.mxu0 %v3589
    %5198 = vmatpush1.bf16.msra.mxu0 %v3588
    %5199 = vmatprep.subr.bf16.mxu0 %v3591
    %5200 = vmatpush1.bf16.msra.mxu0 %v3590
    %5201 = vmatprep.mubr.bf16.mxu0 %v136
    %5202 = vmatmul.mubr.bf16.gmra.mrb[0].mxu0 %v135
    %v5203 = vpop.f32.mrb[0].mxu0
    %v5204 = vadd.f32 %v5163, %v5203
    %v5205 = vpop.f32.mrb[0].mxu0
    %v5206 = vadd.f32 %v5165, %v5205
    %v5207 = vpop.f32.mrb[0].mxu0
    %v5208 = vpop.f32.mrb[0].mxu0
    %5209 = vdwg.mxu0
    %5210 = vmatprep.subr.bf16.mxu0 %v3593
    %5211 = vmatpush1.bf16.msra.mxu0 %v3592
    %5212 = vmatprep.subr.bf16.mxu0 %v3595
    %5213 = vmatpush1.bf16.msra.mxu0 %v3594
    %5214 = vmatprep.subr.bf16.mxu0 %v3597
    %5215 = vmatpush1.bf16.msra.mxu0 %v3596
    %5216 = vmatprep.subr.bf16.mxu0 %v3599
    %5217 = vmatpush1.bf16.msra.mxu0 %v3598
    %5218 = vmatprep.subr.bf16.mxu0 %v3601
    %5219 = vmatpush1.bf16.msra.mxu0 %v3600
    %5220 = vmatprep.subr.bf16.mxu0 %v3603
    %5221 = vmatpush1.bf16.msra.mxu0 %v3602
    %5222 = vmatprep.subr.bf16.mxu0 %v3605
    %5223 = vmatpush1.bf16.msra.mxu0 %v3604
    %5224 = vmatprep.subr.bf16.mxu0 %v3607
    %5225 = vmatpush1.bf16.msra.mxu0 %v3606
    %5226 = vmatprep.subr.bf16.mxu0 %v3609
    %5227 = vmatpush1.bf16.msra.mxu0 %v3608
    %5228 = vmatprep.subr.bf16.mxu0 %v3611
    %5229 = vmatpush1.bf16.msra.mxu0 %v3610
    %5230 = vmatprep.subr.bf16.mxu0 %v3613
    %5231 = vmatpush1.bf16.msra.mxu0 %v3612
    %5232 = vmatprep.subr.bf16.mxu0 %v3615
    %5233 = vmatpush1.bf16.msra.mxu0 %v3614
    %5234 = vmatprep.subr.bf16.mxu0 %v3617
    %5235 = vmatpush1.bf16.msra.mxu0 %v3616
    %5236 = vmatprep.subr.bf16.mxu0 %v3619
    %5237 = vmatpush1.bf16.msra.mxu0 %v3618
    %5238 = vmatprep.subr.bf16.mxu0 %v3621
    %5239 = vmatpush1.bf16.msra.mxu0 %v3620
    %5240 = vmatprep.subr.bf16.mxu0 %v3623
    %5241 = vmatpush1.bf16.msra.mxu0 %v3622
    %5242 = vmatprep.mubr.bf16.mxu0 %v138
    %5243 = vmatmul.mubr.bf16.gmra.mrb[0].mxu0 %v137
    %v5244 = vpop.f32.mrb[0].mxu0
    %v5245 = vadd.f32 %v5204, %v5244
    %v5246 = vpop.f32.mrb[0].mxu0
    %v5247 = vadd.f32 %v5206, %v5246
    %v5248 = vpop.f32.mrb[0].mxu0
    %v5249 = vpop.f32.mrb[0].mxu0
    %5250 = vdwg.mxu0
    %5251 = vmatprep.subr.bf16.mxu0 %v3625
    %5252 = vmatpush1.bf16.msra.mxu0 %v3624
    %5253 = vmatprep.subr.bf16.mxu0 %v3627
    %5254 = vmatpush1.bf16.msra.mxu0 %v3626
    %5255 = vmatprep.subr.bf16.mxu0 %v3629
    %5256 = vmatpush1.bf16.msra.mxu0 %v3628
    %5257 = vmatprep.subr.bf16.mxu0 %v3631
    %5258 = vmatpush1.bf16.msra.mxu0 %v3630
    %5259 = vmatprep.subr.bf16.mxu0 %v3633
    %5260 = vmatpush1.bf16.msra.mxu0 %v3632
    %5261 = vmatprep.subr.bf16.mxu0 %v3635
    %5262 = vmatpush1.bf16.msra.mxu0 %v3634
    %5263 = vmatprep.subr.bf16.mxu0 %v3637
    %5264 = vmatpush1.bf16.msra.mxu0 %v3636
    %5265 = vmatprep.subr.bf16.mxu0 %v3639
    %5266 = vmatpush1.bf16.msra.mxu0 %v3638
    %5267 = vmatprep.subr.bf16.mxu0 %v3641
    %5268 = vmatpush1.bf16.msra.mxu0 %v3640
    %5269 = vmatprep.subr.bf16.mxu0 %v3643
    %5270 = vmatpush1.bf16.msra.mxu0 %v3642
    %5271 = vmatprep.subr.bf16.mxu0 %v3645
    %5272 = vmatpush1.bf16.msra.mxu0 %v3644
    %5273 = vmatprep.subr.bf16.mxu0 %v3647
    %5274 = vmatpush1.bf16.msra.mxu0 %v3646
    %5275 = vmatprep.subr.bf16.mxu0 %v3649
    %5276 = vmatpush1.bf16.msra.mxu0 %v3648
    %5277 = vmatprep.subr.bf16.mxu0 %v3651
    %5278 = vmatpush1.bf16.msra.mxu0 %v3650
    %5279 = vmatprep.subr.bf16.mxu0 %v3653
    %5280 = vmatpush1.bf16.msra.mxu0 %v3652
    %5281 = vmatprep.subr.bf16.mxu0 %v3655
    %5282 = vmatpush1.bf16.msra.mxu0 %v3654
    %5283 = vmatprep.mubr.bf16.mxu0 %v140
    %5284 = vmatmul.mubr.bf16.gmra.mrb[0].mxu0 %v139
    %v5285 = vpop.f32.mrb[0].mxu0
    %v5286 = vadd.f32 %v5245, %v5285
    %v5287 = vpop.f32.mrb[0].mxu0
    %v5288 = vadd.f32 %v5247, %v5287
    %v5289 = vpop.f32.mrb[0].mxu0
    %v5290 = vpop.f32.mrb[0].mxu0
    %5291 = vdwg.mxu0
    %5292 = vmatprep.subr.bf16.mxu0 %v3657
    %5293 = vmatpush1.bf16.msra.mxu0 %v3656
    %5294 = vmatprep.subr.bf16.mxu0 %v3659
    %5295 = vmatpush1.bf16.msra.mxu0 %v3658
    %5296 = vmatprep.subr.bf16.mxu0 %v3661
    %5297 = vmatpush1.bf16.msra.mxu0 %v3660
    %5298 = vmatprep.subr.bf16.mxu0 %v3663
    %5299 = vmatpush1.bf16.msra.mxu0 %v3662
    %5300 = vmatprep.subr.bf16.mxu0 %v3665
    %5301 = vmatpush1.bf16.msra.mxu0 %v3664
    %5302 = vmatprep.subr.bf16.mxu0 %v3667
    %5303 = vmatpush1.bf16.msra.mxu0 %v3666
    %5304 = vmatprep.subr.bf16.mxu0 %v3669
    %5305 = vmatpush1.bf16.msra.mxu0 %v3668
    %5306 = vmatprep.subr.bf16.mxu0 %v3671
    %5307 = vmatpush1.bf16.msra.mxu0 %v3670
    %5308 = vmatprep.subr.bf16.mxu0 %v3673
    %5309 = vmatpush1.bf16.msra.mxu0 %v3672
    %5310 = vmatprep.subr.bf16.mxu0 %v3675
    %5311 = vmatpush1.bf16.msra.mxu0 %v3674
    %5312 = vmatprep.subr.bf16.mxu0 %v3677
    %5313 = vmatpush1.bf16.msra.mxu0 %v3676
    %5314 = vmatprep.subr.bf16.mxu0 %v3679
    %5315 = vmatpush1.bf16.msra.mxu0 %v3678
    %5316 = vmatprep.subr.bf16.mxu0 %v3681
    %5317 = vmatpush1.bf16.msra.mxu0 %v3680
    %5318 = vmatprep.subr.bf16.mxu0 %v3683
    %5319 = vmatpush1.bf16.msra.mxu0 %v3682
    %5320 = vmatprep.subr.bf16.mxu0 %v3685
    %5321 = vmatpush1.bf16.msra.mxu0 %v3684
    %5322 = vmatprep.subr.bf16.mxu0 %v3687
    %5323 = vmatpush1.bf16.msra.mxu0 %v3686
    %5324 = vmatprep.mubr.bf16.mxu0 %v142
    %5325 = vmatmul.mubr.bf16.gmra.mrb[0].mxu0 %v141
    %v5326 = vpop.f32.mrb[0].mxu0
    %v5327 = vadd.f32 %v5286, %v5326
    %v5328 = vpop.f32.mrb[0].mxu0
    %v5329 = vadd.f32 %v5288, %v5328
    %v5330 = vpop.f32.mrb[0].mxu0
    %v5331 = vpop.f32.mrb[0].mxu0
    %5332 = vdwg.mxu0
    %5333 = vmatprep.subr.bf16.mxu0 %v3689
    %5334 = vmatpush1.bf16.msra.mxu0 %v3688
    %5335 = vmatprep.subr.bf16.mxu0 %v3691
    %5336 = vmatpush1.bf16.msra.mxu0 %v3690
    %5337 = vmatprep.subr.bf16.mxu0 %v3693
    %5338 = vmatpush1.bf16.msra.mxu0 %v3692
    %5339 = vmatprep.subr.bf16.mxu0 %v3695
    %5340 = vmatpush1.bf16.msra.mxu0 %v3694
    %5341 = vmatprep.subr.bf16.mxu0 %v3697
    %5342 = vmatpush1.bf16.msra.mxu0 %v3696
    %5343 = vmatprep.subr.bf16.mxu0 %v3699
    %5344 = vmatpush1.bf16.msra.mxu0 %v3698
    %5345 = vmatprep.subr.bf16.mxu0 %v3701
    %5346 = vmatpush1.bf16.msra.mxu0 %v3700
    %5347 = vmatprep.subr.bf16.mxu0 %v3703
    %5348 = vmatpush1.bf16.msra.mxu0 %v3702
    %5349 = vmatprep.subr.bf16.mxu0 %v3705
    %5350 = vmatpush1.bf16.msra.mxu0 %v3704
    %5351 = vmatprep.subr.bf16.mxu0 %v3707
    %5352 = vmatpush1.bf16.msra.mxu0 %v3706
    %5353 = vmatprep.subr.bf16.mxu0 %v3709
    %5354 = vmatpush1.bf16.msra.mxu0 %v3708
    %5355 = vmatprep.subr.bf16.mxu0 %v3711
    %5356 = vmatpush1.bf16.msra.mxu0 %v3710
    %5357 = vmatprep.subr.bf16.mxu0 %v3713
    %5358 = vmatpush1.bf16.msra.mxu0 %v3712
    %5359 = vmatprep.subr.bf16.mxu0 %v3715
    %5360 = vmatpush1.bf16.msra.mxu0 %v3714
    %5361 = vmatprep.subr.bf16.mxu0 %v3717
    %5362 = vmatpush1.bf16.msra.mxu0 %v3716
    %5363 = vmatprep.subr.bf16.mxu0 %v3719
    %5364 = vmatpush1.bf16.msra.mxu0 %v3718
    %5365 = vmatprep.mubr.bf16.mxu0 %v144
    %5366 = vmatmul.mubr.bf16.gmra.mrb[0].mxu0 %v143
    %v5367 = vpop.f32.mrb[0].mxu0
    %v5368 = vadd.f32 %v5327, %v5367
    %v5369 = vpop.f32.mrb[0].mxu0
    %v5370 = vadd.f32 %v5329, %v5369
    %v5371 = vpop.f32.mrb[0].mxu0
    %v5372 = vpop.f32.mrb[0].mxu0
    %5373 = vdwg.mxu0
    %5374 = vmatprep.subr.bf16.mxu0 %v3721
    %5375 = vmatpush1.bf16.msra.mxu0 %v3720
    %5376 = vmatprep.subr.bf16.mxu0 %v3723
    %5377 = vmatpush1.bf16.msra.mxu0 %v3722
    %5378 = vmatprep.subr.bf16.mxu0 %v3725
    %5379 = vmatpush1.bf16.msra.mxu0 %v3724
    %5380 = vmatprep.subr.bf16.mxu0 %v3727
    %5381 = vmatpush1.bf16.msra.mxu0 %v3726
    %5382 = vmatprep.subr.bf16.mxu0 %v3729
    %5383 = vmatpush1.bf16.msra.mxu0 %v3728
    %5384 = vmatprep.subr.bf16.mxu0 %v3731
    %5385 = vmatpush1.bf16.msra.mxu0 %v3730
    %5386 = vmatprep.subr.bf16.mxu0 %v3733
    %5387 = vmatpush1.bf16.msra.mxu0 %v3732
    %5388 = vmatprep.subr.bf16.mxu0 %v3735
    %5389 = vmatpush1.bf16.msra.mxu0 %v3734
    %5390 = vmatprep.subr.bf16.mxu0 %v3737
    %5391 = vmatpush1.bf16.msra.mxu0 %v3736
    %5392 = vmatprep.subr.bf16.mxu0 %v3739
    %5393 = vmatpush1.bf16.msra.mxu0 %v3738
    %5394 = vmatprep.subr.bf16.mxu0 %v3741
    %5395 = vmatpush1.bf16.msra.mxu0 %v3740
    %5396 = vmatprep.subr.bf16.mxu0 %v3743
    %5397 = vmatpush1.bf16.msra.mxu0 %v3742
    %5398 = vmatprep.subr.bf16.mxu0 %v3745
    %5399 = vmatpush1.bf16.msra.mxu0 %v3744
    %5400 = vmatprep.subr.bf16.mxu0 %v3747
    %5401 = vmatpush1.bf16.msra.mxu0 %v3746
    %5402 = vmatprep.subr.bf16.mxu0 %v3749
    %5403 = vmatpush1.bf16.msra.mxu0 %v3748
    %5404 = vmatprep.subr.bf16.mxu0 %v3751
    %5405 = vmatpush1.bf16.msra.mxu0 %v3750
    %5406 = vmatprep.mubr.bf16.mxu0 %v146
    %5407 = vmatmul.mubr.bf16.gmra.mrb[0].mxu0 %v145
    %v5408 = vpop.f32.mrb[0].mxu0
    %v5409 = vadd.f32 %v5368, %v5408
    %v5410 = vpop.f32.mrb[0].mxu0
    %v5411 = vadd.f32 %v5370, %v5410
    %v5412 = vpop.f32.mrb[0].mxu0
    %v5413 = vpop.f32.mrb[0].mxu0
    %5414 = vdwg.mxu0
    %5415 = vmatprep.subr.bf16.mxu0 %v3753
    %5416 = vmatpush1.bf16.msra.mxu0 %v3752
    %5417 = vmatprep.subr.bf16.mxu0 %v3755
    %5418 = vmatpush1.bf16.msra.mxu0 %v3754
    %5419 = vmatprep.subr.bf16.mxu0 %v3757
    %5420 = vmatpush1.bf16.msra.mxu0 %v3756
    %5421 = vmatprep.subr.bf16.mxu0 %v3759
    %5422 = vmatpush1.bf16.msra.mxu0 %v3758
    %5423 = vmatprep.subr.bf16.mxu0 %v3761
    %5424 = vmatpush1.bf16.msra.mxu0 %v3760
    %5425 = vmatprep.subr.bf16.mxu0 %v3763
    %5426 = vmatpush1.bf16.msra.mxu0 %v3762
    %5427 = vmatprep.subr.bf16.mxu0 %v3765
    %5428 = vmatpush1.bf16.msra.mxu0 %v3764
    %5429 = vmatprep.subr.bf16.mxu0 %v3767
    %5430 = vmatpush1.bf16.msra.mxu0 %v3766
    %5431 = vmatprep.subr.bf16.mxu0 %v3769
    %5432 = vmatpush1.bf16.msra.mxu0 %v3768
    %5433 = vmatprep.subr.bf16.mxu0 %v3771
    %5434 = vmatpush1.bf16.msra.mxu0 %v3770
    %5435 = vmatprep.subr.bf16.mxu0 %v3773
    %5436 = vmatpush1.bf16.msra.mxu0 %v3772
    %5437 = vmatprep.subr.bf16.mxu0 %v3775
    %5438 = vmatpush1.bf16.msra.mxu0 %v3774
    %5439 = vmatprep.subr.bf16.mxu0 %v3777
    %5440 = vmatpush1.bf16.msra.mxu0 %v3776
    %5441 = vmatprep.subr.bf16.mxu0 %v3779
    %5442 = vmatpush1.bf16.msra.mxu0 %v3778
    %5443 = vmatprep.subr.bf16.mxu0 %v3781
    %5444 = vmatpush1.bf16.msra.mxu0 %v3780
    %5445 = vmatprep.subr.bf16.mxu0 %v3783
    %5446 = vmatpush1.bf16.msra.mxu0 %v3782
    %5447 = vmatprep.mubr.bf16.mxu0 %v148
    %5448 = vmatmul.mubr.bf16.gmra.mrb[0].mxu0 %v147
    %v5449 = vpop.f32.mrb[0].mxu0
    %v5450 = vadd.f32 %v5409, %v5449
    %v5451 = vpop.f32.mrb[0].mxu0
    %v5452 = vadd.f32 %v5411, %v5451
    %v5453 = vpop.f32.mrb[0].mxu0
    %v5454 = vpop.f32.mrb[0].mxu0
    %5455 = vdwg.mxu0
    %5456 = vmatprep.subr.bf16.mxu0 %v3785
    %5457 = vmatpush1.bf16.msra.mxu0 %v3784
    %5458 = vmatprep.subr.bf16.mxu0 %v3787
    %5459 = vmatpush1.bf16.msra.mxu0 %v3786
    %5460 = vmatprep.subr.bf16.mxu0 %v3789
    %5461 = vmatpush1.bf16.msra.mxu0 %v3788
    %5462 = vmatprep.subr.bf16.mxu0 %v3791
    %5463 = vmatpush1.bf16.msra.mxu0 %v3790
    %5464 = vmatprep.subr.bf16.mxu0 %v3793
    %5465 = vmatpush1.bf16.msra.mxu0 %v3792
    %5466 = vmatprep.subr.bf16.mxu0 %v3795
    %5467 = vmatpush1.bf16.msra.mxu0 %v3794
    %5468 = vmatprep.subr.bf16.mxu0 %v3797
    %5469 = vmatpush1.bf16.msra.mxu0 %v3796
    %5470 = vmatprep.subr.bf16.mxu0 %v3799
    %5471 = vmatpush1.bf16.msra.mxu0 %v3798
    %5472 = vmatprep.subr.bf16.mxu0 %v3801
    %5473 = vmatpush1.bf16.msra.mxu0 %v3800
    %5474 = vmatprep.subr.bf16.mxu0 %v3803
    %5475 = vmatpush1.bf16.msra.mxu0 %v3802
    %5476 = vmatprep.subr.bf16.mxu0 %v3805
    %5477 = vmatpush1.bf16.msra.mxu0 %v3804
    %5478 = vmatprep.subr.bf16.mxu0 %v3807
    %5479 = vmatpush1.bf16.msra.mxu0 %v3806
    %5480 = vmatprep.subr.bf16.mxu0 %v3809
    %5481 = vmatpush1.bf16.msra.mxu0 %v3808
    %5482 = vmatprep.subr.bf16.mxu0 %v3811
    %5483 = vmatpush1.bf16.msra.mxu0 %v3810
    %5484 = vmatprep.subr.bf16.mxu0 %v3813
    %5485 = vmatpush1.bf16.msra.mxu0 %v3812
    %5486 = vmatprep.subr.bf16.mxu0 %v3815
    %5487 = vmatpush1.bf16.msra.mxu0 %v3814
    %5488 = vmatprep.mubr.bf16.mxu0 %v150
    %5489 = vmatmul.mubr.bf16.gmra.mrb[0].mxu0 %v149
    %v5490 = vpop.f32.mrb[0].mxu0
    %v5491 = vadd.f32 %v5450, %v5490
    %v5492 = vpop.f32.mrb[0].mxu0
    %v5493 = vadd.f32 %v5452, %v5492
    %v5494 = vpop.f32.mrb[0].mxu0
    %v5495 = vpop.f32.mrb[0].mxu0
    %5496 = vdwg.mxu0
    %5497 = vmatprep.subr.bf16.mxu0 %v3817
    %5498 = vmatpush1.bf16.msra.mxu0 %v3816
    %5499 = vmatprep.subr.bf16.mxu0 %v3819
    %5500 = vmatpush1.bf16.msra.mxu0 %v3818
    %5501 = vmatprep.subr.bf16.mxu0 %v3821
    %5502 = vmatpush1.bf16.msra.mxu0 %v3820
    %5503 = vmatprep.subr.bf16.mxu0 %v3823
    %5504 = vmatpush1.bf16.msra.mxu0 %v3822
    %5505 = vmatprep.subr.bf16.mxu0 %v3825
    %5506 = vmatpush1.bf16.msra.mxu0 %v3824
    %5507 = vmatprep.subr.bf16.mxu0 %v3827
    %5508 = vmatpush1.bf16.msra.mxu0 %v3826
    %5509 = vmatprep.subr.bf16.mxu0 %v3829
    %5510 = vmatpush1.bf16.msra.mxu0 %v3828
    %5511 = vmatprep.subr.bf16.mxu0 %v3831
    %5512 = vmatpush1.bf16.msra.mxu0 %v3830
    %5513 = vmatprep.subr.bf16.mxu0 %v3833
    %5514 = vmatpush1.bf16.msra.mxu0 %v3832
    %5515 = vmatprep.subr.bf16.mxu0 %v3835
    %5516 = vmatpush1.bf16.msra.mxu0 %v3834
    %5517 = vmatprep.subr.bf16.mxu0 %v3837
    %5518 = vmatpush1.bf16.msra.mxu0 %v3836
    %5519 = vmatprep.subr.bf16.mxu0 %v3839
    %5520 = vmatpush1.bf16.msra.mxu0 %v3838
    %5521 = vmatprep.subr.bf16.mxu0 %v3841
    %5522 = vmatpush1.bf16.msra.mxu0 %v3840
    %5523 = vmatprep.subr.bf16.mxu0 %v3843
    %5524 = vmatpush1.bf16.msra.mxu0 %v3842
    %5525 = vmatprep.subr.bf16.mxu0 %v3845
    %5526 = vmatpush1.bf16.msra.mxu0 %v3844
    %5527 = vmatprep.subr.bf16.mxu0 %v3847
    %5528 = vmatpush1.bf16.msra.mxu0 %v3846
    %5529 = vmatprep.mubr.bf16.mxu0 %v152
    %5530 = vmatmul.mubr.bf16.gmra.mrb[0].mxu0 %v151
    %v5531 = vpop.f32.mrb[0].mxu0
    %v5532 = vadd.f32 %v5491, %v5531
    %v5533 = vpop.f32.mrb[0].mxu0
    %v5534 = vadd.f32 %v5493, %v5533
    %v5535 = vpop.f32.mrb[0].mxu0
    %v5536 = vpop.f32.mrb[0].mxu0
    %5537 = vdwg.mxu0
    %5538 = vmatprep.subr.bf16.mxu0 %v3849
    %5539 = vmatpush1.bf16.msra.mxu0 %v3848
    %5540 = vmatprep.subr.bf16.mxu0 %v3851
    %5541 = vmatpush1.bf16.msra.mxu0 %v3850
    %5542 = vmatprep.subr.bf16.mxu0 %v3853
    %5543 = vmatpush1.bf16.msra.mxu0 %v3852
    %5544 = vmatprep.subr.bf16.mxu0 %v3855
    %5545 = vmatpush1.bf16.msra.mxu0 %v3854
    %5546 = vmatprep.subr.bf16.mxu0 %v3857
    %5547 = vmatpush1.bf16.msra.mxu0 %v3856
    %5548 = vmatprep.subr.bf16.mxu0 %v3859
    %5549 = vmatpush1.bf16.msra.mxu0 %v3858
    %5550 = vmatprep.subr.bf16.mxu0 %v3861
    %5551 = vmatpush1.bf16.msra.mxu0 %v3860
    %5552 = vmatprep.subr.bf16.mxu0 %v3863
    %5553 = vmatpush1.bf16.msra.mxu0 %v3862
    %5554 = vmatprep.subr.bf16.mxu0 %v3865
    %5555 = vmatpush1.bf16.msra.mxu0 %v3864
    %5556 = vmatprep.subr.bf16.mxu0 %v3867
    %5557 = vmatpush1.bf16.msra.mxu0 %v3866
    %5558 = vmatprep.subr.bf16.mxu0 %v3869
    %5559 = vmatpush1.bf16.msra.mxu0 %v3868
    %5560 = vmatprep.subr.bf16.mxu0 %v3871
    %5561 = vmatpush1.bf16.msra.mxu0 %v3870
    %5562 = vmatprep.subr.bf16.mxu0 %v3873
    %5563 = vmatpush1.bf16.msra.mxu0 %v3872
    %5564 = vmatprep.subr.bf16.mxu0 %v3875
    %5565 = vmatpush1.bf16.msra.mxu0 %v3874
    %5566 = vmatprep.subr.bf16.mxu0 %v3877
    %5567 = vmatpush1.bf16.msra.mxu0 %v3876
    %5568 = vmatprep.subr.bf16.mxu0 %v3879
    %5569 = vmatpush1.bf16.msra.mxu0 %v3878
    %5570 = vmatprep.mubr.bf16.mxu0 %v154
    %5571 = vmatmul.mubr.bf16.gmra.mrb[0].mxu0 %v153
    %v5572 = vpop.f32.mrb[0].mxu0
    %v5573 = vadd.f32 %v5532, %v5572
    %v5574 = vpop.f32.mrb[0].mxu0
    %v5575 = vadd.f32 %v5534, %v5574
    %v5576 = vpop.f32.mrb[0].mxu0
    %v5577 = vpop.f32.mrb[0].mxu0
    %5578 = vdwg.mxu0
    %5579 = vmatprep.subr.bf16.mxu0 %v3881
    %5580 = vmatpush1.bf16.msra.mxu0 %v3880
    %5581 = vmatprep.subr.bf16.mxu0 %v3883
    %5582 = vmatpush1.bf16.msra.mxu0 %v3882
    %5583 = vmatprep.subr.bf16.mxu0 %v3885
    %5584 = vmatpush1.bf16.msra.mxu0 %v3884
    %5585 = vmatprep.subr.bf16.mxu0 %v3887
    %5586 = vmatpush1.bf16.msra.mxu0 %v3886
    %5587 = vmatprep.subr.bf16.mxu0 0
    %5588 = vmatpush1.bf16.msra.mxu0 0
    %5589 = vmatprep.subr.bf16.mxu0 0
    %5590 = vmatpush1.bf16.msra.mxu0 0
    %5591 = vmatprep.subr.bf16.mxu0 0
    %5592 = vmatpush1.bf16.msra.mxu0 0
    %5593 = vmatprep.subr.bf16.mxu0 0
    %5594 = vmatpush1.bf16.msra.mxu0 0
    %5595 = vmatprep.subr.bf16.mxu0 0
    %5596 = vmatpush1.bf16.msra.mxu0 0
    %5597 = vmatprep.subr.bf16.mxu0 0
    %5598 = vmatpush1.bf16.msra.mxu0 0
    %5599 = vmatprep.subr.bf16.mxu0 0
    %5600 = vmatpush1.bf16.msra.mxu0 0
    %5601 = vmatprep.subr.bf16.mxu0 0
    %5602 = vmatpush1.bf16.msra.mxu0 0
    %5603 = vmatprep.subr.bf16.mxu0 0
    %5604 = vmatpush1.bf16.msra.mxu0 0
    %5605 = vmatprep.subr.bf16.mxu0 0
    %5606 = vmatpush1.bf16.msra.mxu0 0
    %5607 = vmatprep.subr.bf16.mxu0 0
    %5608 = vmatpush1.bf16.msra.mxu0 0
    %5609 = vmatprep.subr.bf16.mxu0 0
    %5610 = vmatpush1.bf16.msra.mxu0 0
    %5611 = vmatprep.mubr.bf16.mxu0 0
    %5612 = vmatmul.mubr.bf16.gmra.mrb[0].mxu0 %v4634
    %v5613 = vpop.f32.mrb[0].mxu0
    %v5614 = vadd.f32 %v5573, %v5613
    %v5615 = vpop.f32.mrb[0].mxu0
    %v5616 = vadd.f32 %v5575, %v5615
    %v5617 = vpop.f32.mrb[0].mxu0
    %v5618 = vpop.f32.mrb[0].mxu0
    %5619 = vdwg.mxu0
    %v5620 = vmul.f32 %v5614, 0.5
    %v5621 = vmul.f32 %v5616, 0.5
    %v5622 = vmul.f32 %v5614, %v5614
    %v5623 = vmul.f32 %v5616, %v5616
    %v5624 = vmul.f32 %v5622, %v5614
    %v5625 = vmul.f32 %v5623, %v5616
    %v5626 = vmul.f32 %v5624, 0.044715
    %v5627 = vmul.f32 %v5625, 0.044715
    %v5628 = vadd.f32 %v5614, %v5626
    %v5629 = vadd.f32 %v5616, %v5627
    %v5630 = vmul.f32 %v5628, 0.7978846
    %v5631 = vmul.f32 %v5629, 0.7978846
    %v5632 = vtanh.pop %v5630
    %v5633 = vtanh.pop %v5631
    %v5634 = vadd.f32 %v5632, 1.0
    %v5635 = vadd.f32 %v5633, 1.0
    %v5636 = vmul.f32 %v5620, %v5634
    %v5637 = vmul.f32 %v5621, %v5635
    %v5640 = vcombine.low %v5636, %v5637
    %5642 = vst [vmem:[#allocation2] sm:$0xff] %v5640
    // Predicated region
    $region14: #{_forward.1} parent=1 // pred_check
      _
    $region15: #{_forward.1} parent=1 // pred_check_branch
      %5644 = sbr.rel (0) target = $region17
    $region16: #{_forward.1} parent=1 // pred_region
      %s5646 = ssub.s32 128, 128
      %5647 = vsyncadd [#allocation3], %s5646
      %s5649 = sshll.u32 [#allocation2], 4
      %s5650 = int_to_ptr.vmem [resolvable:$true] %s5649
      %5652 = dma.vmem_to_hbm [thread:$0]  %s5650, 128, %s3, [#allocation3]
    $region17: #{_forward.1} parent=1 // pred_fallthru
      _
    // Predicated region
    $region18: #{_forward.1} parent=1 // pred_check
      _
    $region19: #{_forward.1} parent=1 // pred_check_branch
      %5654 = sbr.rel (0) target = $region21
    $region20: #{_forward.1} parent=1 // pred_region
      %5655 = dma.done [#allocation3], 128
    $region21: #{_forward.1} parent=1 // pred_fallthru
      _
    %5656 = vsyncpa [#allocation3], 1

</llo_original>
